<compile_context>
chip_gen: v6e
topology: v6e:2x2x1
jax: 0.10.0
libtpu: 0.0.40
codegen_flags: <defaults>
</compile_context>

<pallas_src>
import functools

import jax
import jax.numpy as jnp
from jax.experimental import pallas as pl
from jax.experimental.pallas import tpu as pltpu


# ---------------------------------------------------------------------------
# Fused MobileMamba block kernel (one grid step per batch element)
# ---------------------------------------------------------------------------
def _mobilemamba_kernel(
        x_ref,
        c1w_ref, c1b_ref, c2w_ref, c2b_ref,
        pw_ref, pb_ref, rg_ref,
        iw_ref, ib_ref, cw_ref, cb_ref,
        s1w_ref, s1b_ref, s23w_ref, s23b_ref,
        ow_ref, ob_ref, c3w_ref, c3b_ref, c4w_ref, c4b_ref,
        o_ref, *, H, W, groups, eps):
    L = H * W
    WPAD = 8  # horizontal zero-pad width; 8-row pieces keep the sublane-dim
              # concat tile-aligned (W is a multiple of 8 here).

    def silu(v):
        return v * (1.0 / (1.0 + jnp.exp(-v)))

    def pad_hw(img):
        # zero-pad (H, W, C) -> (H+2, W+2*WPAD, C) entirely in VMEM/vregs.
        C = img.shape[-1]
        zr = jnp.zeros((1, W, C), img.dtype)
        t = jnp.concatenate([zr, img, zr], axis=0)            # (H+2, W, C)
        zc = jnp.zeros((H + 2, WPAD, C), img.dtype)
        return jnp.concatenate([zc, t, zc], axis=1)           # (H+2, W+16, C)

    def conv3x3_bn_silu(img, w_ref, b_ref):
        # full 3x3 conv (+ folded BN + SiLU): in-VMEM im2col + one MXU dot.
        C = img.shape[-1]
        xp = pad_hw(img)
        cols = [xp[ky:ky + H, WPAD - 1 + kx:WPAD - 1 + kx + W, :].reshape(L, C)
                for ky in range(3) for kx in range(3)]
        patches = jnp.concatenate(cols, axis=1).astype(jnp.bfloat16)
        acc = jnp.dot(patches, w_ref[...], preferred_element_type=jnp.float32)
        return silu(acc + b_ref[...])

    def mm(a, w_ref, b_ref):
        return jnp.dot(a.astype(jnp.bfloat16), w_ref[...],
                       preferred_element_type=jnp.float32) + b_ref[...]

    # ---- conv1 (3x3 inc->inc) + conv2 (1x1 inc->d), BN folded, SiLU ----
    x_img = x_ref[0]                                          # (H, W, inc) f32
    h1 = conv3x3_bn_silu(x_img, c1w_ref, c1b_ref)             # (L, inc)
    u = silu(mm(h1, c2w_ref, c2b_ref))                        # (L, d)
    d_model = u.shape[-1]

    # ---- Group_SSM: PEG depthwise 3x3 + residual, then RMSNorm ----
    u_img = u.reshape(H, W, d_model)
    up = pad_hw(u_img)
    acc = jnp.zeros((H, W, d_model), jnp.float32)
    for ky in range(3):
        for kx in range(3):
            acc = acc + (up[ky:ky + H, WPAD - 1 + kx:WPAD - 1 + kx + W, :]
                         * pw_ref[ky * 3 + kx])
    y = u_img + acc + pb_ref[...]                             # PEG residual + bias
    ms = jnp.mean(y * y, axis=-1, keepdims=True)              # RMSNorm (channels)
    y = (y * jax.lax.rsqrt(ms + eps) * rg_ref[...]).reshape(L, d_model)

    # ---- inp_proj: Linear(d, 2d) ----
    xs = mm(y, iw_ref, ib_ref)                                # (L, 2d)
    F2 = xs.shape[-1]

    # ---- Conv1d(sl, sl, 3, pad=1) over the feature axis (+ SiLU) ----
    # out = Wcat @ [xpad[:,0:F]; xpad[:,1:F+1]; xpad[:,2:F+2]]  (one MXU dot)
    zcol = jnp.zeros((L, 1), jnp.float32)
    xpad = jnp.concatenate([zcol, xs, zcol], axis=1)          # (L, 2d+2)
    xstk = jnp.concatenate([xpad[:, k:k + F2] for k in range(3)],
                           axis=0).astype(jnp.bfloat16)       # (3L, 2d)
    xs = silu(jnp.dot(cw_ref[...], xstk,
                      preferred_element_type=jnp.float32) + cb_ref[...])

    # ---- S6 on the 4 feature chunks (stacked along rows, shared weights) ----
    dm = F2 // groups
    xg = jnp.concatenate([xs[:, g * dm:(g + 1) * dm] for g in range(groups)],
                         axis=0)                              # (groups*L, dm)
    xgb = xg.astype(jnp.bfloat16)
    z1 = jnp.dot(xgb, s1w_ref[...],
                 preferred_element_type=jnp.float32) + s1b_ref[...]
    delta = jnp.where(z1 > 20.0, z1,                          # softplus (torch)
                      jnp.log(1.0 + jnp.exp(jnp.minimum(z1, 20.0))))
    bc = jnp.dot(xgb, s23w_ref[...],                          # fc2|fc3, one pass
                 preferred_element_type=jnp.float32) + s23b_ref[...]
    S = bc.shape[-1] // 2
    csum = jnp.sum(bc[:, :S] * bc[:, S:], axis=-1, keepdims=True)
    # h starts at zero in the reference -> exp(delta x A) * h drops out exactly.
    ys = silu(xg * delta * csum)                              # (groups*L, dm)

    # ---- regroup + out_proj (ChannelShuffle folded into the weight) + resid --
    ycat = jnp.concatenate([ys[g * L:(g + 1) * L, :] for g in range(groups)],
                           axis=1)                            # (L, 2d)
    xo = mm(ycat, ow_ref, ob_ref) + u                         # (L, d)

    # ---- conv3 (1x1 d->outc) + conv4 (3x3 outc->outc), BN folded, SiLU ----
    h3 = silu(mm(xo, c3w_ref, c3b_ref))                       # (L, outc)
    h4 = conv3x3_bn_silu(h3.reshape(H, W, h3.shape[-1]), c4w_ref, c4b_ref)
    o_ref[0] = h4.astype(o_ref.dtype)


# ---------------------------------------------------------------------------
# Host-side wrapper
# ---------------------------------------------------------------------------
_WEIGHT_ORDER = (
    'conv1_w', 'conv1_b', 'conv2_w', 'conv2_b',
    'peg_w', 'peg_b', 'rms_g',
    'inp_w', 'inp_b', 'conv1d_w', 'conv1d_b',
    's6_w1', 's6_b1', 's6_w23', 's6_b23',
    'out_w', 'out_b', 'conv3_w', 'conv3_b', 'conv4_w', 'conv4_b',
)


def mobilemamba_block_forward(x_nhwc, params, groups=4):
    B, H, W, inc = x_nhwc.shape
    L = H * W
    d = params['conv2_w'].shape[1]
    outc = params['conv3_w'].shape[1]
    weights = [params[k] for k in _WEIGHT_ORDER]

    def w_spec(a):
        nd = a.ndim
        return pl.BlockSpec(a.shape, lambda b, nd=nd: (0,) * nd)

    out = pl.pallas_call(
        functools.partial(_mobilemamba_kernel, H=H, W=W, groups=groups,
                          eps=1e-5),
        out_shape=jax.ShapeDtypeStruct((B, L, outc), jnp.float32),
        grid=(B,),
        in_specs=[pl.BlockSpec((1, H, W, inc), lambda b: (b, 0, 0, 0))]
                 + [w_spec(a) for a in weights],
        out_specs=pl.BlockSpec((1, L, outc), lambda b: (b, 0, 0)),
        compiler_params=pltpu.CompilerParams(
            dimension_semantics=("parallel",)),
    )(x_nhwc, *weights)
    return out.reshape(B, H, W, outc)


# ---------------------------------------------------------------------------
# Parameter construction (module-like layout) + prep (folding / concat / bf16)
# ---------------------------------------------------------------------------
def init_params(key, inc, d, outc, sl, state_size=128, groups=4):
    dm = 2 * d // groups
    keys = iter(jax.random.split(key, 40))

    def nrm(shape, scale=0.1):
        return scale * jax.random.normal(next(keys), shape, dtype=jnp.float32)

    def bn_fold(w_mat, c, eps=1e-5):
        gamma = 1.0 + 0.1 * jax.random.normal(next(keys), (c,), dtype=jnp.float32)
        beta = nrm((c,))
        mean = nrm((c,))
        var = 0.5 + jax.random.uniform(next(keys), (c,), dtype=jnp.float32)
        s = gamma / jnp.sqrt(var + eps)
        return w_mat * s, beta - mean * s

    p = {}
    # conv1: 3x3 inc->inc (no bias) + BN; rows = (ky*3+kx)*Cin + cin
    w, b = bn_fold(nrm((3, 3, inc, inc), 0.2).reshape(9 * inc, inc), inc)
    p['conv1_w'], p['conv1_b'] = w, b
    # conv2: 1x1 inc->d + BN
    w, b = bn_fold(nrm((inc, d), 0.2), d)
    p['conv2_w'], p['conv2_b'] = w, b
    # PEG depthwise conv (3,3,d) + bias; RMSNorm weight (ones, PyTorch default)
    p['peg_w'] = nrm((3, 3, d), 0.2).reshape(9, 1, d)
    p['peg_b'] = nrm((d,))
    p['rms_g'] = jnp.ones((d,), jnp.float32)
    # inp_proj: Linear(d, 2d)
    p['inp_w'] = nrm((d, 2 * d), 0.15)
    p['inp_b'] = nrm((2 * d,))
    # Conv1d(sl, sl, 3, pad=1): weight (out_ch=sl, in_ch=sl, k=3), bias (sl,)
    p['conv1d_w'] = nrm((sl, sl, 3), 0.05)
    p['conv1d_b'] = nrm((sl,))
    # S6 (shared across the 4 chunks): d_model = 2d/groups, state_size = 128
    p['s6_w1'] = nrm((dm, dm), 0.2)
    p['s6_b1'] = nrm((dm,))
    p['s6_w2'] = nrm((dm, state_size), 0.1)
    p['s6_b2'] = nrm((state_size,))
    p['s6_w3'] = nrm((dm, state_size), 0.1)
    p['s6_b3'] = nrm((state_size,))
    # NOTE: S6.A never reaches the output (multiplied by the all-zero initial
    # state h), so it is intentionally not materialized.
    # out_proj: Linear(2d, d)
    p['out_w'] = nrm((2 * d, d), 0.15)
    p['out_b'] = nrm((d,))
    # conv3: 1x1 d->outc + BN ; conv4: 3x3 outc->outc + BN
    w, b = bn_fold(nrm((d, outc), 0.2), outc)
    p['conv3_w'], p['conv3_b'] = w, b
    w, b = bn_fold(nrm((3, 3, outc, outc), 0.2).reshape(9 * outc, outc), outc)
    p['conv4_w'], p['conv4_b'] = w, b
    return p


def prepare_params(p, groups=4):
    """Fold layout tricks into the weights once, on the host."""
    d = p['inp_w'].shape[0]
    sl = p['conv1d_w'].shape[0]
    dm = 2 * d // groups
    bf = lambda a: a.astype(jnp.bfloat16)
    row = lambda a: a.reshape(1, -1).astype(jnp.float32)

    q = {}
    q['conv1_w'], q['conv1_b'] = bf(p['conv1_w']), row(p['conv1_b'])
    q['conv2_w'], q['conv2_b'] = bf(p['conv2_w']), row(p['conv2_b'])
    q['peg_w'] = p['peg_w']                        # f32, VPU (elementwise) path
    q['peg_b'] = row(p['peg_b'])
    q['rms_g'] = row(p['rms_g'])
    q['inp_w'], q['inp_b'] = bf(p['inp_w']), row(p['inp_b'])
    # Conv1d taps concatenated along K: Wcat[lo, k*sl + li] = W[lo, li, k]
    w1d = p['conv1d_w']
    q['conv1d_w'] = bf(jnp.concatenate([w1d[:, :, k] for k in range(3)], axis=1))
    # bias pre-broadcast to a lane-dense (sl, 2d) tile
    q['conv1d_b'] = jnp.broadcast_to(
        p['conv1d_b'].reshape(sl, 1), (sl, 2 * d)).astype(jnp.float32)
    q['s6_w1'], q['s6_b1'] = bf(p['s6_w1']), row(p['s6_b1'])
    q['s6_w23'] = bf(jnp.concatenate([p['s6_w2'], p['s6_w3']], axis=1))
    q['s6_b23'] = row(jnp.concatenate([p['s6_b2'], p['s6_b3']]))
    # Fold ChannelShuffle(groups): out = shuffled @ Wout == cat @ Wout[pinv, :]
    idx = jnp.arange(2 * d)
    pinv = (idx % dm) * groups + idx // dm
    q['out_w'], q['out_b'] = bf(p['out_w'][pinv, :]), row(p['out_b'])
    q['conv3_w'], q['conv3_b'] = bf(p['conv3_w']), row(p['conv3_b'])
    q['conv4_w'], q['conv4_b'] = bf(p['conv4_w']), row(p['conv4_b'])
    return q


# ---------------------------------------------------------------------------
if __name__ == "__main__":
    key = jax.random.PRNGKey(0)
    kx, kp = jax.random.split(key)

    # MobileMamba_blck(sl=H*W, inc, d, outc)
    B, inc, H, W = 2, 4, 8, 8
    d, outc = 16, 8
    sl = H * W  # 64

    x_nchw = jax.random.normal(kx, (B, inc, H, W), dtype=jnp.float32)
    params = prepare_params(init_params(kp, inc, d, outc, sl))

    x_nhwc = jnp.transpose(x_nchw, (0, 2, 3, 1))   # NCHW -> NHWC
    fwd = jax.jit(lambda xx: mobilemamba_block_forward(xx, params))
    out = jax.block_until_ready(fwd(x_nhwc))

    assert out.shape == (B, H, W, outc), out.shape
    assert bool(jnp.all(jnp.isfinite(out)))
    print("KERNEL_OK")
</pallas_src>

<mosaic_0001>
module attributes {stable_mosaic.version = 11 : i64} {
  func.func @_mobilemamba_kernel(%arg0: i32, %arg1: memref<1x8x8x4xf32, #tpu.memory_space<vmem>>, %arg2: memref<36x4xbf16, #tpu.memory_space<vmem>>, %arg3: memref<1x4xf32, #tpu.memory_space<vmem>>, %arg4: memref<4x16xbf16, #tpu.memory_space<vmem>>, %arg5: memref<1x16xf32, #tpu.memory_space<vmem>>, %arg6: memref<9x1x16xf32, #tpu.memory_space<vmem>>, %arg7: memref<1x16xf32, #tpu.memory_space<vmem>>, %arg8: memref<1x16xf32, #tpu.memory_space<vmem>>, %arg9: memref<16x32xbf16, #tpu.memory_space<vmem>>, %arg10: memref<1x32xf32, #tpu.memory_space<vmem>>, %arg11: memref<64x192xbf16, #tpu.memory_space<vmem>>, %arg12: memref<64x32xf32, #tpu.memory_space<vmem>>, %arg13: memref<8x8xbf16, #tpu.memory_space<vmem>>, %arg14: memref<1x8xf32, #tpu.memory_space<vmem>>, %arg15: memref<8x256xbf16, #tpu.memory_space<vmem>>, %arg16: memref<1x256xf32, #tpu.memory_space<vmem>>, %arg17: memref<32x16xbf16, #tpu.memory_space<vmem>>, %arg18: memref<1x16xf32, #tpu.memory_space<vmem>>, %arg19: memref<16x8xbf16, #tpu.memory_space<vmem>>, %arg20: memref<1x8xf32, #tpu.memory_space<vmem>>, %arg21: memref<72x8xbf16, #tpu.memory_space<vmem>>, %arg22: memref<1x8xf32, #tpu.memory_space<vmem>>, %arg23: memref<1x64x8xf32, #tpu.memory_space<vmem>>) attributes {dimension_semantics = [#tpu.dimension_semantics<parallel>], iteration_bounds = array<i64: 2>, scalar_prefetch = 0 : i64, scratch_operands = 0 : i64, tpu.core_type = #tpu.core_type<tc>, window_params = [{transform_indices = @transform_0, window_bounds = array<i64: 1, 8, 8, 4>}, {pipeline_mode = #tpu.pipeline_mode<synchronous>, transform_indices = @transform_1, window_bounds = array<i64: 36, 4>}, {pipeline_mode = #tpu.pipeline_mode<synchronous>, transform_indices = @transform_2, window_bounds = array<i64: 1, 4>}, {pipeline_mode = #tpu.pipeline_mode<synchronous>, transform_indices = @transform_3, window_bounds = array<i64: 4, 16>}, {pipeline_mode = #tpu.pipeline_mode<synchronous>, transform_indices = @transform_4, window_bounds = array<i64: 1, 16>}, {pipeline_mode = #tpu.pipeline_mode<synchronous>, transform_indices = @transform_5, window_bounds = array<i64: 9, 1, 16>}, {pipeline_mode = #tpu.pipeline_mode<synchronous>, transform_indices = @transform_6, window_bounds = array<i64: 1, 16>}, {pipeline_mode = #tpu.pipeline_mode<synchronous>, transform_indices = @transform_7, window_bounds = array<i64: 1, 16>}, {pipeline_mode = #tpu.pipeline_mode<synchronous>, transform_indices = @transform_8, window_bounds = array<i64: 16, 32>}, {pipeline_mode = #tpu.pipeline_mode<synchronous>, transform_indices = @transform_9, window_bounds = array<i64: 1, 32>}, {pipeline_mode = #tpu.pipeline_mode<synchronous>, transform_indices = @transform_10, window_bounds = array<i64: 64, 192>}, {pipeline_mode = #tpu.pipeline_mode<synchronous>, transform_indices = @transform_11, window_bounds = array<i64: 64, 32>}, {pipeline_mode = #tpu.pipeline_mode<synchronous>, transform_indices = @transform_12, window_bounds = array<i64: 8, 8>}, {pipeline_mode = #tpu.pipeline_mode<synchronous>, transform_indices = @transform_13, window_bounds = array<i64: 1, 8>}, {pipeline_mode = #tpu.pipeline_mode<synchronous>, transform_indices = @transform_14, window_bounds = array<i64: 8, 256>}, {pipeline_mode = #tpu.pipeline_mode<synchronous>, transform_indices = @transform_15, window_bounds = array<i64: 1, 256>}, {pipeline_mode = #tpu.pipeline_mode<synchronous>, transform_indices = @transform_16, window_bounds = array<i64: 32, 16>}, {pipeline_mode = #tpu.pipeline_mode<synchronous>, transform_indices = @transform_17, window_bounds = array<i64: 1, 16>}, {pipeline_mode = #tpu.pipeline_mode<synchronous>, transform_indices = @transform_18, window_bounds = array<i64: 16, 8>}, {pipeline_mode = #tpu.pipeline_mode<synchronous>, transform_indices = @transform_19, window_bounds = array<i64: 1, 8>}, {pipeline_mode = #tpu.pipeline_mode<synchronous>, transform_indices = @transform_20, window_bounds = array<i64: 72, 8>}, {pipeline_mode = #tpu.pipeline_mode<synchronous>, transform_indices = @transform_21, window_bounds = array<i64: 1, 8>}, {transform_indices = @transform_22, window_bounds = array<i64: 1, 64, 8>}]} {
    %c0 = arith.constant 0 : index
    %c0_0 = arith.constant 0 : index
    %c0_1 = arith.constant 0 : index
    %c0_2 = arith.constant 0 : index
    %0 = vector.load %arg1[%c0, %c0_0, %c0_1, %c0_2] : memref<1x8x8x4xf32, #tpu.memory_space<vmem>>, vector<1x8x8x4xf32>
    %1 = vector.shape_cast %0 : vector<1x8x8x4xf32> to vector<8x8x4xf32>
    %cst = arith.constant 0.000000e+00 : f32
    %2 = vector.broadcast %cst : f32 to vector<1x8x4xf32>
    %3 = tpu.concatenate %2, %1, %2 in 0 : vector<1x8x4xf32>, vector<8x8x4xf32>, vector<1x8x4xf32> -> vector<10x8x4xf32>
    %cst_3 = arith.constant 0.000000e+00 : f32
    %4 = vector.broadcast %cst_3 : f32 to vector<10x8x4xf32>
    %5 = tpu.concatenate %4, %3, %4 in 1 : vector<10x8x4xf32>, vector<10x8x4xf32>, vector<10x8x4xf32> -> vector<10x24x4xf32>
    %6 = vector.extract_strided_slice %5 {offsets = [0, 7, 0], sizes = [8, 8, 4], strides = [1, 1, 1]} : vector<10x24x4xf32> to vector<8x8x4xf32>
    %7 = vector.shape_cast %6 : vector<8x8x4xf32> to vector<64x4xf32>
    %8 = vector.extract_strided_slice %5 {offsets = [0, 8, 0], sizes = [8, 8, 4], strides = [1, 1, 1]} : vector<10x24x4xf32> to vector<8x8x4xf32>
    %9 = vector.shape_cast %8 : vector<8x8x4xf32> to vector<64x4xf32>
    %10 = vector.extract_strided_slice %5 {offsets = [0, 9, 0], sizes = [8, 8, 4], strides = [1, 1, 1]} : vector<10x24x4xf32> to vector<8x8x4xf32>
    %11 = vector.shape_cast %10 : vector<8x8x4xf32> to vector<64x4xf32>
    %12 = vector.extract_strided_slice %5 {offsets = [1, 7, 0], sizes = [8, 8, 4], strides = [1, 1, 1]} : vector<10x24x4xf32> to vector<8x8x4xf32>
    %13 = vector.shape_cast %12 : vector<8x8x4xf32> to vector<64x4xf32>
    %14 = vector.extract_strided_slice %5 {offsets = [1, 8, 0], sizes = [8, 8, 4], strides = [1, 1, 1]} : vector<10x24x4xf32> to vector<8x8x4xf32>
    %15 = vector.shape_cast %14 : vector<8x8x4xf32> to vector<64x4xf32>
    %16 = vector.extract_strided_slice %5 {offsets = [1, 9, 0], sizes = [8, 8, 4], strides = [1, 1, 1]} : vector<10x24x4xf32> to vector<8x8x4xf32>
    %17 = vector.shape_cast %16 : vector<8x8x4xf32> to vector<64x4xf32>
    %18 = vector.extract_strided_slice %5 {offsets = [2, 7, 0], sizes = [8, 8, 4], strides = [1, 1, 1]} : vector<10x24x4xf32> to vector<8x8x4xf32>
    %19 = vector.shape_cast %18 : vector<8x8x4xf32> to vector<64x4xf32>
    %20 = vector.extract_strided_slice %5 {offsets = [2, 8, 0], sizes = [8, 8, 4], strides = [1, 1, 1]} : vector<10x24x4xf32> to vector<8x8x4xf32>
    %21 = vector.shape_cast %20 : vector<8x8x4xf32> to vector<64x4xf32>
    %22 = vector.extract_strided_slice %5 {offsets = [2, 9, 0], sizes = [8, 8, 4], strides = [1, 1, 1]} : vector<10x24x4xf32> to vector<8x8x4xf32>
    %23 = vector.shape_cast %22 : vector<8x8x4xf32> to vector<64x4xf32>
    %24 = tpu.concatenate %7, %9, %11, %13, %15, %17, %19, %21, %23 in 1 : vector<64x4xf32>, vector<64x4xf32>, vector<64x4xf32>, vector<64x4xf32>, vector<64x4xf32>, vector<64x4xf32>, vector<64x4xf32>, vector<64x4xf32>, vector<64x4xf32> -> vector<64x36xf32>
    %25 = arith.truncf %24 : vector<64x36xf32> to vector<64x36xbf16>
    %c0_4 = arith.constant 0 : index
    %c0_5 = arith.constant 0 : index
    %26 = vector.load %arg2[%c0_4, %c0_5] : memref<36x4xbf16, #tpu.memory_space<vmem>>, vector<36x4xbf16>
    %cst_6 = arith.constant dense<0.000000e+00> : vector<64x4xf32>
    %27 = tpu.matmul %25, %26, %cst_6 {dimension_numbers = #tpu.dot_dimension_numbers<[1], [0], [0], [1], [0, 0, 1, 1], [], []>} : vector<64x36xbf16>, vector<36x4xbf16>, vector<64x4xf32> -> vector<64x4xf32>
    %c0_7 = arith.constant 0 : index
    %c0_8 = arith.constant 0 : index
    %28 = vector.load %arg3[%c0_7, %c0_8] : memref<1x4xf32, #tpu.memory_space<vmem>>, vector<1x4xf32>
    %29 = vector.broadcast %28 : vector<1x4xf32> to vector<64x4xf32>
    %30 = arith.addf %27, %29 : vector<64x4xf32>
    %cst_9 = arith.constant 0.000000e+00 : f32
    %31 = vector.broadcast %cst_9 : f32 to vector<64x4xf32>
    %32 = arith.subf %31, %30 : vector<64x4xf32>
    %33 = math.exp %32 : vector<64x4xf32>
    %cst_10 = arith.constant 1.000000e+00 : f32
    %34 = vector.broadcast %cst_10 : f32 to vector<64x4xf32>
    %35 = arith.addf %34, %33 : vector<64x4xf32>
    %cst_11 = arith.constant 1.000000e+00 : f32
    %36 = vector.broadcast %cst_11 : f32 to vector<64x4xf32>
    %37 = arith.divf %36, %35 : vector<64x4xf32>
    %38 = arith.mulf %30, %37 : vector<64x4xf32>
    %39 = arith.truncf %38 : vector<64x4xf32> to vector<64x4xbf16>
    %c0_12 = arith.constant 0 : index
    %c0_13 = arith.constant 0 : index
    %40 = vector.load %arg4[%c0_12, %c0_13] : memref<4x16xbf16, #tpu.memory_space<vmem>>, vector<4x16xbf16>
    %cst_14 = arith.constant dense<0.000000e+00> : vector<64x16xf32>
    %41 = tpu.matmul %39, %40, %cst_14 {dimension_numbers = #tpu.dot_dimension_numbers<[1], [0], [0], [1], [0, 0, 1, 1], [], []>} : vector<64x4xbf16>, vector<4x16xbf16>, vector<64x16xf32> -> vector<64x16xf32>
    %c0_15 = arith.constant 0 : index
    %c0_16 = arith.constant 0 : index
    %42 = vector.load %arg5[%c0_15, %c0_16] : memref<1x16xf32, #tpu.memory_space<vmem>>, vector<1x16xf32>
    %43 = vector.broadcast %42 : vector<1x16xf32> to vector<64x16xf32>
    %44 = arith.addf %41, %43 : vector<64x16xf32>
    %cst_17 = arith.constant 0.000000e+00 : f32
    %45 = vector.broadcast %cst_17 : f32 to vector<64x16xf32>
    %46 = arith.subf %45, %44 : vector<64x16xf32>
    %47 = math.exp %46 : vector<64x16xf32>
    %cst_18 = arith.constant 1.000000e+00 : f32
    %48 = vector.broadcast %cst_18 : f32 to vector<64x16xf32>
    %49 = arith.addf %48, %47 : vector<64x16xf32>
    %cst_19 = arith.constant 1.000000e+00 : f32
    %50 = vector.broadcast %cst_19 : f32 to vector<64x16xf32>
    %51 = arith.divf %50, %49 : vector<64x16xf32>
    %52 = arith.mulf %44, %51 : vector<64x16xf32>
    %53 = vector.shape_cast %52 : vector<64x16xf32> to vector<8x8x16xf32>
    %cst_20 = arith.constant 0.000000e+00 : f32
    %54 = vector.broadcast %cst_20 : f32 to vector<1x8x16xf32>
    %55 = tpu.concatenate %54, %53, %54 in 0 : vector<1x8x16xf32>, vector<8x8x16xf32>, vector<1x8x16xf32> -> vector<10x8x16xf32>
    %cst_21 = arith.constant 0.000000e+00 : f32
    %56 = vector.broadcast %cst_21 : f32 to vector<10x8x16xf32>
    %57 = tpu.concatenate %56, %55, %56 in 1 : vector<10x8x16xf32>, vector<10x8x16xf32>, vector<10x8x16xf32> -> vector<10x24x16xf32>
    %cst_22 = arith.constant 0.000000e+00 : f32
    %58 = vector.broadcast %cst_22 : f32 to vector<8x8x16xf32>
    %59 = vector.extract_strided_slice %57 {offsets = [0, 7, 0], sizes = [8, 8, 16], strides = [1, 1, 1]} : vector<10x24x16xf32> to vector<8x8x16xf32>
    %c0_23 = arith.constant 0 : index
    %c0_24 = arith.constant 0 : index
    %c0_25 = arith.constant 0 : index
    %60 = vector.load %arg6[%c0_23, %c0_24, %c0_25] : memref<9x1x16xf32, #tpu.memory_space<vmem>>, vector<1x1x16xf32>
    %61 = vector.shape_cast %60 : vector<1x1x16xf32> to vector<1x16xf32>
    %62 = vector.shape_cast %61 : vector<1x16xf32> to vector<1x1x16xf32>
    %63 = vector.broadcast %62 : vector<1x1x16xf32> to vector<8x8x16xf32>
    %64 = arith.mulf %59, %63 : vector<8x8x16xf32>
    %65 = arith.addf %58, %64 : vector<8x8x16xf32>
    %66 = vector.extract_strided_slice %57 {offsets = [0, 8, 0], sizes = [8, 8, 16], strides = [1, 1, 1]} : vector<10x24x16xf32> to vector<8x8x16xf32>
    %c1 = arith.constant 1 : index
    %c0_26 = arith.constant 0 : index
    %c0_27 = arith.constant 0 : index
    %67 = vector.load %arg6[%c1, %c0_26, %c0_27] : memref<9x1x16xf32, #tpu.memory_space<vmem>>, vector<1x1x16xf32>
    %68 = vector.shape_cast %67 : vector<1x1x16xf32> to vector<1x16xf32>
    %69 = vector.shape_cast %68 : vector<1x16xf32> to vector<1x1x16xf32>
    %70 = vector.broadcast %69 : vector<1x1x16xf32> to vector<8x8x16xf32>
    %71 = arith.mulf %66, %70 : vector<8x8x16xf32>
    %72 = arith.addf %65, %71 : vector<8x8x16xf32>
    %73 = vector.extract_strided_slice %57 {offsets = [0, 9, 0], sizes = [8, 8, 16], strides = [1, 1, 1]} : vector<10x24x16xf32> to vector<8x8x16xf32>
    %c2 = arith.constant 2 : index
    %c0_28 = arith.constant 0 : index
    %c0_29 = arith.constant 0 : index
    %74 = vector.load %arg6[%c2, %c0_28, %c0_29] : memref<9x1x16xf32, #tpu.memory_space<vmem>>, vector<1x1x16xf32>
    %75 = vector.shape_cast %74 : vector<1x1x16xf32> to vector<1x16xf32>
    %76 = vector.shape_cast %75 : vector<1x16xf32> to vector<1x1x16xf32>
    %77 = vector.broadcast %76 : vector<1x1x16xf32> to vector<8x8x16xf32>
    %78 = arith.mulf %73, %77 : vector<8x8x16xf32>
    %79 = arith.addf %72, %78 : vector<8x8x16xf32>
    %80 = vector.extract_strided_slice %57 {offsets = [1, 7, 0], sizes = [8, 8, 16], strides = [1, 1, 1]} : vector<10x24x16xf32> to vector<8x8x16xf32>
    %c3 = arith.constant 3 : index
    %c0_30 = arith.constant 0 : index
    %c0_31 = arith.constant 0 : index
    %81 = vector.load %arg6[%c3, %c0_30, %c0_31] : memref<9x1x16xf32, #tpu.memory_space<vmem>>, vector<1x1x16xf32>
    %82 = vector.shape_cast %81 : vector<1x1x16xf32> to vector<1x16xf32>
    %83 = vector.shape_cast %82 : vector<1x16xf32> to vector<1x1x16xf32>
    %84 = vector.broadcast %83 : vector<1x1x16xf32> to vector<8x8x16xf32>
    %85 = arith.mulf %80, %84 : vector<8x8x16xf32>
    %86 = arith.addf %79, %85 : vector<8x8x16xf32>
    %87 = vector.extract_strided_slice %57 {offsets = [1, 8, 0], sizes = [8, 8, 16], strides = [1, 1, 1]} : vector<10x24x16xf32> to vector<8x8x16xf32>
    %c4 = arith.constant 4 : index
    %c0_32 = arith.constant 0 : index
    %c0_33 = arith.constant 0 : index
    %88 = vector.load %arg6[%c4, %c0_32, %c0_33] : memref<9x1x16xf32, #tpu.memory_space<vmem>>, vector<1x1x16xf32>
    %89 = vector.shape_cast %88 : vector<1x1x16xf32> to vector<1x16xf32>
    %90 = vector.shape_cast %89 : vector<1x16xf32> to vector<1x1x16xf32>
    %91 = vector.broadcast %90 : vector<1x1x16xf32> to vector<8x8x16xf32>
    %92 = arith.mulf %87, %91 : vector<8x8x16xf32>
    %93 = arith.addf %86, %92 : vector<8x8x16xf32>
    %94 = vector.extract_strided_slice %57 {offsets = [1, 9, 0], sizes = [8, 8, 16], strides = [1, 1, 1]} : vector<10x24x16xf32> to vector<8x8x16xf32>
    %c5 = arith.constant 5 : index
    %c0_34 = arith.constant 0 : index
    %c0_35 = arith.constant 0 : index
    %95 = vector.load %arg6[%c5, %c0_34, %c0_35] : memref<9x1x16xf32, #tpu.memory_space<vmem>>, vector<1x1x16xf32>
    %96 = vector.shape_cast %95 : vector<1x1x16xf32> to vector<1x16xf32>
    %97 = vector.shape_cast %96 : vector<1x16xf32> to vector<1x1x16xf32>
    %98 = vector.broadcast %97 : vector<1x1x16xf32> to vector<8x8x16xf32>
    %99 = arith.mulf %94, %98 : vector<8x8x16xf32>
    %100 = arith.addf %93, %99 : vector<8x8x16xf32>
    %101 = vector.extract_strided_slice %57 {offsets = [2, 7, 0], sizes = [8, 8, 16], strides = [1, 1, 1]} : vector<10x24x16xf32> to vector<8x8x16xf32>
    %c6 = arith.constant 6 : index
    %c0_36 = arith.constant 0 : index
    %c0_37 = arith.constant 0 : index
    %102 = vector.load %arg6[%c6, %c0_36, %c0_37] : memref<9x1x16xf32, #tpu.memory_space<vmem>>, vector<1x1x16xf32>
    %103 = vector.shape_cast %102 : vector<1x1x16xf32> to vector<1x16xf32>
    %104 = vector.shape_cast %103 : vector<1x16xf32> to vector<1x1x16xf32>
    %105 = vector.broadcast %104 : vector<1x1x16xf32> to vector<8x8x16xf32>
    %106 = arith.mulf %101, %105 : vector<8x8x16xf32>
    %107 = arith.addf %100, %106 : vector<8x8x16xf32>
    %108 = vector.extract_strided_slice %57 {offsets = [2, 8, 0], sizes = [8, 8, 16], strides = [1, 1, 1]} : vector<10x24x16xf32> to vector<8x8x16xf32>
    %c7 = arith.constant 7 : index
    %c0_38 = arith.constant 0 : index
    %c0_39 = arith.constant 0 : index
    %109 = vector.load %arg6[%c7, %c0_38, %c0_39] : memref<9x1x16xf32, #tpu.memory_space<vmem>>, vector<1x1x16xf32>
    %110 = vector.shape_cast %109 : vector<1x1x16xf32> to vector<1x16xf32>
    %111 = vector.shape_cast %110 : vector<1x16xf32> to vector<1x1x16xf32>
    %112 = vector.broadcast %111 : vector<1x1x16xf32> to vector<8x8x16xf32>
    %113 = arith.mulf %108, %112 : vector<8x8x16xf32>
    %114 = arith.addf %107, %113 : vector<8x8x16xf32>
    %115 = vector.extract_strided_slice %57 {offsets = [2, 9, 0], sizes = [8, 8, 16], strides = [1, 1, 1]} : vector<10x24x16xf32> to vector<8x8x16xf32>
    %c8 = arith.constant 8 : index
    %c0_40 = arith.constant 0 : index
    %c0_41 = arith.constant 0 : index
    %116 = vector.load %arg6[%c8, %c0_40, %c0_41] : memref<9x1x16xf32, #tpu.memory_space<vmem>>, vector<1x1x16xf32>
    %117 = vector.shape_cast %116 : vector<1x1x16xf32> to vector<1x16xf32>
    %118 = vector.shape_cast %117 : vector<1x16xf32> to vector<1x1x16xf32>
    %119 = vector.broadcast %118 : vector<1x1x16xf32> to vector<8x8x16xf32>
    %120 = arith.mulf %115, %119 : vector<8x8x16xf32>
    %121 = arith.addf %114, %120 : vector<8x8x16xf32>
    %122 = arith.addf %53, %121 : vector<8x8x16xf32>
    %c0_42 = arith.constant 0 : index
    %c0_43 = arith.constant 0 : index
    %123 = vector.load %arg7[%c0_42, %c0_43] : memref<1x16xf32, #tpu.memory_space<vmem>>, vector<1x16xf32>
    %124 = vector.shape_cast %123 : vector<1x16xf32> to vector<1x1x16xf32>
    %125 = vector.broadcast %124 : vector<1x1x16xf32> to vector<8x8x16xf32>
    %126 = arith.addf %122, %125 : vector<8x8x16xf32>
    %127 = arith.mulf %126, %126 : vector<8x8x16xf32>
    %cst_44 = arith.constant dense<0.000000e+00> : vector<8x8xf32>
    %128 = vector.multi_reduction <add>, %127, %cst_44 [2] : vector<8x8x16xf32> to vector<8x8xf32>
    %129 = vector.shape_cast %128 : vector<8x8xf32> to vector<8x8x1xf32>
    %cst_45 = arith.constant 1.600000e+01 : f32
    %130 = vector.broadcast %cst_45 : f32 to vector<8x8x1xf32>
    %131 = arith.divf %129, %130 : vector<8x8x1xf32>
    %cst_46 = arith.constant 9.99999974E-6 : f32
    %132 = vector.broadcast %cst_46 : f32 to vector<8x8x1xf32>
    %133 = arith.addf %131, %132 : vector<8x8x1xf32>
    %134 = math.rsqrt %133 : vector<8x8x1xf32>
    %135 = vector.broadcast %134 : vector<8x8x1xf32> to vector<8x8x16xf32>
    %136 = arith.mulf %126, %135 : vector<8x8x16xf32>
    %c0_47 = arith.constant 0 : index
    %c0_48 = arith.constant 0 : index
    %137 = vector.load %arg8[%c0_47, %c0_48] : memref<1x16xf32, #tpu.memory_space<vmem>>, vector<1x16xf32>
    %138 = vector.shape_cast %137 : vector<1x16xf32> to vector<1x1x16xf32>
    %139 = vector.broadcast %138 : vector<1x1x16xf32> to vector<8x8x16xf32>
    %140 = arith.mulf %136, %139 : vector<8x8x16xf32>
    %141 = vector.shape_cast %140 : vector<8x8x16xf32> to vector<64x16xf32>
    %142 = arith.truncf %141 : vector<64x16xf32> to vector<64x16xbf16>
    %c0_49 = arith.constant 0 : index
    %c0_50 = arith.constant 0 : index
    %143 = vector.load %arg9[%c0_49, %c0_50] : memref<16x32xbf16, #tpu.memory_space<vmem>>, vector<16x32xbf16>
    %cst_51 = arith.constant dense<0.000000e+00> : vector<64x32xf32>
    %144 = tpu.matmul %142, %143, %cst_51 {dimension_numbers = #tpu.dot_dimension_numbers<[1], [0], [0], [1], [0, 0, 1, 1], [], []>} : vector<64x16xbf16>, vector<16x32xbf16>, vector<64x32xf32> -> vector<64x32xf32>
    %c0_52 = arith.constant 0 : index
    %c0_53 = arith.constant 0 : index
    %145 = vector.load %arg10[%c0_52, %c0_53] : memref<1x32xf32, #tpu.memory_space<vmem>>, vector<1x32xf32>
    %146 = vector.broadcast %145 : vector<1x32xf32> to vector<64x32xf32>
    %147 = arith.addf %144, %146 : vector<64x32xf32>
    %cst_54 = arith.constant 0.000000e+00 : f32
    %148 = vector.broadcast %cst_54 : f32 to vector<64x1xf32>
    %149 = tpu.concatenate %148, %147, %148 in 1 : vector<64x1xf32>, vector<64x32xf32>, vector<64x1xf32> -> vector<64x34xf32>
    %150 = vector.extract_strided_slice %149 {offsets = [0, 0], sizes = [64, 32], strides = [1, 1]} : vector<64x34xf32> to vector<64x32xf32>
    %151 = vector.extract_strided_slice %149 {offsets = [0, 1], sizes = [64, 32], strides = [1, 1]} : vector<64x34xf32> to vector<64x32xf32>
    %152 = vector.extract_strided_slice %149 {offsets = [0, 2], sizes = [64, 32], strides = [1, 1]} : vector<64x34xf32> to vector<64x32xf32>
    %153 = tpu.concatenate %150, %151, %152 in 0 : vector<64x32xf32>, vector<64x32xf32>, vector<64x32xf32> -> vector<192x32xf32>
    %154 = arith.truncf %153 : vector<192x32xf32> to vector<192x32xbf16>
    %c0_55 = arith.constant 0 : index
    %c0_56 = arith.constant 0 : index
    %155 = vector.load %arg11[%c0_55, %c0_56] : memref<64x192xbf16, #tpu.memory_space<vmem>>, vector<64x192xbf16>
    %cst_57 = arith.constant dense<0.000000e+00> : vector<64x32xf32>
    %156 = tpu.matmul %155, %154, %cst_57 {dimension_numbers = #tpu.dot_dimension_numbers<[1], [0], [0], [1], [0, 0, 1, 1], [], []>} : vector<64x192xbf16>, vector<192x32xbf16>, vector<64x32xf32> -> vector<64x32xf32>
    %c0_58 = arith.constant 0 : index
    %c0_59 = arith.constant 0 : index
    %157 = vector.load %arg12[%c0_58, %c0_59] : memref<64x32xf32, #tpu.memory_space<vmem>>, vector<64x32xf32>
    %158 = arith.addf %156, %157 : vector<64x32xf32>
    %cst_60 = arith.constant 0.000000e+00 : f32
    %159 = vector.broadcast %cst_60 : f32 to vector<64x32xf32>
    %160 = arith.subf %159, %158 : vector<64x32xf32>
    %161 = math.exp %160 : vector<64x32xf32>
    %cst_61 = arith.constant 1.000000e+00 : f32
    %162 = vector.broadcast %cst_61 : f32 to vector<64x32xf32>
    %163 = arith.addf %162, %161 : vector<64x32xf32>
    %cst_62 = arith.constant 1.000000e+00 : f32
    %164 = vector.broadcast %cst_62 : f32 to vector<64x32xf32>
    %165 = arith.divf %164, %163 : vector<64x32xf32>
    %166 = arith.mulf %158, %165 : vector<64x32xf32>
    %167 = vector.extract_strided_slice %166 {offsets = [0, 0], sizes = [64, 8], strides = [1, 1]} : vector<64x32xf32> to vector<64x8xf32>
    %168 = vector.extract_strided_slice %166 {offsets = [0, 8], sizes = [64, 8], strides = [1, 1]} : vector<64x32xf32> to vector<64x8xf32>
    %169 = vector.extract_strided_slice %166 {offsets = [0, 16], sizes = [64, 8], strides = [1, 1]} : vector<64x32xf32> to vector<64x8xf32>
    %170 = vector.extract_strided_slice %166 {offsets = [0, 24], sizes = [64, 8], strides = [1, 1]} : vector<64x32xf32> to vector<64x8xf32>
    %171 = tpu.concatenate %167, %168, %169, %170 in 0 : vector<64x8xf32>, vector<64x8xf32>, vector<64x8xf32>, vector<64x8xf32> -> vector<256x8xf32>
    %172 = arith.truncf %171 : vector<256x8xf32> to vector<256x8xbf16>
    %c0_63 = arith.constant 0 : index
    %c0_64 = arith.constant 0 : index
    %173 = vector.load %arg13[%c0_63, %c0_64] : memref<8x8xbf16, #tpu.memory_space<vmem>>, vector<8x8xbf16>
    %cst_65 = arith.constant dense<0.000000e+00> : vector<256x8xf32>
    %174 = tpu.matmul %172, %173, %cst_65 {dimension_numbers = #tpu.dot_dimension_numbers<[1], [0], [0], [1], [0, 0, 1, 1], [], []>} : vector<256x8xbf16>, vector<8x8xbf16>, vector<256x8xf32> -> vector<256x8xf32>
    %c0_66 = arith.constant 0 : index
    %c0_67 = arith.constant 0 : index
    %175 = vector.load %arg14[%c0_66, %c0_67] : memref<1x8xf32, #tpu.memory_space<vmem>>, vector<1x8xf32>
    %176 = vector.broadcast %175 : vector<1x8xf32> to vector<256x8xf32>
    %177 = arith.addf %174, %176 : vector<256x8xf32>
    %cst_68 = arith.constant 2.000000e+01 : f32
    %178 = vector.broadcast %cst_68 : f32 to vector<256x8xf32>
    %179 = arith.cmpf ogt, %177, %178 : vector<256x8xf32>
    %cst_69 = arith.constant 2.000000e+01 : f32
    %180 = vector.broadcast %cst_69 : f32 to vector<256x8xf32>
    %181 = arith.minimumf %177, %180 : vector<256x8xf32>
    %182 = math.exp %181 : vector<256x8xf32>
    %cst_70 = arith.constant 1.000000e+00 : f32
    %183 = vector.broadcast %cst_70 : f32 to vector<256x8xf32>
    %184 = arith.addf %183, %182 : vector<256x8xf32>
    %185 = math.log %184 : vector<256x8xf32>
    %186 = arith.select %179, %177, %185 : vector<256x8xi1>, vector<256x8xf32>
    %c0_71 = arith.constant 0 : index
    %c0_72 = arith.constant 0 : index
    %187 = vector.load %arg15[%c0_71, %c0_72] : memref<8x256xbf16, #tpu.memory_space<vmem>>, vector<8x256xbf16>
    %cst_73 = arith.constant dense<0.000000e+00> : vector<256x256xf32>
    %188 = tpu.matmul %172, %187, %cst_73 {dimension_numbers = #tpu.dot_dimension_numbers<[1], [0], [0], [1], [0, 0, 1, 1], [], []>} : vector<256x8xbf16>, vector<8x256xbf16>, vector<256x256xf32> -> vector<256x256xf32>
    %c0_74 = arith.constant 0 : index
    %c0_75 = arith.constant 0 : index
    %189 = vector.load %arg16[%c0_74, %c0_75] : memref<1x256xf32, #tpu.memory_space<vmem>>, vector<1x256xf32>
    %190 = vector.broadcast %189 : vector<1x256xf32> to vector<256x256xf32>
    %191 = arith.addf %188, %190 : vector<256x256xf32>
    %192 = vector.extract_strided_slice %191 {offsets = [0, 0], sizes = [256, 128], strides = [1, 1]} : vector<256x256xf32> to vector<256x128xf32>
    %193 = vector.extract_strided_slice %191 {offsets = [0, 128], sizes = [256, 128], strides = [1, 1]} : vector<256x256xf32> to vector<256x128xf32>
    %194 = arith.mulf %192, %193 : vector<256x128xf32>
    %cst_76 = arith.constant dense<0.000000e+00> : vector<256xf32>
    %195 = vector.multi_reduction <add>, %194, %cst_76 [1] : vector<256x128xf32> to vector<256xf32>
    %196 = vector.shape_cast %195 : vector<256xf32> to vector<256x1xf32>
    %197 = arith.mulf %171, %186 : vector<256x8xf32>
    %198 = vector.broadcast %196 : vector<256x1xf32> to vector<256x8xf32>
    %199 = arith.mulf %197, %198 : vector<256x8xf32>
    %cst_77 = arith.constant 0.000000e+00 : f32
    %200 = vector.broadcast %cst_77 : f32 to vector<256x8xf32>
    %201 = arith.subf %200, %199 : vector<256x8xf32>
    %202 = math.exp %201 : vector<256x8xf32>
    %cst_78 = arith.constant 1.000000e+00 : f32
    %203 = vector.broadcast %cst_78 : f32 to vector<256x8xf32>
    %204 = arith.addf %203, %202 : vector<256x8xf32>
    %cst_79 = arith.constant 1.000000e+00 : f32
    %205 = vector.broadcast %cst_79 : f32 to vector<256x8xf32>
    %206 = arith.divf %205, %204 : vector<256x8xf32>
    %207 = arith.mulf %199, %206 : vector<256x8xf32>
    %208 = vector.extract_strided_slice %207 {offsets = [0, 0], sizes = [64, 8], strides = [1, 1]} : vector<256x8xf32> to vector<64x8xf32>
    %209 = vector.extract_strided_slice %207 {offsets = [64, 0], sizes = [64, 8], strides = [1, 1]} : vector<256x8xf32> to vector<64x8xf32>
    %210 = vector.extract_strided_slice %207 {offsets = [128, 0], sizes = [64, 8], strides = [1, 1]} : vector<256x8xf32> to vector<64x8xf32>
    %211 = vector.extract_strided_slice %207 {offsets = [192, 0], sizes = [64, 8], strides = [1, 1]} : vector<256x8xf32> to vector<64x8xf32>
    %212 = tpu.concatenate %208, %209, %210, %211 in 1 : vector<64x8xf32>, vector<64x8xf32>, vector<64x8xf32>, vector<64x8xf32> -> vector<64x32xf32>
    %213 = arith.truncf %212 : vector<64x32xf32> to vector<64x32xbf16>
    %c0_80 = arith.constant 0 : index
    %c0_81 = arith.constant 0 : index
    %214 = vector.load %arg17[%c0_80, %c0_81] : memref<32x16xbf16, #tpu.memory_space<vmem>>, vector<32x16xbf16>
    %cst_82 = arith.constant dense<0.000000e+00> : vector<64x16xf32>
    %215 = tpu.matmul %213, %214, %cst_82 {dimension_numbers = #tpu.dot_dimension_numbers<[1], [0], [0], [1], [0, 0, 1, 1], [], []>} : vector<64x32xbf16>, vector<32x16xbf16>, vector<64x16xf32> -> vector<64x16xf32>
    %c0_83 = arith.constant 0 : index
    %c0_84 = arith.constant 0 : index
    %216 = vector.load %arg18[%c0_83, %c0_84] : memref<1x16xf32, #tpu.memory_space<vmem>>, vector<1x16xf32>
    %217 = vector.broadcast %216 : vector<1x16xf32> to vector<64x16xf32>
    %218 = arith.addf %215, %217 : vector<64x16xf32>
    %219 = arith.addf %218, %52 : vector<64x16xf32>
    %220 = arith.truncf %219 : vector<64x16xf32> to vector<64x16xbf16>
    %c0_85 = arith.constant 0 : index
    %c0_86 = arith.constant 0 : index
    %221 = vector.load %arg19[%c0_85, %c0_86] : memref<16x8xbf16, #tpu.memory_space<vmem>>, vector<16x8xbf16>
    %cst_87 = arith.constant dense<0.000000e+00> : vector<64x8xf32>
    %222 = tpu.matmul %220, %221, %cst_87 {dimension_numbers = #tpu.dot_dimension_numbers<[1], [0], [0], [1], [0, 0, 1, 1], [], []>} : vector<64x16xbf16>, vector<16x8xbf16>, vector<64x8xf32> -> vector<64x8xf32>
    %c0_88 = arith.constant 0 : index
    %c0_89 = arith.constant 0 : index
    %223 = vector.load %arg20[%c0_88, %c0_89] : memref<1x8xf32, #tpu.memory_space<vmem>>, vector<1x8xf32>
    %224 = vector.broadcast %223 : vector<1x8xf32> to vector<64x8xf32>
    %225 = arith.addf %222, %224 : vector<64x8xf32>
    %cst_90 = arith.constant 0.000000e+00 : f32
    %226 = vector.broadcast %cst_90 : f32 to vector<64x8xf32>
    %227 = arith.subf %226, %225 : vector<64x8xf32>
    %228 = math.exp %227 : vector<64x8xf32>
    %cst_91 = arith.constant 1.000000e+00 : f32
    %229 = vector.broadcast %cst_91 : f32 to vector<64x8xf32>
    %230 = arith.addf %229, %228 : vector<64x8xf32>
    %cst_92 = arith.constant 1.000000e+00 : f32
    %231 = vector.broadcast %cst_92 : f32 to vector<64x8xf32>
    %232 = arith.divf %231, %230 : vector<64x8xf32>
    %233 = arith.mulf %225, %232 : vector<64x8xf32>
    %234 = vector.shape_cast %233 : vector<64x8xf32> to vector<8x8x8xf32>
    %cst_93 = arith.constant 0.000000e+00 : f32
    %235 = vector.broadcast %cst_93 : f32 to vector<1x8x8xf32>
    %236 = tpu.concatenate %235, %234, %235 in 0 : vector<1x8x8xf32>, vector<8x8x8xf32>, vector<1x8x8xf32> -> vector<10x8x8xf32>
    %cst_94 = arith.constant 0.000000e+00 : f32
    %237 = vector.broadcast %cst_94 : f32 to vector<10x8x8xf32>
    %238 = tpu.concatenate %237, %236, %237 in 1 : vector<10x8x8xf32>, vector<10x8x8xf32>, vector<10x8x8xf32> -> vector<10x24x8xf32>
    %239 = vector.extract_strided_slice %238 {offsets = [0, 7, 0], sizes = [8, 8, 8], strides = [1, 1, 1]} : vector<10x24x8xf32> to vector<8x8x8xf32>
    %240 = vector.shape_cast %239 : vector<8x8x8xf32> to vector<64x8xf32>
    %241 = vector.extract_strided_slice %238 {offsets = [0, 8, 0], sizes = [8, 8, 8], strides = [1, 1, 1]} : vector<10x24x8xf32> to vector<8x8x8xf32>
    %242 = vector.shape_cast %241 : vector<8x8x8xf32> to vector<64x8xf32>
    %243 = vector.extract_strided_slice %238 {offsets = [0, 9, 0], sizes = [8, 8, 8], strides = [1, 1, 1]} : vector<10x24x8xf32> to vector<8x8x8xf32>
    %244 = vector.shape_cast %243 : vector<8x8x8xf32> to vector<64x8xf32>
    %245 = vector.extract_strided_slice %238 {offsets = [1, 7, 0], sizes = [8, 8, 8], strides = [1, 1, 1]} : vector<10x24x8xf32> to vector<8x8x8xf32>
    %246 = vector.shape_cast %245 : vector<8x8x8xf32> to vector<64x8xf32>
    %247 = vector.extract_strided_slice %238 {offsets = [1, 8, 0], sizes = [8, 8, 8], strides = [1, 1, 1]} : vector<10x24x8xf32> to vector<8x8x8xf32>
    %248 = vector.shape_cast %247 : vector<8x8x8xf32> to vector<64x8xf32>
    %249 = vector.extract_strided_slice %238 {offsets = [1, 9, 0], sizes = [8, 8, 8], strides = [1, 1, 1]} : vector<10x24x8xf32> to vector<8x8x8xf32>
    %250 = vector.shape_cast %249 : vector<8x8x8xf32> to vector<64x8xf32>
    %251 = vector.extract_strided_slice %238 {offsets = [2, 7, 0], sizes = [8, 8, 8], strides = [1, 1, 1]} : vector<10x24x8xf32> to vector<8x8x8xf32>
    %252 = vector.shape_cast %251 : vector<8x8x8xf32> to vector<64x8xf32>
    %253 = vector.extract_strided_slice %238 {offsets = [2, 8, 0], sizes = [8, 8, 8], strides = [1, 1, 1]} : vector<10x24x8xf32> to vector<8x8x8xf32>
    %254 = vector.shape_cast %253 : vector<8x8x8xf32> to vector<64x8xf32>
    %255 = vector.extract_strided_slice %238 {offsets = [2, 9, 0], sizes = [8, 8, 8], strides = [1, 1, 1]} : vector<10x24x8xf32> to vector<8x8x8xf32>
    %256 = vector.shape_cast %255 : vector<8x8x8xf32> to vector<64x8xf32>
    %257 = tpu.concatenate %240, %242, %244, %246, %248, %250, %252, %254, %256 in 1 : vector<64x8xf32>, vector<64x8xf32>, vector<64x8xf32>, vector<64x8xf32>, vector<64x8xf32>, vector<64x8xf32>, vector<64x8xf32>, vector<64x8xf32>, vector<64x8xf32> -> vector<64x72xf32>
    %258 = arith.truncf %257 : vector<64x72xf32> to vector<64x72xbf16>
    %c0_95 = arith.constant 0 : index
    %c0_96 = arith.constant 0 : index
    %259 = vector.load %arg21[%c0_95, %c0_96] : memref<72x8xbf16, #tpu.memory_space<vmem>>, vector<72x8xbf16>
    %cst_97 = arith.constant dense<0.000000e+00> : vector<64x8xf32>
    %260 = tpu.matmul %258, %259, %cst_97 {dimension_numbers = #tpu.dot_dimension_numbers<[1], [0], [0], [1], [0, 0, 1, 1], [], []>} : vector<64x72xbf16>, vector<72x8xbf16>, vector<64x8xf32> -> vector<64x8xf32>
    %c0_98 = arith.constant 0 : index
    %c0_99 = arith.constant 0 : index
    %261 = vector.load %arg22[%c0_98, %c0_99] : memref<1x8xf32, #tpu.memory_space<vmem>>, vector<1x8xf32>
    %262 = vector.broadcast %261 : vector<1x8xf32> to vector<64x8xf32>
    %263 = arith.addf %260, %262 : vector<64x8xf32>
    %cst_100 = arith.constant 0.000000e+00 : f32
    %264 = vector.broadcast %cst_100 : f32 to vector<64x8xf32>
    %265 = arith.subf %264, %263 : vector<64x8xf32>
    %266 = math.exp %265 : vector<64x8xf32>
    %cst_101 = arith.constant 1.000000e+00 : f32
    %267 = vector.broadcast %cst_101 : f32 to vector<64x8xf32>
    %268 = arith.addf %267, %266 : vector<64x8xf32>
    %cst_102 = arith.constant 1.000000e+00 : f32
    %269 = vector.broadcast %cst_102 : f32 to vector<64x8xf32>
    %270 = arith.divf %269, %268 : vector<64x8xf32>
    %271 = arith.mulf %263, %270 : vector<64x8xf32>
    %c0_103 = arith.constant 0 : index
    %c0_104 = arith.constant 0 : index
    %c0_105 = arith.constant 0 : index
    %272 = vector.load %arg23[%c0_103, %c0_104, %c0_105] : memref<1x64x8xf32, #tpu.memory_space<vmem>>, vector<1x64x8xf32>
    %273 = vector.shape_cast %272 : vector<1x64x8xf32> to vector<64x8xf32>
    %274 = vector.shape_cast %271 : vector<64x8xf32> to vector<1x64x8xf32>
    tpu.vector_store %arg23[%c0_103, %c0_104, %c0_105], %274 {strides = array<i32>} : memref<1x64x8xf32, #tpu.memory_space<vmem>>, vector<1x64x8xf32>,
    return
  }
  func.func @transform_0(%arg0: i32) -> (i32, i32, i32, i32) {
    %c0_i32 = arith.constant 0 : i32
    %c0_i32_0 = arith.constant 0 : i32
    %c0_i32_1 = arith.constant 0 : i32
    %c0_i32_2 = arith.constant 0 : i32
    return %arg0, %c0_i32, %c0_i32_0, %c0_i32_1 : i32, i32, i32, i32
  }
  func.func @transform_1(%arg0: i32) -> (i32, i32) {
    %c0_i32 = arith.constant 0 : i32
    %c0_i32_0 = arith.constant 0 : i32
    %c0_i32_1 = arith.constant 0 : i32
    return %c0_i32, %c0_i32_0 : i32, i32
  }
  func.func @transform_2(%arg0: i32) -> (i32, i32) {
    %c0_i32 = arith.constant 0 : i32
    %c0_i32_0 = arith.constant 0 : i32
    %c0_i32_1 = arith.constant 0 : i32
    return %c0_i32, %c0_i32_0 : i32, i32
  }
  func.func @transform_3(%arg0: i32) -> (i32, i32) {
    %c0_i32 = arith.constant 0 : i32
    %c0_i32_0 = arith.constant 0 : i32
    %c0_i32_1 = arith.constant 0 : i32
    return %c0_i32, %c0_i32_0 : i32, i32
  }
  func.func @transform_4(%arg0: i32) -> (i32, i32) {
    %c0_i32 = arith.constant 0 : i32
    %c0_i32_0 = arith.constant 0 : i32
    %c0_i32_1 = arith.constant 0 : i32
    return %c0_i32, %c0_i32_0 : i32, i32
  }
  func.func @transform_5(%arg0: i32) -> (i32, i32, i32) {
    %c0_i32 = arith.constant 0 : i32
    %c0_i32_0 = arith.constant 0 : i32
    %c0_i32_1 = arith.constant 0 : i32
    %c0_i32_2 = arith.constant 0 : i32
    return %c0_i32, %c0_i32_0, %c0_i32_1 : i32, i32, i32
  }
  func.func @transform_6(%arg0: i32) -> (i32, i32) {
    %c0_i32 = arith.constant 0 : i32
    %c0_i32_0 = arith.constant 0 : i32
    %c0_i32_1 = arith.constant 0 : i32
    return %c0_i32, %c0_i32_0 : i32, i32
  }
  func.func @transform_7(%arg0: i32) -> (i32, i32) {
    %c0_i32 = arith.constant 0 : i32
    %c0_i32_0 = arith.constant 0 : i32
    %c0_i32_1 = arith.constant 0 : i32
    return %c0_i32, %c0_i32_0 : i32, i32
  }
  func.func @transform_8(%arg0: i32) -> (i32, i32) {
    %c0_i32 = arith.constant 0 : i32
    %c0_i32_0 = arith.constant 0 : i32
    %c0_i32_1 = arith.constant 0 : i32
    return %c0_i32, %c0_i32_0 : i32, i32
  }
  func.func @transform_9(%arg0: i32) -> (i32, i32) {
    %c0_i32 = arith.constant 0 : i32
    %c0_i32_0 = arith.constant 0 : i32
    %c0_i32_1 = arith.constant 0 : i32
    return %c0_i32, %c0_i32_0 : i32, i32
  }
  func.func @transform_10(%arg0: i32) -> (i32, i32) {
    %c0_i32 = arith.constant 0 : i32
    %c0_i32_0 = arith.constant 0 : i32
    %c0_i32_1 = arith.constant 0 : i32
    return %c0_i32, %c0_i32_0 : i32, i32
  }
  func.func @transform_11(%arg0: i32) -> (i32, i32) {
    %c0_i32 = arith.constant 0 : i32
    %c0_i32_0 = arith.constant 0 : i32
    %c0_i32_1 = arith.constant 0 : i32
    return %c0_i32, %c0_i32_0 : i32, i32
  }
  func.func @transform_12(%arg0: i32) -> (i32, i32) {
    %c0_i32 = arith.constant 0 : i32
    %c0_i32_0 = arith.constant 0 : i32
    %c0_i32_1 = arith.constant 0 : i32
    return %c0_i32, %c0_i32_0 : i32, i32
  }
  func.func @transform_13(%arg0: i32) -> (i32, i32) {
    %c0_i32 = arith.constant 0 : i32
    %c0_i32_0 = arith.constant 0 : i32
    %c0_i32_1 = arith.constant 0 : i32
    return %c0_i32, %c0_i32_0 : i32, i32
  }
  func.func @transform_14(%arg0: i32) -> (i32, i32) {
    %c0_i32 = arith.constant 0 : i32
    %c0_i32_0 = arith.constant 0 : i32
    %c0_i32_1 = arith.constant 0 : i32
    return %c0_i32, %c0_i32_0 : i32, i32
  }
  func.func @transform_15(%arg0: i32) -> (i32, i32) {
    %c0_i32 = arith.constant 0 : i32
    %c0_i32_0 = arith.constant 0 : i32
    %c0_i32_1 = arith.constant 0 : i32
    return %c0_i32, %c0_i32_0 : i32, i32
  }
  func.func @transform_16(%arg0: i32) -> (i32, i32) {
    %c0_i32 = arith.constant 0 : i32
    %c0_i32_0 = arith.constant 0 : i32
    %c0_i32_1 = arith.constant 0 : i32
    return %c0_i32, %c0_i32_0 : i32, i32
  }
  func.func @transform_17(%arg0: i32) -> (i32, i32) {
    %c0_i32 = arith.constant 0 : i32
    %c0_i32_0 = arith.constant 0 : i32
    %c0_i32_1 = arith.constant 0 : i32
    return %c0_i32, %c0_i32_0 : i32, i32
  }
  func.func @transform_18(%arg0: i32) -> (i32, i32) {
    %c0_i32 = arith.constant 0 : i32
    %c0_i32_0 = arith.constant 0 : i32
    %c0_i32_1 = arith.constant 0 : i32
    return %c0_i32, %c0_i32_0 : i32, i32
  }
  func.func @transform_19(%arg0: i32) -> (i32, i32) {
    %c0_i32 = arith.constant 0 : i32
    %c0_i32_0 = arith.constant 0 : i32
    %c0_i32_1 = arith.constant 0 : i32
    return %c0_i32, %c0_i32_0 : i32, i32
  }
  func.func @transform_20(%arg0: i32) -> (i32, i32) {
    %c0_i32 = arith.constant 0 : i32
    %c0_i32_0 = arith.constant 0 : i32
    %c0_i32_1 = arith.constant 0 : i32
    return %c0_i32, %c0_i32_0 : i32, i32
  }
  func.func @transform_21(%arg0: i32) -> (i32, i32) {
    %c0_i32 = arith.constant 0 : i32
    %c0_i32_0 = arith.constant 0 : i32
    %c0_i32_1 = arith.constant 0 : i32
    return %c0_i32, %c0_i32_0 : i32, i32
  }
  func.func @transform_22(%arg0: i32) -> (i32, i32, i32) {
    %c0_i32 = arith.constant 0 : i32
    %c0_i32_0 = arith.constant 0 : i32
    %c0_i32_1 = arith.constant 0 : i32
    return %arg0, %c0_i32, %c0_i32_0 : i32, i32, i32
  }
}

</mosaic_0001>

<llo_original>
// kernel: _lambda_.1
$region0: #{_lambda_.1}
  #allocation0 [shape = 'u32[]', space=smem, size = 0x4, offset = 0x4, fixed_abs, tag = 'smem constant byte address 0x4 - core index']
  #allocation1 [shape = 'u32[144,128]{1,0:T(1,128)}', space=vmem, size = 0x12000, scoped, tag = 'internal scratch']
  %s0 = inlined_call_operand.vmem [shape: f32[2,8,8,4], index: 0, kind: input, shape index: {}]
  %s1 = inlined_call_operand.vmem [shape: bf16[36,4], index: 1, kind: input, shape index: {}]
  %s2 = inlined_call_operand.hbm [shape: f32[1,4], index: 2, kind: input, shape index: {}]
  %s3 = inlined_call_operand.hbm [shape: bf16[4,16], index: 3, kind: input, shape index: {}]
  %s4 = inlined_call_operand.hbm [shape: f32[1,16], index: 4, kind: input, shape index: {}]
  %s5 = inlined_call_operand.hbm [shape: f32[9,1,16], index: 5, kind: input, shape index: {}]
  %s6 = inlined_call_operand.hbm [shape: f32[1,16], index: 6, kind: input, shape index: {}]
  %s7 = inlined_call_operand.vmem [shape: f32[1,16], index: 7, kind: input, shape index: {}]
  %s8 = inlined_call_operand.hbm [shape: bf16[16,32], index: 8, kind: input, shape index: {}]
  %s9 = inlined_call_operand.hbm [shape: f32[1,32], index: 9, kind: input, shape index: {}]
  %s10 = inlined_call_operand.vmem [shape: bf16[64,192], index: 10, kind: input, shape index: {}]
  %s11 = inlined_call_operand.vmem [shape: f32[64,32], index: 11, kind: input, shape index: {}]
  %s12 = inlined_call_operand.hbm [shape: bf16[8,8], index: 12, kind: input, shape index: {}]
  %s13 = inlined_call_operand.hbm [shape: f32[1,8], index: 13, kind: input, shape index: {}]
  %s14 = inlined_call_operand.vmem [shape: bf16[8,256], index: 14, kind: input, shape index: {}]
  %s15 = inlined_call_operand.vmem [shape: f32[1,256], index: 15, kind: input, shape index: {}]
  %s16 = inlined_call_operand.vmem [shape: bf16[32,16], index: 16, kind: input, shape index: {}]
  %s17 = inlined_call_operand.vmem [shape: f32[1,16], index: 17, kind: input, shape index: {}]
  %s18 = inlined_call_operand.vmem [shape: bf16[16,8], index: 18, kind: input, shape index: {}]
  %s19 = inlined_call_operand.vmem [shape: f32[1,8], index: 19, kind: input, shape index: {}]
  %s20 = inlined_call_operand.vmem [shape: bf16[72,8], index: 20, kind: input, shape index: {}]
  %s21 = inlined_call_operand.vmem [shape: f32[1,8], index: 21, kind: input, shape index: {}]
  %s22 = inlined_call_operand.hbm [shape: f32[2,64,8], index: 22, kind: output, shape index: {}]
  %s23 = sld [smem:[#allocation0]]
  $region157: #{_lambda_.1} parent=0
    _
  %s25 = ssub.s32 1, %s23
  %s26 = scalar_select 0, %s25, %s23
  $region1: #{_lambda_.1} parent=0
    #allocation2 [shape = 'u8[512]{0}', space=vmem, size = 0x400, scoped, tag = 'input window, operand 2, single buffered']
    #allocation3 [shape = 's32[2]{0}', space=sflag, size = 0x8, scoped, tag = 'scoped memory for _lambda_.1']
    #allocation4 [shape = 's32[2]{0}', space=sflag, size = 0x8, scoped, tag = 'scoped memory for _lambda_.1']
    #allocation5 [shape = 'u8[1024]{0}', space=vmem, size = 0x400, scoped, tag = 'input window, operand 3, single buffered']
    #allocation6 [shape = 's32[1]{0}', space=sflag, size = 0x4, scoped, tag = 'scoped memory for _lambda_.1']
    #allocation7 [shape = 'u8[512]{0}', space=vmem, size = 0x400, scoped, tag = 'input window, operand 4, single buffered']
    #allocation8 [shape = 'u8[4608]{0}', space=vmem, size = 0x1400, scoped, tag = 'input window, operand 5, single buffered']
    #allocation9 [shape = 's32[1]{0}', space=sflag, size = 0x4, scoped, tag = 'scoped memory for _lambda_.1']
    #allocation10 [shape = 'u8[512]{0}', space=vmem, size = 0x400, scoped, tag = 'input window, operand 6, single buffered']
    #allocation11 [shape = 'u8[4096]{0}', space=vmem, size = 0x1000, scoped, tag = 'input window, operand 8, single buffered']
    #allocation12 [shape = 's32[1]{0}', space=sflag, size = 0x4, scoped, tag = 'scoped memory for _lambda_.1']
    #allocation13 [shape = 'u8[512]{0}', space=vmem, size = 0x400, scoped, tag = 'input window, operand 9, single buffered']
    #allocation14 [shape = 'u8[2048]{0}', space=vmem, size = 0x800, scoped, tag = 'input window, operand 12, single buffered']
    #allocation15 [shape = 's32[1]{0}', space=sflag, size = 0x4, scoped, tag = 'scoped memory for _lambda_.1']
    #allocation16 [shape = 'u8[512]{0}', space=vmem, size = 0x400, scoped, tag = 'input window, operand 13, single buffered']
    #allocation17 [shape = 'u8[65536]{0}', space=vmem, size = 0x10000, scoped, tag = 'output window, operand 0']
    %27 = vsyncpa [#allocation3], 0
    %28 = vsyncpa [#allocation6], 0
    %29 = vsyncpa [#allocation9], 0
    %30 = vsyncpa [#allocation12], 0
    %31 = vsyncpa [#allocation15], 0
    %32 = vsyncpa [#allocation4], 0
    %s33 = scalar_lea.sflag [#allocation4], 1
    %34 = vsyncpa %s33, 0
    loop: start=0, step=1, limit=4
    $region2: #{_lambda_.1} parent=1 // loop_pre_header
      _
    $region3: #{_lambda_.1} parent=1 // loop_header
      %s36 = sphi 0, %s40
      %p37 = scmp.ge.s32.totalorder %s36, 4
      %s46 = sphi 0, %s48
      %s49 = sphi 0, %s46
      %s50 = sphi 0, %s49
      %s66 = sphi 0, %s50
      %s70 = sphi 0, %s70
      %s72 = sphi 0, %s70
      %s73 = sphi 0, %s72
      %s87 = sphi 0, %s73
      %s91 = sphi 0, %s91
      %s93 = sphi 0, %s91
      %s94 = sphi 0, %s93
      %s108 = sphi 0, %s94
      %s112 = sphi 0, %s112
      %s114 = sphi 0, %s112
      %s115 = sphi 0, %s114
      %s129 = sphi 0, %s115
      %s133 = sphi 0, %s133
      %s135 = sphi 0, %s133
      %s136 = sphi 0, %s135
      %s150 = sphi 0, %s136
      %s154 = sphi 0, %s154
      %s156 = sphi 0, %s154
      %s157 = sphi 0, %s156
      %s171 = sphi 0, %s157
      %s175 = sphi 0, %s175
      %s177 = sphi 0, %s175
      %s178 = sphi 0, %s177
      %s192 = sphi 0, %s178
      %s196 = sphi 0, %s196
      %s198 = sphi 0, %s196
      %s199 = sphi 0, %s198
      %s213 = sphi 0, %s199
      %s217 = sphi 0, %s217
      %s219 = sphi 0, %s217
      %s220 = sphi 0, %s219
      %s234 = sphi 0, %s220
      %s238 = sphi 0, %s238
      %s240 = sphi 0, %s238
      %s241 = sphi 0, %s240
      %s255 = sphi 0, %s241
      %s259 = sphi 0, %s259
      %s261 = sphi 0, %s259
      %s262 = sphi 0, %s261
      %s276 = sphi 0, %s262
      %s280 = sphi 0, %s280
      %s282 = sphi 0, %s280
      %s283 = sphi 0, %s282
      %s297 = sphi 0, %s283
      %s301 = sphi 0, %s301
      %s303 = sphi 0, %s301
      %s304 = sphi 0, %s303
      %s318 = sphi 0, %s304
      %s322 = sphi 0, %s322
      %s324 = sphi 0, %s322
      %s325 = sphi 0, %s324
      %s339 = sphi 0, %s325
      %s343 = sphi 0, %s343
      %s345 = sphi 0, %s343
      %s346 = sphi 0, %s345
      %s360 = sphi 0, %s346
      %s364 = sphi 0, %s364
      %s366 = sphi 0, %s364
      %s367 = sphi 0, %s366
      %s381 = sphi 0, %s367
      %s385 = sphi 0, %s385
      %s387 = sphi 0, %s385
      %s388 = sphi 0, %s387
      %s402 = sphi 0, %s388
      %s406 = sphi 0, %s406
      %s408 = sphi 0, %s406
      %s409 = sphi 0, %s408
      %s423 = sphi 0, %s409
      %s427 = sphi 0, %s427
      %s429 = sphi 0, %s427
      %s430 = sphi 0, %s429
      %s444 = sphi 0, %s430
      %s448 = sphi 0, %s448
      %s450 = sphi 0, %s448
      %s451 = sphi 0, %s450
      %s465 = sphi 0, %s451
      %s469 = sphi 0, %s469
      %s471 = sphi 0, %s469
      %s472 = sphi 0, %s471
      %s486 = sphi 0, %s472
      %s490 = sphi 0, %s490
      %s492 = sphi 0, %s490
      %s493 = sphi 0, %s492
      %s507 = sphi 0, %s493
      %s513 = sphi 0, %s515
      %s516 = sphi 0, %s513
      %s517 = sphi 0, %s516
      %s533 = sphi 0, %s517
    $region4: #{_lambda_.1} parent=1 // loop_header_branch
      %39 = sbr.rel (%p37) target = $region8
    $region5: #{_lambda_.1} parent=1 // loop_body
      %s41 = ssub.s32 %s36, 1
      %s42 = ssub.s32 %s36, 2
      %s43 = sadd.s32 %s36, 1
      %s44 = ssub.s32 %s36, %s43
      %p45 = scmp.eq.s32.totalorder %s44, 0
      %s47 = sadd.s32 %s46, 1
      %s48 = scalar_select %p45, %s46, %s47
      %p51 = pneg %p45
      %p52 = scmp.eq.s32.totalorder %s36, 1
      %p53 = por %p51, %p52
      %p54 = scmp.ne.s32.totalorder %s46, %s49
      %p55 = scmp.eq.s32.totalorder %s36, 0
      %p56 = por %p54, %p55
      %p57 = scmp.ne.s32.totalorder %s46, %s49
      %p58 = scmp.eq.s32.totalorder %s41, 1
      %p59 = por %p57, %p58
      %p60 = scmp.ne.s32.totalorder %s49, %s50
      %p61 = scmp.eq.s32.totalorder %s41, 0
      %p62 = por %p60, %p61
      %p63 = scmp.ne.s32.totalorder %s49, %s50
      %p64 = scmp.eq.s32.totalorder %s42, 1
      %p65 = por %p63, %p64
      %p67 = scmp.ne.s32.totalorder %s50, %s66
      %p68 = scmp.eq.s32.totalorder %s42, 0
      %p69 = por %p67, %p68
      %s71 = sadd.s32 %s70, 1
      %p74 = scmp.eq.s32.totalorder %s36, 1
      %p75 = scmp.ne.s32.totalorder %s70, %s72
      %p76 = scmp.eq.s32.totalorder %s36, 0
      %p77 = por %p75, %p76
      %p78 = scmp.ne.s32.totalorder %s70, %s72
      %p79 = scmp.eq.s32.totalorder %s41, 1
      %p80 = por %p78, %p79
      %p81 = scmp.ne.s32.totalorder %s72, %s73
      %p82 = scmp.eq.s32.totalorder %s41, 0
      %p83 = por %p81, %p82
      %p84 = scmp.ne.s32.totalorder %s72, %s73
      %p85 = scmp.eq.s32.totalorder %s42, 1
      %p86 = por %p84, %p85
      %p88 = scmp.ne.s32.totalorder %s73, %s87
      %p89 = scmp.eq.s32.totalorder %s42, 0
      %p90 = por %p88, %p89
      %s92 = sadd.s32 %s91, 1
      %p95 = scmp.eq.s32.totalorder %s36, 1
      %p96 = scmp.ne.s32.totalorder %s91, %s93
      %p97 = scmp.eq.s32.totalorder %s36, 0
      %p98 = por %p96, %p97
      %p99 = scmp.ne.s32.totalorder %s91, %s93
      %p100 = scmp.eq.s32.totalorder %s41, 1
      %p101 = por %p99, %p100
      %p102 = scmp.ne.s32.totalorder %s93, %s94
      %p103 = scmp.eq.s32.totalorder %s41, 0
      %p104 = por %p102, %p103
      %p105 = scmp.ne.s32.totalorder %s93, %s94
      %p106 = scmp.eq.s32.totalorder %s42, 1
      %p107 = por %p105, %p106
      %p109 = scmp.ne.s32.totalorder %s94, %s108
      %p110 = scmp.eq.s32.totalorder %s42, 0
      %p111 = por %p109, %p110
      %s113 = sadd.s32 %s112, 1
      %p116 = scmp.eq.s32.totalorder %s36, 1
      %p117 = scmp.ne.s32.totalorder %s112, %s114
      %p118 = scmp.eq.s32.totalorder %s36, 0
      %p119 = por %p117, %p118
      %p120 = scmp.ne.s32.totalorder %s112, %s114
      %p121 = scmp.eq.s32.totalorder %s41, 1
      %p122 = por %p120, %p121
      %p123 = scmp.ne.s32.totalorder %s114, %s115
      %p124 = scmp.eq.s32.totalorder %s41, 0
      %p125 = por %p123, %p124
      %p126 = scmp.ne.s32.totalorder %s114, %s115
      %p127 = scmp.eq.s32.totalorder %s42, 1
      %p128 = por %p126, %p127
      %p130 = scmp.ne.s32.totalorder %s115, %s129
      %p131 = scmp.eq.s32.totalorder %s42, 0
      %p132 = por %p130, %p131
      %s134 = sadd.s32 %s133, 1
      %p137 = scmp.eq.s32.totalorder %s36, 1
      %p138 = scmp.ne.s32.totalorder %s133, %s135
      %p139 = scmp.eq.s32.totalorder %s36, 0
      %p140 = por %p138, %p139
      %p141 = scmp.ne.s32.totalorder %s133, %s135
      %p142 = scmp.eq.s32.totalorder %s41, 1
      %p143 = por %p141, %p142
      %p144 = scmp.ne.s32.totalorder %s135, %s136
      %p145 = scmp.eq.s32.totalorder %s41, 0
      %p146 = por %p144, %p145
      %p147 = scmp.ne.s32.totalorder %s135, %s136
      %p148 = scmp.eq.s32.totalorder %s42, 1
      %p149 = por %p147, %p148
      %p151 = scmp.ne.s32.totalorder %s136, %s150
      %p152 = scmp.eq.s32.totalorder %s42, 0
      %p153 = por %p151, %p152
      %s155 = sadd.s32 %s154, 1
      %p158 = scmp.eq.s32.totalorder %s36, 1
      %p159 = scmp.ne.s32.totalorder %s154, %s156
      %p160 = scmp.eq.s32.totalorder %s36, 0
      %p161 = por %p159, %p160
      %p162 = scmp.ne.s32.totalorder %s154, %s156
      %p163 = scmp.eq.s32.totalorder %s41, 1
      %p164 = por %p162, %p163
      %p165 = scmp.ne.s32.totalorder %s156, %s157
      %p166 = scmp.eq.s32.totalorder %s41, 0
      %p167 = por %p165, %p166
      %p168 = scmp.ne.s32.totalorder %s156, %s157
      %p169 = scmp.eq.s32.totalorder %s42, 1
      %p170 = por %p168, %p169
      %p172 = scmp.ne.s32.totalorder %s157, %s171
      %p173 = scmp.eq.s32.totalorder %s42, 0
      %p174 = por %p172, %p173
      %s176 = sadd.s32 %s175, 1
      %p179 = scmp.eq.s32.totalorder %s36, 1
      %p180 = scmp.ne.s32.totalorder %s175, %s177
      %p181 = scmp.eq.s32.totalorder %s36, 0
      %p182 = por %p180, %p181
      %p183 = scmp.ne.s32.totalorder %s175, %s177
      %p184 = scmp.eq.s32.totalorder %s41, 1
      %p185 = por %p183, %p184
      %p186 = scmp.ne.s32.totalorder %s177, %s178
      %p187 = scmp.eq.s32.totalorder %s41, 0
      %p188 = por %p186, %p187
      %p189 = scmp.ne.s32.totalorder %s177, %s178
      %p190 = scmp.eq.s32.totalorder %s42, 1
      %p191 = por %p189, %p190
      %p193 = scmp.ne.s32.totalorder %s178, %s192
      %p194 = scmp.eq.s32.totalorder %s42, 0
      %p195 = por %p193, %p194
      %s197 = sadd.s32 %s196, 1
      %p200 = scmp.eq.s32.totalorder %s36, 1
      %p201 = scmp.ne.s32.totalorder %s196, %s198
      %p202 = scmp.eq.s32.totalorder %s36, 0
      %p203 = por %p201, %p202
      %p204 = scmp.ne.s32.totalorder %s196, %s198
      %p205 = scmp.eq.s32.totalorder %s41, 1
      %p206 = por %p204, %p205
      %p207 = scmp.ne.s32.totalorder %s198, %s199
      %p208 = scmp.eq.s32.totalorder %s41, 0
      %p209 = por %p207, %p208
      %p210 = scmp.ne.s32.totalorder %s198, %s199
      %p211 = scmp.eq.s32.totalorder %s42, 1
      %p212 = por %p210, %p211
      %p214 = scmp.ne.s32.totalorder %s199, %s213
      %p215 = scmp.eq.s32.totalorder %s42, 0
      %p216 = por %p214, %p215
      %s218 = sadd.s32 %s217, 1
      %p221 = scmp.eq.s32.totalorder %s36, 1
      %p222 = scmp.ne.s32.totalorder %s217, %s219
      %p223 = scmp.eq.s32.totalorder %s36, 0
      %p224 = por %p222, %p223
      %p225 = scmp.ne.s32.totalorder %s217, %s219
      %p226 = scmp.eq.s32.totalorder %s41, 1
      %p227 = por %p225, %p226
      %p228 = scmp.ne.s32.totalorder %s219, %s220
      %p229 = scmp.eq.s32.totalorder %s41, 0
      %p230 = por %p228, %p229
      %p231 = scmp.ne.s32.totalorder %s219, %s220
      %p232 = scmp.eq.s32.totalorder %s42, 1
      %p233 = por %p231, %p232
      %p235 = scmp.ne.s32.totalorder %s220, %s234
      %p236 = scmp.eq.s32.totalorder %s42, 0
      %p237 = por %p235, %p236
      %s239 = sadd.s32 %s238, 1
      %p242 = scmp.eq.s32.totalorder %s36, 1
      %p243 = scmp.ne.s32.totalorder %s238, %s240
      %p244 = scmp.eq.s32.totalorder %s36, 0
      %p245 = por %p243, %p244
      %p246 = scmp.ne.s32.totalorder %s238, %s240
      %p247 = scmp.eq.s32.totalorder %s41, 1
      %p248 = por %p246, %p247
      %p249 = scmp.ne.s32.totalorder %s240, %s241
      %p250 = scmp.eq.s32.totalorder %s41, 0
      %p251 = por %p249, %p250
      %p252 = scmp.ne.s32.totalorder %s240, %s241
      %p253 = scmp.eq.s32.totalorder %s42, 1
      %p254 = por %p252, %p253
      %p256 = scmp.ne.s32.totalorder %s241, %s255
      %p257 = scmp.eq.s32.totalorder %s42, 0
      %p258 = por %p256, %p257
      %s260 = sadd.s32 %s259, 1
      %p263 = scmp.eq.s32.totalorder %s36, 1
      %p264 = scmp.ne.s32.totalorder %s259, %s261
      %p265 = scmp.eq.s32.totalorder %s36, 0
      %p266 = por %p264, %p265
      %p267 = scmp.ne.s32.totalorder %s259, %s261
      %p268 = scmp.eq.s32.totalorder %s41, 1
      %p269 = por %p267, %p268
      %p270 = scmp.ne.s32.totalorder %s261, %s262
      %p271 = scmp.eq.s32.totalorder %s41, 0
      %p272 = por %p270, %p271
      %p273 = scmp.ne.s32.totalorder %s261, %s262
      %p274 = scmp.eq.s32.totalorder %s42, 1
      %p275 = por %p273, %p274
      %p277 = scmp.ne.s32.totalorder %s262, %s276
      %p278 = scmp.eq.s32.totalorder %s42, 0
      %p279 = por %p277, %p278
      %s281 = sadd.s32 %s280, 1
      %p284 = scmp.eq.s32.totalorder %s36, 1
      %p285 = scmp.ne.s32.totalorder %s280, %s282
      %p286 = scmp.eq.s32.totalorder %s36, 0
      %p287 = por %p285, %p286
      %p288 = scmp.ne.s32.totalorder %s280, %s282
      %p289 = scmp.eq.s32.totalorder %s41, 1
      %p290 = por %p288, %p289
      %p291 = scmp.ne.s32.totalorder %s282, %s283
      %p292 = scmp.eq.s32.totalorder %s41, 0
      %p293 = por %p291, %p292
      %p294 = scmp.ne.s32.totalorder %s282, %s283
      %p295 = scmp.eq.s32.totalorder %s42, 1
      %p296 = por %p294, %p295
      %p298 = scmp.ne.s32.totalorder %s283, %s297
      %p299 = scmp.eq.s32.totalorder %s42, 0
      %p300 = por %p298, %p299
      %s302 = sadd.s32 %s301, 1
      %p305 = scmp.eq.s32.totalorder %s36, 1
      %p306 = scmp.ne.s32.totalorder %s301, %s303
      %p307 = scmp.eq.s32.totalorder %s36, 0
      %p308 = por %p306, %p307
      %p309 = scmp.ne.s32.totalorder %s301, %s303
      %p310 = scmp.eq.s32.totalorder %s41, 1
      %p311 = por %p309, %p310
      %p312 = scmp.ne.s32.totalorder %s303, %s304
      %p313 = scmp.eq.s32.totalorder %s41, 0
      %p314 = por %p312, %p313
      %p315 = scmp.ne.s32.totalorder %s303, %s304
      %p316 = scmp.eq.s32.totalorder %s42, 1
      %p317 = por %p315, %p316
      %p319 = scmp.ne.s32.totalorder %s304, %s318
      %p320 = scmp.eq.s32.totalorder %s42, 0
      %p321 = por %p319, %p320
      %s323 = sadd.s32 %s322, 1
      %p326 = scmp.eq.s32.totalorder %s36, 1
      %p327 = scmp.ne.s32.totalorder %s322, %s324
      %p328 = scmp.eq.s32.totalorder %s36, 0
      %p329 = por %p327, %p328
      %p330 = scmp.ne.s32.totalorder %s322, %s324
      %p331 = scmp.eq.s32.totalorder %s41, 1
      %p332 = por %p330, %p331
      %p333 = scmp.ne.s32.totalorder %s324, %s325
      %p334 = scmp.eq.s32.totalorder %s41, 0
      %p335 = por %p333, %p334
      %p336 = scmp.ne.s32.totalorder %s324, %s325
      %p337 = scmp.eq.s32.totalorder %s42, 1
      %p338 = por %p336, %p337
      %p340 = scmp.ne.s32.totalorder %s325, %s339
      %p341 = scmp.eq.s32.totalorder %s42, 0
      %p342 = por %p340, %p341
      %s344 = sadd.s32 %s343, 1
      %p347 = scmp.eq.s32.totalorder %s36, 1
      %p348 = scmp.ne.s32.totalorder %s343, %s345
      %p349 = scmp.eq.s32.totalorder %s36, 0
      %p350 = por %p348, %p349
      %p351 = scmp.ne.s32.totalorder %s343, %s345
      %p352 = scmp.eq.s32.totalorder %s41, 1
      %p353 = por %p351, %p352
      %p354 = scmp.ne.s32.totalorder %s345, %s346
      %p355 = scmp.eq.s32.totalorder %s41, 0
      %p356 = por %p354, %p355
      %p357 = scmp.ne.s32.totalorder %s345, %s346
      %p358 = scmp.eq.s32.totalorder %s42, 1
      %p359 = por %p357, %p358
      %p361 = scmp.ne.s32.totalorder %s346, %s360
      %p362 = scmp.eq.s32.totalorder %s42, 0
      %p363 = por %p361, %p362
      %s365 = sadd.s32 %s364, 1
      %p368 = scmp.eq.s32.totalorder %s36, 1
      %p369 = scmp.ne.s32.totalorder %s364, %s366
      %p370 = scmp.eq.s32.totalorder %s36, 0
      %p371 = por %p369, %p370
      %p372 = scmp.ne.s32.totalorder %s364, %s366
      %p373 = scmp.eq.s32.totalorder %s41, 1
      %p374 = por %p372, %p373
      %p375 = scmp.ne.s32.totalorder %s366, %s367
      %p376 = scmp.eq.s32.totalorder %s41, 0
      %p377 = por %p375, %p376
      %p378 = scmp.ne.s32.totalorder %s366, %s367
      %p379 = scmp.eq.s32.totalorder %s42, 1
      %p380 = por %p378, %p379
      %p382 = scmp.ne.s32.totalorder %s367, %s381
      %p383 = scmp.eq.s32.totalorder %s42, 0
      %p384 = por %p382, %p383
      %s386 = sadd.s32 %s385, 1
      %p389 = scmp.eq.s32.totalorder %s36, 1
      %p390 = scmp.ne.s32.totalorder %s385, %s387
      %p391 = scmp.eq.s32.totalorder %s36, 0
      %p392 = por %p390, %p391
      %p393 = scmp.ne.s32.totalorder %s385, %s387
      %p394 = scmp.eq.s32.totalorder %s41, 1
      %p395 = por %p393, %p394
      %p396 = scmp.ne.s32.totalorder %s387, %s388
      %p397 = scmp.eq.s32.totalorder %s41, 0
      %p398 = por %p396, %p397
      %p399 = scmp.ne.s32.totalorder %s387, %s388
      %p400 = scmp.eq.s32.totalorder %s42, 1
      %p401 = por %p399, %p400
      %p403 = scmp.ne.s32.totalorder %s388, %s402
      %p404 = scmp.eq.s32.totalorder %s42, 0
      %p405 = por %p403, %p404
      %s407 = sadd.s32 %s406, 1
      %p410 = scmp.eq.s32.totalorder %s36, 1
      %p411 = scmp.ne.s32.totalorder %s406, %s408
      %p412 = scmp.eq.s32.totalorder %s36, 0
      %p413 = por %p411, %p412
      %p414 = scmp.ne.s32.totalorder %s406, %s408
      %p415 = scmp.eq.s32.totalorder %s41, 1
      %p416 = por %p414, %p415
      %p417 = scmp.ne.s32.totalorder %s408, %s409
      %p418 = scmp.eq.s32.totalorder %s41, 0
      %p419 = por %p417, %p418
      %p420 = scmp.ne.s32.totalorder %s408, %s409
      %p421 = scmp.eq.s32.totalorder %s42, 1
      %p422 = por %p420, %p421
      %p424 = scmp.ne.s32.totalorder %s409, %s423
      %p425 = scmp.eq.s32.totalorder %s42, 0
      %p426 = por %p424, %p425
      %s428 = sadd.s32 %s427, 1
      %p431 = scmp.eq.s32.totalorder %s36, 1
      %p432 = scmp.ne.s32.totalorder %s427, %s429
      %p433 = scmp.eq.s32.totalorder %s36, 0
      %p434 = por %p432, %p433
      %p435 = scmp.ne.s32.totalorder %s427, %s429
      %p436 = scmp.eq.s32.totalorder %s41, 1
      %p437 = por %p435, %p436
      %p438 = scmp.ne.s32.totalorder %s429, %s430
      %p439 = scmp.eq.s32.totalorder %s41, 0
      %p440 = por %p438, %p439
      %p441 = scmp.ne.s32.totalorder %s429, %s430
      %p442 = scmp.eq.s32.totalorder %s42, 1
      %p443 = por %p441, %p442
      %p445 = scmp.ne.s32.totalorder %s430, %s444
      %p446 = scmp.eq.s32.totalorder %s42, 0
      %p447 = por %p445, %p446
      %s449 = sadd.s32 %s448, 1
      %p452 = scmp.eq.s32.totalorder %s36, 1
      %p453 = scmp.ne.s32.totalorder %s448, %s450
      %p454 = scmp.eq.s32.totalorder %s36, 0
      %p455 = por %p453, %p454
      %p456 = scmp.ne.s32.totalorder %s448, %s450
      %p457 = scmp.eq.s32.totalorder %s41, 1
      %p458 = por %p456, %p457
      %p459 = scmp.ne.s32.totalorder %s450, %s451
      %p460 = scmp.eq.s32.totalorder %s41, 0
      %p461 = por %p459, %p460
      %p462 = scmp.ne.s32.totalorder %s450, %s451
      %p463 = scmp.eq.s32.totalorder %s42, 1
      %p464 = por %p462, %p463
      %p466 = scmp.ne.s32.totalorder %s451, %s465
      %p467 = scmp.eq.s32.totalorder %s42, 0
      %p468 = por %p466, %p467
      %s470 = sadd.s32 %s469, 1
      %p473 = scmp.eq.s32.totalorder %s36, 1
      %p474 = scmp.ne.s32.totalorder %s469, %s471
      %p475 = scmp.eq.s32.totalorder %s36, 0
      %p476 = por %p474, %p475
      %p477 = scmp.ne.s32.totalorder %s469, %s471
      %p478 = scmp.eq.s32.totalorder %s41, 1
      %p479 = por %p477, %p478
      %p480 = scmp.ne.s32.totalorder %s471, %s472
      %p481 = scmp.eq.s32.totalorder %s41, 0
      %p482 = por %p480, %p481
      %p483 = scmp.ne.s32.totalorder %s471, %s472
      %p484 = scmp.eq.s32.totalorder %s42, 1
      %p485 = por %p483, %p484
      %p487 = scmp.ne.s32.totalorder %s472, %s486
      %p488 = scmp.eq.s32.totalorder %s42, 0
      %p489 = por %p487, %p488
      %s491 = sadd.s32 %s490, 1
      %p494 = scmp.eq.s32.totalorder %s36, 1
      %p495 = scmp.ne.s32.totalorder %s490, %s492
      %p496 = scmp.eq.s32.totalorder %s36, 0
      %p497 = por %p495, %p496
      %p498 = scmp.ne.s32.totalorder %s490, %s492
      %p499 = scmp.eq.s32.totalorder %s41, 1
      %p500 = por %p498, %p499
      %p501 = scmp.ne.s32.totalorder %s492, %s493
      %p502 = scmp.eq.s32.totalorder %s41, 0
      %p503 = por %p501, %p502
      %p504 = scmp.ne.s32.totalorder %s492, %s493
      %p505 = scmp.eq.s32.totalorder %s42, 1
      %p506 = por %p504, %p505
      %p508 = scmp.ne.s32.totalorder %s493, %s507
      %p509 = scmp.eq.s32.totalorder %s42, 0
      %p510 = por %p508, %p509
      %s511 = ssub.s32 %s36, %s43
      %p512 = scmp.eq.s32.totalorder %s511, 0
      %s514 = sadd.s32 %s513, 1
      %s515 = scalar_select %p512, %s513, %s514
      %p518 = pneg %p512
      %p519 = scmp.eq.s32.totalorder %s36, 1
      %p520 = por %p518, %p519
      %p521 = scmp.ne.s32.totalorder %s513, %s516
      %p522 = scmp.eq.s32.totalorder %s36, 0
      %p523 = por %p521, %p522
      %p524 = scmp.ne.s32.totalorder %s513, %s516
      %p525 = scmp.eq.s32.totalorder %s41, 1
      %p526 = por %p524, %p525
      %p527 = scmp.ne.s32.totalorder %s516, %s517
      %p528 = scmp.eq.s32.totalorder %s41, 0
      %p529 = por %p527, %p528
      %p530 = scmp.ne.s32.totalorder %s516, %s517
      %p531 = scmp.eq.s32.totalorder %s42, 1
      %p532 = por %p530, %p531
      %p534 = scmp.ne.s32.totalorder %s517, %s533
      %p535 = scmp.eq.s32.totalorder %s42, 0
      %p536 = por %p534, %p535
      %p537 = scmp.le.s32.totalorder 1, %s36
      %p538 = scmp.lt.s32.totalorder %s36, 3
      %p539 = pnand %p537, %p538
      %p540 = pneg %p539
      // Predicated region
      $region9: #{_lambda_.1} parent=5 // pred_check
        _
      $region10: #{_lambda_.1} parent=5 // pred_check_branch
        %542 = sbr.rel (%p539) target = $region12
      $region11: #{_lambda_.1} parent=5 // pred_region
        %s543 = ssub.s32 %s36, 1
        // Predicated region
        $region13: #{_lambda_.1} parent=11 // pred_check
          %p544 = pneg %p83
        $region14: #{_lambda_.1} parent=11 // pred_check_branch
          %546 = sbr.rel (%p544) target = $region16
        $region15: #{_lambda_.1} parent=11 // pred_region
          _
        $region16: #{_lambda_.1} parent=11 // pred_fallthru
          _
        // Predicated region
        $region17: #{_lambda_.1} parent=11 // pred_check
          %p547 = pneg %p104
        $region18: #{_lambda_.1} parent=11 // pred_check_branch
          %549 = sbr.rel (%p547) target = $region20
        $region19: #{_lambda_.1} parent=11 // pred_region
          %s551 = ssub.s32 16, 16
          %552 = vsyncadd [#allocation3], %s551
          %s554 = sshll.u32 [#allocation2], 4
          %s555 = int_to_ptr.vmem [resolvable:$true] %s554
          %557 = dma.hbm_to_vmem [thread:$0]  %s2, 16, %s555, [#allocation3]
        $region20: #{_lambda_.1} parent=11 // pred_fallthru
          _
        // Predicated region
        $region21: #{_lambda_.1} parent=11 // pred_check
          %p558 = pneg %p125
        $region22: #{_lambda_.1} parent=11 // pred_check_branch
          %560 = sbr.rel (%p558) target = $region24
        $region23: #{_lambda_.1} parent=11 // pred_region
          %s562 = ssub.s32 32, 32
          %563 = vsyncadd [#allocation6], %s562
          %s565 = sshll.u32 [#allocation5], 4
          %s566 = int_to_ptr.vmem [resolvable:$true] %s565
          %568 = dma.hbm_to_vmem [thread:$0]  %s3, 32, %s566, [#allocation6]
        $region24: #{_lambda_.1} parent=11 // pred_fallthru
          _
        // Predicated region
        $region25: #{_lambda_.1} parent=11 // pred_check
          %p569 = pneg %p146
        $region26: #{_lambda_.1} parent=11 // pred_check_branch
          %571 = sbr.rel (%p569) target = $region28
        $region27: #{_lambda_.1} parent=11 // pred_region
          %s573 = ssub.s32 16, 16
          %574 = vsyncadd [#allocation6], %s573
          %s576 = sshll.u32 [#allocation7], 4
          %s577 = int_to_ptr.vmem [resolvable:$true] %s576
          %579 = dma.hbm_to_vmem [thread:$0]  %s4, 16, %s577, [#allocation6]
        $region28: #{_lambda_.1} parent=11 // pred_fallthru
          _
        // Predicated region
        $region29: #{_lambda_.1} parent=11 // pred_check
          %p580 = pneg %p167
        $region30: #{_lambda_.1} parent=11 // pred_check_branch
          %582 = sbr.rel (%p580) target = $region32
        $region31: #{_lambda_.1} parent=11 // pred_region
          %s584 = ssub.s32 144, 144
          %585 = vsyncadd [#allocation9], %s584
          %s586 = sshll.u32 [#allocation8], 4
          %s587 = int_to_ptr.vmem [resolvable:$true] %s586
          %592 = dma.hbm_to_vmem [thread:$0]  %s5, 144, %s587, [#allocation9], 16, 16, 1
        $region32: #{_lambda_.1} parent=11 // pred_fallthru
          _
        // Predicated region
        $region33: #{_lambda_.1} parent=11 // pred_check
          %p593 = pneg %p188
        $region34: #{_lambda_.1} parent=11 // pred_check_branch
          %595 = sbr.rel (%p593) target = $region36
        $region35: #{_lambda_.1} parent=11 // pred_region
          %s597 = ssub.s32 16, 16
          %598 = vsyncadd [#allocation9], %s597
          %s600 = sshll.u32 [#allocation10], 4
          %s601 = int_to_ptr.vmem [resolvable:$true] %s600
          %603 = dma.hbm_to_vmem [thread:$0]  %s6, 16, %s601, [#allocation9]
        $region36: #{_lambda_.1} parent=11 // pred_fallthru
          _
        // Predicated region
        $region37: #{_lambda_.1} parent=11 // pred_check
          %p604 = pneg %p209
        $region38: #{_lambda_.1} parent=11 // pred_check_branch
          %606 = sbr.rel (%p604) target = $region40
        $region39: #{_lambda_.1} parent=11 // pred_region
          _
        $region40: #{_lambda_.1} parent=11 // pred_fallthru
          _
        // Predicated region
        $region41: #{_lambda_.1} parent=11 // pred_check
          %p607 = pneg %p230
        $region42: #{_lambda_.1} parent=11 // pred_check_branch
          %609 = sbr.rel (%p607) target = $region44
        $region43: #{_lambda_.1} parent=11 // pred_region
          %s611 = ssub.s32 128, 128
          %612 = vsyncadd [#allocation12], %s611
          %s613 = sshll.u32 [#allocation11], 4
          %s614 = int_to_ptr.vmem [resolvable:$true] %s613
          %619 = dma.hbm_to_vmem [thread:$0]  %s8, 128, %s614, [#allocation12], 64, 64, 4
        $region44: #{_lambda_.1} parent=11 // pred_fallthru
          _
        // Predicated region
        $region45: #{_lambda_.1} parent=11 // pred_check
          %p620 = pneg %p251
        $region46: #{_lambda_.1} parent=11 // pred_check_branch
          %622 = sbr.rel (%p620) target = $region48
        $region47: #{_lambda_.1} parent=11 // pred_region
          %s624 = ssub.s32 16, 16
          %625 = vsyncadd [#allocation12], %s624
          %s627 = sshll.u32 [#allocation13], 4
          %s628 = int_to_ptr.vmem [resolvable:$true] %s627
          %630 = dma.hbm_to_vmem [thread:$0]  %s9, 16, %s628, [#allocation12]
        $region48: #{_lambda_.1} parent=11 // pred_fallthru
          _
        // Predicated region
        $region49: #{_lambda_.1} parent=11 // pred_check
          %p631 = pneg %p272
        $region50: #{_lambda_.1} parent=11 // pred_check_branch
          %633 = sbr.rel (%p631) target = $region52
        $region51: #{_lambda_.1} parent=11 // pred_region
          _
        $region52: #{_lambda_.1} parent=11 // pred_fallthru
          _
        // Predicated region
        $region53: #{_lambda_.1} parent=11 // pred_check
          %p634 = pneg %p293
        $region54: #{_lambda_.1} parent=11 // pred_check_branch
          %636 = sbr.rel (%p634) target = $region56
        $region55: #{_lambda_.1} parent=11 // pred_region
          _
        $region56: #{_lambda_.1} parent=11 // pred_fallthru
          _
        // Predicated region
        $region57: #{_lambda_.1} parent=11 // pred_check
          %p637 = pneg %p314
        $region58: #{_lambda_.1} parent=11 // pred_check_branch
          %639 = sbr.rel (%p637) target = $region60
        $region59: #{_lambda_.1} parent=11 // pred_region
          %s641 = ssub.s32 64, 64
          %642 = vsyncadd [#allocation15], %s641
          %s644 = sshll.u32 [#allocation14], 4
          %s645 = int_to_ptr.vmem [resolvable:$true] %s644
          %647 = dma.hbm_to_vmem [thread:$0]  %s12, 64, %s645, [#allocation15]
        $region60: #{_lambda_.1} parent=11 // pred_fallthru
          _
        // Predicated region
        $region61: #{_lambda_.1} parent=11 // pred_check
          %p648 = pneg %p335
        $region62: #{_lambda_.1} parent=11 // pred_check_branch
          %650 = sbr.rel (%p648) target = $region64
        $region63: #{_lambda_.1} parent=11 // pred_region
          %s652 = ssub.s32 16, 16
          %653 = vsyncadd [#allocation15], %s652
          %s655 = sshll.u32 [#allocation16], 4
          %s656 = int_to_ptr.vmem [resolvable:$true] %s655
          %658 = dma.hbm_to_vmem [thread:$0]  %s13, 16, %s656, [#allocation15]
        $region64: #{_lambda_.1} parent=11 // pred_fallthru
          _
        // Predicated region
        $region65: #{_lambda_.1} parent=11 // pred_check
          %p659 = pneg %p356
        $region66: #{_lambda_.1} parent=11 // pred_check_branch
          %661 = sbr.rel (%p659) target = $region68
        $region67: #{_lambda_.1} parent=11 // pred_region
          _
        $region68: #{_lambda_.1} parent=11 // pred_fallthru
          _
        // Predicated region
        $region69: #{_lambda_.1} parent=11 // pred_check
          %p662 = pneg %p377
        $region70: #{_lambda_.1} parent=11 // pred_check_branch
          %664 = sbr.rel (%p662) target = $region72
        $region71: #{_lambda_.1} parent=11 // pred_region
          _
        $region72: #{_lambda_.1} parent=11 // pred_fallthru
          _
        // Predicated region
        $region73: #{_lambda_.1} parent=11 // pred_check
          %p665 = pneg %p398
        $region74: #{_lambda_.1} parent=11 // pred_check_branch
          %667 = sbr.rel (%p665) target = $region76
        $region75: #{_lambda_.1} parent=11 // pred_region
          _
        $region76: #{_lambda_.1} parent=11 // pred_fallthru
          _
        // Predicated region
        $region77: #{_lambda_.1} parent=11 // pred_check
          %p668 = pneg %p419
        $region78: #{_lambda_.1} parent=11 // pred_check_branch
          %670 = sbr.rel (%p668) target = $region80
        $region79: #{_lambda_.1} parent=11 // pred_region
          _
        $region80: #{_lambda_.1} parent=11 // pred_fallthru
          _
        // Predicated region
        $region81: #{_lambda_.1} parent=11 // pred_check
          %p671 = pneg %p440
        $region82: #{_lambda_.1} parent=11 // pred_check_branch
          %673 = sbr.rel (%p671) target = $region84
        $region83: #{_lambda_.1} parent=11 // pred_region
          _
        $region84: #{_lambda_.1} parent=11 // pred_fallthru
          _
        // Predicated region
        $region85: #{_lambda_.1} parent=11 // pred_check
          %p674 = pneg %p461
        $region86: #{_lambda_.1} parent=11 // pred_check_branch
          %676 = sbr.rel (%p674) target = $region88
        $region87: #{_lambda_.1} parent=11 // pred_region
          _
        $region88: #{_lambda_.1} parent=11 // pred_fallthru
          _
        // Predicated region
        $region89: #{_lambda_.1} parent=11 // pred_check
          %p677 = pneg %p482
        $region90: #{_lambda_.1} parent=11 // pred_check_branch
          %679 = sbr.rel (%p677) target = $region92
        $region91: #{_lambda_.1} parent=11 // pred_region
          _
        $region92: #{_lambda_.1} parent=11 // pred_fallthru
          _
        // Predicated region
        $region93: #{_lambda_.1} parent=11 // pred_check
          %p680 = pneg %p503
        $region94: #{_lambda_.1} parent=11 // pred_check_branch
          %682 = sbr.rel (%p680) target = $region96
        $region95: #{_lambda_.1} parent=11 // pred_region
          _
        $region96: #{_lambda_.1} parent=11 // pred_fallthru
          _
      $region12: #{_lambda_.1} parent=5 // pred_fallthru
        _
      %p683 = scmp.lt.s32.totalorder %s36, 2
      // Predicated region
      $region97: #{_lambda_.1} parent=5 // pred_check
        %p684 = pneg %p683
      $region98: #{_lambda_.1} parent=5 // pred_check_branch
        %686 = sbr.rel (%p684) target = $region100
      $region99: #{_lambda_.1} parent=5 // pred_region
        // Predicated region
        $region101: #{_lambda_.1} parent=99 // pred_check
          %p687 = pneg %p56
        $region102: #{_lambda_.1} parent=99 // pred_check_branch
          %689 = sbr.rel (%p687) target = $region104
        $region103: #{_lambda_.1} parent=99 // pred_region
          %p690 = scmp.lt.s32.totalorder %s36, 1
          %s691 = scalar_select %p690, %s36, 1
          %s692 = smul.addr %s691, 8
          %s693 = smul.addr %s692, 8
          %s694 = scalar_lea.vmem %s0, %s693
        $region104: #{_lambda_.1} parent=99 // pred_fallthru
          _
      $region100: #{_lambda_.1} parent=5 // pred_fallthru
        _
      %p695 = scmp.le.s32.totalorder 1, %s36
      %p696 = scmp.lt.s32.totalorder %s36, 3
      %p697 = pnand %p695, %p696
      %p698 = pneg %p697
      // Predicated region
      $region105: #{_lambda_.1} parent=5 // pred_check
        _
      $region106: #{_lambda_.1} parent=5 // pred_check_branch
        %700 = sbr.rel (%p697) target = $region108
      $region107: #{_lambda_.1} parent=5 // pred_region
        %s701 = ssub.s32 %s36, 1
        // Predicated region
        $region109: #{_lambda_.1} parent=107 // pred_check
          %p702 = pneg %p104
        $region110: #{_lambda_.1} parent=107 // pred_check_branch
          %704 = sbr.rel (%p702) target = $region112
        $region111: #{_lambda_.1} parent=107 // pred_region
          %705 = dma.done [#allocation3], 16
        $region112: #{_lambda_.1} parent=107 // pred_fallthru
          _
        // Predicated region
        $region113: #{_lambda_.1} parent=107 // pred_check
          %p706 = pneg %p125
        $region114: #{_lambda_.1} parent=107 // pred_check_branch
          %708 = sbr.rel (%p706) target = $region116
        $region115: #{_lambda_.1} parent=107 // pred_region
          %709 = dma.done [#allocation6], 32
        $region116: #{_lambda_.1} parent=107 // pred_fallthru
          _
        // Predicated region
        $region117: #{_lambda_.1} parent=107 // pred_check
          %p710 = pneg %p146
        $region118: #{_lambda_.1} parent=107 // pred_check_branch
          %712 = sbr.rel (%p710) target = $region120
        $region119: #{_lambda_.1} parent=107 // pred_region
          %713 = dma.done [#allocation6], 16
        $region120: #{_lambda_.1} parent=107 // pred_fallthru
          _
        // Predicated region
        $region121: #{_lambda_.1} parent=107 // pred_check
          %p714 = pneg %p167
        $region122: #{_lambda_.1} parent=107 // pred_check_branch
          %716 = sbr.rel (%p714) target = $region124
        $region123: #{_lambda_.1} parent=107 // pred_region
          %717 = dma.done [#allocation9], 144
        $region124: #{_lambda_.1} parent=107 // pred_fallthru
          _
        // Predicated region
        $region125: #{_lambda_.1} parent=107 // pred_check
          %p718 = pneg %p188
        $region126: #{_lambda_.1} parent=107 // pred_check_branch
          %720 = sbr.rel (%p718) target = $region128
        $region127: #{_lambda_.1} parent=107 // pred_region
          %721 = dma.done [#allocation9], 16
        $region128: #{_lambda_.1} parent=107 // pred_fallthru
          _
        // Predicated region
        $region129: #{_lambda_.1} parent=107 // pred_check
          %p722 = pneg %p230
        $region130: #{_lambda_.1} parent=107 // pred_check_branch
          %724 = sbr.rel (%p722) target = $region132
        $region131: #{_lambda_.1} parent=107 // pred_region
          %725 = dma.done [#allocation12], 128
        $region132: #{_lambda_.1} parent=107 // pred_fallthru
          _
        // Predicated region
        $region133: #{_lambda_.1} parent=107 // pred_check
          %p726 = pneg %p251
        $region134: #{_lambda_.1} parent=107 // pred_check_branch
          %728 = sbr.rel (%p726) target = $region136
        $region135: #{_lambda_.1} parent=107 // pred_region
          %729 = dma.done [#allocation12], 16
        $region136: #{_lambda_.1} parent=107 // pred_fallthru
          _
        // Predicated region
        $region137: #{_lambda_.1} parent=107 // pred_check
          %p730 = pneg %p314
        $region138: #{_lambda_.1} parent=107 // pred_check_branch
          %732 = sbr.rel (%p730) target = $region140
        $region139: #{_lambda_.1} parent=107 // pred_region
          %733 = dma.done [#allocation15], 64
        $region140: #{_lambda_.1} parent=107 // pred_fallthru
          _
        // Predicated region
        $region141: #{_lambda_.1} parent=107 // pred_check
          %p734 = pneg %p335
        $region142: #{_lambda_.1} parent=107 // pred_check_branch
          %736 = sbr.rel (%p734) target = $region144
        $region143: #{_lambda_.1} parent=107 // pred_region
          %737 = dma.done [#allocation15], 16
        $region144: #{_lambda_.1} parent=107 // pred_fallthru
          _
        %p738 = scmp.lt.s32.totalorder %s41, 1
        %s739 = scalar_select %p738, %s41, 1
        %s740 = smul.addr %s739, 8
        %s741 = smul.addr %s740, 8
        %s742 = scalar_lea.vmem %s0, %s741
        %p743 = pneg %p62
        %p744 = pneg %p59
        %p745 = pneg %p83
        %p746 = pneg %p80
        %p747 = pneg %p104
        %p748 = pneg %p101
        %p749 = pneg %p125
        %p750 = pneg %p122
        %p751 = pneg %p146
        %p752 = pneg %p143
        %p753 = pneg %p167
        %p754 = pneg %p164
        %p755 = pneg %p188
        %p756 = pneg %p185
        %p757 = pneg %p209
        %p758 = pneg %p206
        %p759 = pneg %p230
        %p760 = pneg %p227
        %p761 = pneg %p251
        %p762 = pneg %p248
        %p763 = pneg %p272
        %p764 = pneg %p269
        %p765 = pneg %p293
        %p766 = pneg %p290
        %p767 = pneg %p314
        %p768 = pneg %p311
        %p769 = pneg %p335
        %p770 = pneg %p332
        %p771 = pneg %p356
        %p772 = pneg %p353
        %p773 = pneg %p377
        %p774 = pneg %p374
        %p775 = pneg %p398
        %p776 = pneg %p395
        %p777 = pneg %p419
        %p778 = pneg %p416
        %p779 = pneg %p440
        %p780 = pneg %p437
        %p781 = pneg %p461
        %p782 = pneg %p458
        %p783 = pneg %p482
        %p784 = pneg %p479
        %p785 = pneg %p503
        %p786 = pneg %p500
        %p787 = pneg %p529
        %p788 = pneg %p526
        %s789 = sand.u32 %s516, 1
        %s790 = scalar_lea.sflag [#allocation4], %s789
        %s791 = sand.u32 %s516, 1
        %s792 = smul.addr %s791, 64
        %s793 = scalar_lea.vmem [#allocation17], %s792
        %p794 = scmp.lt.s32.totalorder %s41, 1
        %s795 = scalar_select %p794, %s41, 1
        %s796 = smul.addr %s795, 8
        %s797 = smul.addr %s796, 8
        %s798 = scalar_lea.vmem %s0, %s797
        %v800 = vld [vmem:[%s798] sm:$0xff]
        %v801 = vld [vmem:[%s798 + $0x8] sm:$0xff]
        %v802 = vld [vmem:[%s798 + $0x10] sm:$0xff]
        %v803 = vld [vmem:[%s798 + $0x18] sm:$0xff]
        %v804 = vld [vmem:[%s798 + $0x20] sm:$0xff]
        %v805 = vld [vmem:[%s798 + $0x28] sm:$0xff]
        %v806 = vld [vmem:[%s798 + $0x30] sm:$0xff]
        %v807 = vld [vmem:[%s798 + $0x38] sm:$0xff]
        %vm816 = vcmask 1040384
        %v817 = vrot.slane 0.0, 7
        %v818 = vsel %vm816, %v817, %v817
        %v819 = vrot.slane %v800, 7
        %v820 = vsel %vm816, %v817, %v819
        %v821 = vrot.slane %v801, 7
        %v822 = vsel %vm816, %v817, %v821
        %v823 = vrot.slane %v802, 7
        %v824 = vsel %vm816, %v817, %v823
        %v825 = vrot.slane %v803, 7
        %v826 = vsel %vm816, %v817, %v825
        %v827 = vrot.slane %v804, 7
        %v828 = vsel %vm816, %v817, %v827
        %v829 = vrot.slane %v805, 7
        %v830 = vsel %vm816, %v817, %v829
        %v831 = vrot.slane %v806, 7
        %v832 = vsel %vm816, %v817, %v831
        %vm841 = vcmask 1046528
        %v842 = vrot.slane 0.0, 1
        %v843 = vsel %vm841, %v842, %v842
        %v844 = vrot.slane %v800, 1
        %v845 = vsel %vm841, %v844, %v842
        %v846 = vrot.slane %v801, 1
        %v847 = vsel %vm841, %v846, %v842
        %v848 = vrot.slane %v802, 1
        %v849 = vsel %vm841, %v848, %v842
        %v850 = vrot.slane %v803, 1
        %v851 = vsel %vm841, %v850, %v842
        %v852 = vrot.slane %v804, 1
        %v853 = vsel %vm841, %v852, %v842
        %v854 = vrot.slane %v805, 1
        %v855 = vsel %vm841, %v854, %v842
        %v856 = vrot.slane %v806, 1
        %v857 = vsel %vm841, %v856, %v842
        %v859 = vrot.slane %v807, 7
        %v860 = vsel %vm816, %v817, %v859
        %v861 = vrot.slane %v807, 1
        %v862 = vsel %vm841, %v861, %v842
        %863 = vrot.lane.b32.xlu0 0.0, 4
        %v864 = vpop.permute.xlu0 %863
        %865 = vrot.lane.b32.xlu0 %v800, 4
        %v866 = vpop.permute.xlu0 %865
        %867 = vrot.lane.b32.xlu0 %v801, 4
        %v868 = vpop.permute.xlu0 %867
        %869 = vrot.lane.b32.xlu0 %v802, 4
        %v870 = vpop.permute.xlu0 %869
        %871 = vrot.lane.b32.xlu0 %v803, 4
        %v872 = vpop.permute.xlu0 %871
        %873 = vrot.lane.b32.xlu0 %v804, 4
        %v874 = vpop.permute.xlu0 %873
        %875 = vrot.lane.b32.xlu0 %v805, 4
        %v876 = vpop.permute.xlu0 %875
        %877 = vrot.lane.b32.xlu0 %v806, 4
        %v878 = vpop.permute.xlu0 %877
        %887 = vrot.lane.b32.xlu0 %v843, 8
        %v888 = vpop.permute.xlu0 %887
        %889 = vrot.lane.b32.xlu0 %v845, 8
        %v890 = vpop.permute.xlu0 %889
        %891 = vrot.lane.b32.xlu0 %v847, 8
        %v892 = vpop.permute.xlu0 %891
        %893 = vrot.lane.b32.xlu0 %v849, 8
        %v894 = vpop.permute.xlu0 %893
        %895 = vrot.lane.b32.xlu0 %v851, 8
        %v896 = vpop.permute.xlu0 %895
        %897 = vrot.lane.b32.xlu0 %v853, 8
        %v898 = vpop.permute.xlu0 %897
        %899 = vrot.lane.b32.xlu0 %v855, 8
        %v900 = vpop.permute.xlu0 %899
        %901 = vrot.lane.b32.xlu0 %v857, 8
        %v902 = vpop.permute.xlu0 %901
        %911 = vrot.lane.b32.xlu0 %v820, 12
        %v912 = vpop.permute.xlu0 %911
        %913 = vrot.lane.b32.xlu0 %v822, 12
        %v914 = vpop.permute.xlu0 %913
        %915 = vrot.lane.b32.xlu0 %v824, 12
        %v916 = vpop.permute.xlu0 %915
        %917 = vrot.lane.b32.xlu0 %v826, 12
        %v918 = vpop.permute.xlu0 %917
        %919 = vrot.lane.b32.xlu0 %v828, 12
        %v920 = vpop.permute.xlu0 %919
        %921 = vrot.lane.b32.xlu0 %v830, 12
        %v922 = vpop.permute.xlu0 %921
        %923 = vrot.lane.b32.xlu0 %v832, 12
        %v924 = vpop.permute.xlu0 %923
        %925 = vrot.lane.b32.xlu0 %v860, 12
        %v926 = vpop.permute.xlu0 %925
        %935 = vrot.lane.b32.xlu0 %v800, 16
        %v936 = vpop.permute.xlu0 %935
        %937 = vrot.lane.b32.xlu0 %v801, 16
        %v938 = vpop.permute.xlu0 %937
        %939 = vrot.lane.b32.xlu0 %v802, 16
        %v940 = vpop.permute.xlu0 %939
        %941 = vrot.lane.b32.xlu0 %v803, 16
        %v942 = vpop.permute.xlu0 %941
        %943 = vrot.lane.b32.xlu0 %v804, 16
        %v944 = vpop.permute.xlu0 %943
        %945 = vrot.lane.b32.xlu0 %v805, 16
        %v946 = vpop.permute.xlu0 %945
        %947 = vrot.lane.b32.xlu0 %v806, 16
        %v948 = vpop.permute.xlu0 %947
        %949 = vrot.lane.b32.xlu0 %v807, 16
        %v950 = vpop.permute.xlu0 %949
        %959 = vrot.lane.b32.xlu0 %v845, 20
        %v960 = vpop.permute.xlu0 %959
        %961 = vrot.lane.b32.xlu0 %v847, 20
        %v962 = vpop.permute.xlu0 %961
        %963 = vrot.lane.b32.xlu0 %v849, 20
        %v964 = vpop.permute.xlu0 %963
        %965 = vrot.lane.b32.xlu0 %v851, 20
        %v966 = vpop.permute.xlu0 %965
        %967 = vrot.lane.b32.xlu0 %v853, 20
        %v968 = vpop.permute.xlu0 %967
        %969 = vrot.lane.b32.xlu0 %v855, 20
        %v970 = vpop.permute.xlu0 %969
        %971 = vrot.lane.b32.xlu0 %v857, 20
        %v972 = vpop.permute.xlu0 %971
        %973 = vrot.lane.b32.xlu0 %v862, 20
        %v974 = vpop.permute.xlu0 %973
        %983 = vrot.lane.b32.xlu0 %v822, 24
        %v984 = vpop.permute.xlu0 %983
        %985 = vrot.lane.b32.xlu0 %v824, 24
        %v986 = vpop.permute.xlu0 %985
        %987 = vrot.lane.b32.xlu0 %v826, 24
        %v988 = vpop.permute.xlu0 %987
        %989 = vrot.lane.b32.xlu0 %v828, 24
        %v990 = vpop.permute.xlu0 %989
        %991 = vrot.lane.b32.xlu0 %v830, 24
        %v992 = vpop.permute.xlu0 %991
        %993 = vrot.lane.b32.xlu0 %v832, 24
        %v994 = vpop.permute.xlu0 %993
        %995 = vrot.lane.b32.xlu0 %v860, 24
        %v996 = vpop.permute.xlu0 %995
        %997 = vrot.lane.b32.xlu0 %v818, 24
        %v998 = vpop.permute.xlu0 %997
        %1007 = vrot.lane.b32.xlu0 %v801, 28
        %v1008 = vpop.permute.xlu0 %1007
        %1009 = vrot.lane.b32.xlu0 %v802, 28
        %v1010 = vpop.permute.xlu0 %1009
        %1011 = vrot.lane.b32.xlu0 %v803, 28
        %v1012 = vpop.permute.xlu0 %1011
        %1013 = vrot.lane.b32.xlu0 %v804, 28
        %v1014 = vpop.permute.xlu0 %1013
        %1015 = vrot.lane.b32.xlu0 %v805, 28
        %v1016 = vpop.permute.xlu0 %1015
        %1017 = vrot.lane.b32.xlu0 %v806, 28
        %v1018 = vpop.permute.xlu0 %1017
        %1019 = vrot.lane.b32.xlu0 %v807, 28
        %v1020 = vpop.permute.xlu0 %1019
        %1021 = vrot.lane.b32.xlu0 0.0, 28
        %v1022 = vpop.permute.xlu0 %1021
        %1031 = vrot.lane.b32.xlu0 %v847, 32
        %v1032 = vpop.permute.xlu0 %1031
        %1033 = vrot.lane.b32.xlu0 %v849, 32
        %v1034 = vpop.permute.xlu0 %1033
        %1035 = vrot.lane.b32.xlu0 %v851, 32
        %v1036 = vpop.permute.xlu0 %1035
        %1037 = vrot.lane.b32.xlu0 %v853, 32
        %v1038 = vpop.permute.xlu0 %1037
        %1039 = vrot.lane.b32.xlu0 %v855, 32
        %v1040 = vpop.permute.xlu0 %1039
        %1041 = vrot.lane.b32.xlu0 %v857, 32
        %v1042 = vpop.permute.xlu0 %1041
        %1043 = vrot.lane.b32.xlu0 %v862, 32
        %v1044 = vpop.permute.xlu0 %1043
        %1045 = vrot.lane.b32.xlu0 %v843, 32
        %v1046 = vpop.permute.xlu0 %1045
        %vm1055 = vcmask 31744
        %v1056 = vsel %vm1055, %v818, %v864
        %v1057 = vsel %vm1055, %v820, %v866
        %v1058 = vsel %vm1055, %v822, %v868
        %v1059 = vsel %vm1055, %v824, %v870
        %v1060 = vsel %vm1055, %v826, %v872
        %v1061 = vsel %vm1055, %v828, %v874
        %v1062 = vsel %vm1055, %v830, %v876
        %v1063 = vsel %vm1055, %v832, %v878
        %vm1064 = vcmask 64512
        %v1065 = vsel %vm1064, %v1056, %v888
        %v1066 = vsel %vm1064, %v1057, %v890
        %v1067 = vsel %vm1064, %v1058, %v892
        %v1068 = vsel %vm1064, %v1059, %v894
        %v1069 = vsel %vm1064, %v1060, %v896
        %v1070 = vsel %vm1064, %v1061, %v898
        %v1071 = vsel %vm1064, %v1062, %v900
        %v1072 = vsel %vm1064, %v1063, %v902
        %vm1073 = vcmask 97280
        %v1074 = vsel %vm1073, %v1065, %v912
        %v1075 = vsel %vm1073, %v1066, %v914
        %v1076 = vsel %vm1073, %v1067, %v916
        %v1077 = vsel %vm1073, %v1068, %v918
        %v1078 = vsel %vm1073, %v1069, %v920
        %v1079 = vsel %vm1073, %v1070, %v922
        %v1080 = vsel %vm1073, %v1071, %v924
        %v1081 = vsel %vm1073, %v1072, %v926
        %vm1082 = vcmask 130048
        %v1083 = vsel %vm1082, %v1074, %v936
        %v1084 = vsel %vm1082, %v1075, %v938
        %v1085 = vsel %vm1082, %v1076, %v940
        %v1086 = vsel %vm1082, %v1077, %v942
        %v1087 = vsel %vm1082, %v1078, %v944
        %v1088 = vsel %vm1082, %v1079, %v946
        %v1089 = vsel %vm1082, %v1080, %v948
        %v1090 = vsel %vm1082, %v1081, %v950
        %vm1091 = vcmask 162816
        %v1092 = vsel %vm1091, %v1083, %v960
        %v1093 = vsel %vm1091, %v1084, %v962
        %v1094 = vsel %vm1091, %v1085, %v964
        %v1095 = vsel %vm1091, %v1086, %v966
        %v1096 = vsel %vm1091, %v1087, %v968
        %v1097 = vsel %vm1091, %v1088, %v970
        %v1098 = vsel %vm1091, %v1089, %v972
        %v1099 = vsel %vm1091, %v1090, %v974
        %vm1100 = vcmask 195584
        %v1101 = vsel %vm1100, %v1092, %v984
        %v1102 = vsel %vm1100, %v1093, %v986
        %v1103 = vsel %vm1100, %v1094, %v988
        %v1104 = vsel %vm1100, %v1095, %v990
        %v1105 = vsel %vm1100, %v1096, %v992
        %v1106 = vsel %vm1100, %v1097, %v994
        %v1107 = vsel %vm1100, %v1098, %v996
        %v1108 = vsel %vm1100, %v1099, %v998
        %vm1109 = vcmask 228352
        %v1110 = vsel %vm1109, %v1101, %v1008
        %v1111 = vsel %vm1109, %v1102, %v1010
        %v1112 = vsel %vm1109, %v1103, %v1012
        %v1113 = vsel %vm1109, %v1104, %v1014
        %v1114 = vsel %vm1109, %v1105, %v1016
        %v1115 = vsel %vm1109, %v1106, %v1018
        %v1116 = vsel %vm1109, %v1107, %v1020
        %v1117 = vsel %vm1109, %v1108, %v1022
        %vm1118 = vcmask 261120
        %v1119 = vsel %vm1118, %v1110, %v1032
        %v1120 = vsel %vm1118, %v1111, %v1034
        %v1121 = vsel %vm1118, %v1112, %v1036
        %v1122 = vsel %vm1118, %v1113, %v1038
        %v1123 = vsel %vm1118, %v1114, %v1040
        %v1124 = vsel %vm1118, %v1115, %v1042
        %v1125 = vsel %vm1118, %v1116, %v1044
        %v1126 = vsel %vm1118, %v1117, %v1046
        %v1127 = vpack.c.bf16 %v1120, %v1119
        %v1128 = vpack.c.bf16 %v1122, %v1121
        %v1129 = vpack.c.bf16 %v1124, %v1123
        %v1130 = vpack.c.bf16 %v1126, %v1125
        %v1131 = vld [vmem:[%s1] sm:$0xf]
        %v1132 = vld [vmem:[%s1 + $0x4] sm:$0xf]
        %v1133 = vld [vmem:[%s1 + $0x8] sm:$0xf]
        %v1134 = vld [vmem:[%s1 + $0xc] sm:$0xf]
        %v1135 = vld [vmem:[%s1 + $0x10] sm:$0x3]
        %v1136 = vld [vmem:[#allocation2] sm:$0x1]
        %v1138 = vlaneseq
        %v1139 = vshrl.u32 %v1138, 7
        %v1140 = vsub.s32 0, %v1139
        %v1141 = vrot.slane %v1136, %v1140
        %v1148 = vunpack.c.l.b16 %v1131
        %v1149 = vunpack.c.l.b16 %v1132
        %v1150 = vunpack.c.l.b16 %v1133
        %v1151 = vunpack.c.l.b16 %v1134
        %v1152 = vunpack.c.l.b16 %v1135
        %v1153 = vpack.c.b16 %v1149, %v1148
        %v1154 = vpack.c.b16 %v1151, %v1150
        %v1155 = vpack.c.b16 %v1152, %v1152
        %vm1158 = vcmask 293888
        %v1160 = vsel %vm1158, %v1127, 0
        %v1163 = vsel %vm1158, %v1128, 0
        %v1166 = vsel %vm1158, %v1129, 0
        %v1169 = vsel %vm1158, %v1130, 0
        %vm1171 = vcmask 1041408
        %v1173 = vsel %vm1171, %v1155, 0
        %1175 = vmatprep.subr.bf16.mxu0 0
        %1176 = vmatpush1.bf16.msra.mxu0 0
        %1177 = vmatprep.subr.bf16.mxu0 0
        %1178 = vmatpush1.bf16.msra.mxu0 0
        %1179 = vmatprep.subr.bf16.mxu0 0
        %1180 = vmatpush1.bf16.msra.mxu0 0
        %1181 = vmatprep.subr.bf16.mxu0 0
        %1182 = vmatpush1.bf16.msra.mxu0 0
        %1183 = vmatprep.subr.bf16.mxu0 0
        %1184 = vmatpush1.bf16.msra.mxu0 0
        %1185 = vmatprep.subr.bf16.mxu0 0
        %1186 = vmatpush1.bf16.msra.mxu0 %v1173
        %1187 = vmatprep.subr.bf16.mxu0 0
        %1188 = vmatpush1.bf16.msra.mxu0 %v1154
        %1189 = vmatprep.subr.bf16.mxu0 0
        %1190 = vmatpush1.bf16.msra.mxu0 %v1153
        %1191 = vmatprep.subr.bf16.mxu0 0
        %1192 = vmatpush2.bf16.msra.mxu0 0
        %1193 = vmatprep.subr.bf16.mxu0 0
        %1194 = vmatpush2.bf16.msra.mxu0 0
        %1195 = vmatprep.subr.bf16.mxu0 0
        %1196 = vmatpush2.bf16.msra.mxu0 0
        %1197 = vmatprep.subr.bf16.mxu0 0
        %1198 = vmatpush2.bf16.msra.mxu0 0
        %1199 = vmatprep.subr.bf16.mxu0 0
        %1200 = vmatpush2.bf16.msra.mxu0 0
        %1201 = vmatprep.subr.bf16.mxu0 0
        %1202 = vmatpush2.bf16.msra.mxu0 0
        %1203 = vmatprep.subr.bf16.mxu0 0
        %1204 = vmatpush2.bf16.msra.mxu0 0
        %1205 = vmatprep.subr.bf16.mxu0 0
        %1206 = vmatpush2.bf16.msra.mxu0 0
        %1207 = vmatprep.mubr.bf16.mxu0 0
        %1208 = vmatmul.mubr.bf16.gmra.mxu0 %v1160
        %v1209 = vpop.f32.mrf.mxu0
        %v1210 = vadd.f32 %v1141, %v1209
        %v1211 = vpop.f32.mrf.mxu0
        %v1212 = vpop.f32.mrf.mxu0
        %v1213 = vadd.f32 %v1141, %v1212
        %v1214 = vpop.f32.mrf.mxu0
        %1215 = vmatprep.mubr.bf16.mxu0 0
        %1216 = vmatmul.mubr.bf16.gmra.mxu0 %v1163
        %v1217 = vpop.f32.mrf.mxu0
        %v1218 = vadd.f32 %v1141, %v1217
        %v1219 = vpop.f32.mrf.mxu0
        %v1220 = vpop.f32.mrf.mxu0
        %v1221 = vadd.f32 %v1141, %v1220
        %v1222 = vpop.f32.mrf.mxu0
        %1223 = vmatprep.mubr.bf16.mxu0 0
        %1224 = vmatmul.mubr.bf16.gmra.mxu0 %v1166
        %v1225 = vpop.f32.mrf.mxu0
        %v1226 = vadd.f32 %v1141, %v1225
        %v1227 = vpop.f32.mrf.mxu0
        %v1228 = vpop.f32.mrf.mxu0
        %v1229 = vadd.f32 %v1141, %v1228
        %v1230 = vpop.f32.mrf.mxu0
        %1231 = vmatprep.mubr.bf16.mxu0 0
        %1232 = vmatmul.mubr.bf16.gmra.mxu0 %v1169
        %v1233 = vpop.f32.mrf.mxu0
        %v1234 = vadd.f32 %v1141, %v1233
        %v1235 = vpop.f32.mrf.mxu0
        %v1236 = vpop.f32.mrf.mxu0
        %v1237 = vadd.f32 %v1141, %v1236
        %v1238 = vpop.f32.mrf.mxu0
        %1239 = vdwg.mxu0
        %v1240 = vsub.f32 0.0, %v1210
        %v1241 = vsub.f32 0.0, %v1213
        %v1242 = vsub.f32 0.0, %v1218
        %v1243 = vsub.f32 0.0, %v1221
        %v1244 = vsub.f32 0.0, %v1226
        %v1245 = vsub.f32 0.0, %v1229
        %v1246 = vsub.f32 0.0, %v1234
        %v1247 = vsub.f32 0.0, %v1237
        %v1248 = vmul.f32 %v1240, 1.442695
        %v1249 = vpow.pop %v1248
        %v1250 = vmul.f32 %v1241, 1.442695
        %v1251 = vpow.pop %v1250
        %v1252 = vmul.f32 %v1242, 1.442695
        %v1253 = vpow.pop %v1252
        %v1254 = vmul.f32 %v1243, 1.442695
        %v1255 = vpow.pop %v1254
        %v1256 = vmul.f32 %v1244, 1.442695
        %v1257 = vpow.pop %v1256
        %v1258 = vmul.f32 %v1245, 1.442695
        %v1259 = vpow.pop %v1258
        %v1260 = vmul.f32 %v1246, 1.442695
        %v1261 = vpow.pop %v1260
        %v1262 = vmul.f32 %v1247, 1.442695
        %v1263 = vpow.pop %v1262
        %v1264 = vadd.f32 %v1249, 1.0
        %v1265 = vadd.f32 %v1251, 1.0
        %v1266 = vadd.f32 %v1253, 1.0
        %v1267 = vadd.f32 %v1255, 1.0
        %v1268 = vadd.f32 %v1257, 1.0
        %v1269 = vadd.f32 %v1259, 1.0
        %v1270 = vadd.f32 %v1261, 1.0
        %v1271 = vadd.f32 %v1263, 1.0
        %v1272 = vrcp.pop %v1264
        %v1273 = vmul.f32 1.0, %v1272
        %v1274 = vrcp.pop %v1265
        %v1275 = vmul.f32 1.0, %v1274
        %v1276 = vrcp.pop %v1266
        %v1277 = vmul.f32 1.0, %v1276
        %v1278 = vrcp.pop %v1267
        %v1279 = vmul.f32 1.0, %v1278
        %v1280 = vrcp.pop %v1268
        %v1281 = vmul.f32 1.0, %v1280
        %v1282 = vrcp.pop %v1269
        %v1283 = vmul.f32 1.0, %v1282
        %v1284 = vrcp.pop %v1270
        %v1285 = vmul.f32 1.0, %v1284
        %v1286 = vrcp.pop %v1271
        %v1287 = vmul.f32 1.0, %v1286
        %v1288 = vmul.f32 %v1210, %v1273
        %v1289 = vmul.f32 %v1213, %v1275
        %v1290 = vmul.f32 %v1218, %v1277
        %v1291 = vmul.f32 %v1221, %v1279
        %v1292 = vmul.f32 %v1226, %v1281
        %v1293 = vmul.f32 %v1229, %v1283
        %v1294 = vmul.f32 %v1234, %v1285
        %v1295 = vmul.f32 %v1237, %v1287
        %v1296 = vpack.c.bf16 %v1289, %v1288
        %v1297 = vpack.c.bf16 %v1291, %v1290
        %v1298 = vpack.c.bf16 %v1293, %v1292
        %v1299 = vpack.c.bf16 %v1295, %v1294
        %v1300 = vld [vmem:[#allocation5] sm:$0x3]
        %v1301 = vld [vmem:[#allocation7] sm:$0x1]
        %v1303 = vlaneseq
        %v1304 = vshrl.u32 %v1303, 7
        %v1305 = vsub.s32 0, %v1304
        %v1306 = vrot.slane %v1301, %v1305
        %v1309 = vsel %vm1055, %v1296, 0
        %v1312 = vsel %vm1055, %v1297, 0
        %v1315 = vsel %vm1055, %v1298, 0
        %v1318 = vsel %vm1055, %v1299, 0
        %v1321 = vsel %vm1171, %v1300, 0
        %1323 = vmatprep.subr.bf16.mxu0 0
        %1324 = vmatpush1.bf16.msra.mxu0 0
        %1325 = vmatprep.subr.bf16.mxu0 0
        %1326 = vmatpush1.bf16.msra.mxu0 0
        %1327 = vmatprep.subr.bf16.mxu0 0
        %1328 = vmatpush1.bf16.msra.mxu0 0
        %1329 = vmatprep.subr.bf16.mxu0 0
        %1330 = vmatpush1.bf16.msra.mxu0 0
        %1331 = vmatprep.subr.bf16.mxu0 0
        %1332 = vmatpush1.bf16.msra.mxu0 0
        %1333 = vmatprep.subr.bf16.mxu0 0
        %1334 = vmatpush1.bf16.msra.mxu0 0
        %1335 = vmatprep.subr.bf16.mxu0 0
        %1336 = vmatpush1.bf16.msra.mxu0 0
        %1337 = vmatprep.subr.bf16.mxu0 0
        %1338 = vmatpush1.bf16.msra.mxu0 %v1321
        %1339 = vmatprep.subr.bf16.mxu0 0
        %1340 = vmatpush2.bf16.msra.mxu0 0
        %1341 = vmatprep.subr.bf16.mxu0 0
        %1342 = vmatpush2.bf16.msra.mxu0 0
        %1343 = vmatprep.subr.bf16.mxu0 0
        %1344 = vmatpush2.bf16.msra.mxu0 0
        %1345 = vmatprep.subr.bf16.mxu0 0
        %1346 = vmatpush2.bf16.msra.mxu0 0
        %1347 = vmatprep.subr.bf16.mxu0 0
        %1348 = vmatpush2.bf16.msra.mxu0 0
        %1349 = vmatprep.subr.bf16.mxu0 0
        %1350 = vmatpush2.bf16.msra.mxu0 0
        %1351 = vmatprep.subr.bf16.mxu0 0
        %1352 = vmatpush2.bf16.msra.mxu0 0
        %1353 = vmatprep.subr.bf16.mxu0 0
        %1354 = vmatpush2.bf16.msra.mxu0 0
        %1355 = vmatprep.mubr.bf16.mxu0 0
        %1356 = vmatmul.mubr.bf16.gmra.mxu0 %v1309
        %v1357 = vpop.f32.mrf.mxu0
        %v1358 = vadd.f32 %v1306, %v1357
        %v1359 = vpop.f32.mrf.mxu0
        %v1360 = vpop.f32.mrf.mxu0
        %v1361 = vadd.f32 %v1306, %v1360
        %v1362 = vpop.f32.mrf.mxu0
        %1363 = vmatprep.mubr.bf16.mxu0 0
        %1364 = vmatmul.mubr.bf16.gmra.mxu0 %v1312
        %v1365 = vpop.f32.mrf.mxu0
        %v1366 = vadd.f32 %v1306, %v1365
        %v1367 = vpop.f32.mrf.mxu0
        %v1368 = vpop.f32.mrf.mxu0
        %v1369 = vadd.f32 %v1306, %v1368
        %v1370 = vpop.f32.mrf.mxu0
        %1371 = vmatprep.mubr.bf16.mxu0 0
        %1372 = vmatmul.mubr.bf16.gmra.mxu0 %v1315
        %v1373 = vpop.f32.mrf.mxu0
        %v1374 = vadd.f32 %v1306, %v1373
        %v1375 = vpop.f32.mrf.mxu0
        %v1376 = vpop.f32.mrf.mxu0
        %v1377 = vadd.f32 %v1306, %v1376
        %v1378 = vpop.f32.mrf.mxu0
        %1379 = vmatprep.mubr.bf16.mxu0 0
        %1380 = vmatmul.mubr.bf16.gmra.mxu0 %v1318
        %v1381 = vpop.f32.mrf.mxu0
        %v1382 = vadd.f32 %v1306, %v1381
        %v1383 = vpop.f32.mrf.mxu0
        %v1384 = vpop.f32.mrf.mxu0
        %v1385 = vadd.f32 %v1306, %v1384
        %v1386 = vpop.f32.mrf.mxu0
        %1387 = vdwg.mxu0
        %v1388 = vsub.f32 0.0, %v1358
        %v1389 = vsub.f32 0.0, %v1361
        %v1390 = vsub.f32 0.0, %v1366
        %v1391 = vsub.f32 0.0, %v1369
        %v1392 = vsub.f32 0.0, %v1374
        %v1393 = vsub.f32 0.0, %v1377
        %v1394 = vsub.f32 0.0, %v1382
        %v1395 = vsub.f32 0.0, %v1385
        %v1396 = vmul.f32 %v1388, 1.442695
        %v1397 = vpow.pop %v1396
        %v1398 = vmul.f32 %v1389, 1.442695
        %v1399 = vpow.pop %v1398
        %v1400 = vmul.f32 %v1390, 1.442695
        %v1401 = vpow.pop %v1400
        %v1402 = vmul.f32 %v1391, 1.442695
        %v1403 = vpow.pop %v1402
        %v1404 = vmul.f32 %v1392, 1.442695
        %v1405 = vpow.pop %v1404
        %v1406 = vmul.f32 %v1393, 1.442695
        %v1407 = vpow.pop %v1406
        %v1408 = vmul.f32 %v1394, 1.442695
        %v1409 = vpow.pop %v1408
        %v1410 = vmul.f32 %v1395, 1.442695
        %v1411 = vpow.pop %v1410
        %v1412 = vadd.f32 %v1397, 1.0
        %v1413 = vadd.f32 %v1399, 1.0
        %v1414 = vadd.f32 %v1401, 1.0
        %v1415 = vadd.f32 %v1403, 1.0
        %v1416 = vadd.f32 %v1405, 1.0
        %v1417 = vadd.f32 %v1407, 1.0
        %v1418 = vadd.f32 %v1409, 1.0
        %v1419 = vadd.f32 %v1411, 1.0
        %v1420 = vrcp.pop %v1412
        %v1421 = vmul.f32 1.0, %v1420
        %v1422 = vrcp.pop %v1413
        %v1423 = vmul.f32 1.0, %v1422
        %v1424 = vrcp.pop %v1414
        %v1425 = vmul.f32 1.0, %v1424
        %v1426 = vrcp.pop %v1415
        %v1427 = vmul.f32 1.0, %v1426
        %v1428 = vrcp.pop %v1416
        %v1429 = vmul.f32 1.0, %v1428
        %v1430 = vrcp.pop %v1417
        %v1431 = vmul.f32 1.0, %v1430
        %v1432 = vrcp.pop %v1418
        %v1433 = vmul.f32 1.0, %v1432
        %v1434 = vrcp.pop %v1419
        %v1435 = vmul.f32 1.0, %v1434
        %v1436 = vmul.f32 %v1358, %v1421
        %v1437 = vmul.f32 %v1361, %v1423
        %v1438 = vmul.f32 %v1366, %v1425
        %v1439 = vmul.f32 %v1369, %v1427
        %v1440 = vmul.f32 %v1374, %v1429
        %v1441 = vmul.f32 %v1377, %v1431
        %v1442 = vmul.f32 %v1382, %v1433
        %v1443 = vmul.f32 %v1385, %v1435
        %v1444 = vld [vmem:[#allocation8] sm:$0x1]
        %v1446 = vlaneseq
        %v1447 = vshrl.u32 %v1446, 7
        %v1448 = vsub.s32 0, %v1447
        %v1449 = vrot.slane %v1444, %v1448
        %v1451 = vmul.f32 %v1449, 0.0
        %v1452 = vmul.f32 %v1436, %v1449
        %v1453 = vmul.f32 %v1437, %v1449
        %v1454 = vmul.f32 %v1438, %v1449
        %v1455 = vmul.f32 %v1439, %v1449
        %v1456 = vmul.f32 %v1440, %v1449
        %v1457 = vmul.f32 %v1441, %v1449
        %v1458 = vmul.f32 %v1442, %v1449
        %v1459 = vadd.f32 %v1451, 0.0
        %v1460 = vadd.f32 %v1452, 0.0
        %v1461 = vadd.f32 %v1453, 0.0
        %v1462 = vadd.f32 %v1454, 0.0
        %v1463 = vadd.f32 %v1455, 0.0
        %v1464 = vadd.f32 %v1456, 0.0
        %v1465 = vadd.f32 %v1457, 0.0
        %v1466 = vadd.f32 %v1458, 0.0
        %s1467 = scalar_lea.vmem [#allocation8], 1
        %v1468 = vld [vmem:[%s1467] sm:$0x1]
        %v1470 = vlaneseq
        %v1471 = vshrl.u32 %v1470, 7
        %v1472 = vsub.s32 0, %v1471
        %v1473 = vrot.slane %v1468, %v1472
        %v1475 = vmul.f32 %v1473, 0.0
        %v1476 = vmul.f32 %v1436, %v1473
        %v1477 = vmul.f32 %v1437, %v1473
        %v1478 = vmul.f32 %v1438, %v1473
        %v1479 = vmul.f32 %v1439, %v1473
        %v1480 = vmul.f32 %v1440, %v1473
        %v1481 = vmul.f32 %v1441, %v1473
        %v1482 = vmul.f32 %v1442, %v1473
        %v1491 = vrot.slane %v1475, 1
        %v1492 = vrot.slane %v1476, 1
        %v1493 = vrot.slane %v1477, 1
        %v1494 = vrot.slane %v1478, 1
        %v1495 = vrot.slane %v1479, 1
        %v1496 = vrot.slane %v1480, 1
        %v1497 = vrot.slane %v1481, 1
        %v1498 = vrot.slane %v1482, 1
        %v1507 = vadd.f32 %v1459, %v1491
        %v1508 = vadd.f32 %v1459, %v1492
        %v1509 = vadd.f32 %v1460, %v1492
        %v1510 = vadd.f32 %v1459, %v1493
        %v1511 = vadd.f32 %v1461, %v1493
        %v1512 = vadd.f32 %v1459, %v1494
        %v1513 = vadd.f32 %v1462, %v1494
        %v1514 = vadd.f32 %v1459, %v1495
        %v1515 = vadd.f32 %v1463, %v1495
        %v1516 = vadd.f32 %v1459, %v1496
        %v1517 = vadd.f32 %v1464, %v1496
        %v1518 = vadd.f32 %v1459, %v1497
        %v1519 = vadd.f32 %v1465, %v1497
        %v1520 = vadd.f32 %v1459, %v1498
        %v1521 = vadd.f32 %v1466, %v1498
        %s1522 = scalar_lea.vmem [#allocation8], 2
        %v1523 = vld [vmem:[%s1522] sm:$0x1]
        %v1525 = vlaneseq
        %v1526 = vshrl.u32 %v1525, 7
        %v1527 = vsub.s32 0, %v1526
        %v1528 = vrot.slane %v1523, %v1527
        %v1530 = vmul.f32 %v1528, 0.0
        %v1531 = vmul.f32 %v1436, %v1528
        %v1532 = vmul.f32 %v1437, %v1528
        %v1533 = vmul.f32 %v1438, %v1528
        %v1534 = vmul.f32 %v1439, %v1528
        %v1535 = vmul.f32 %v1440, %v1528
        %v1536 = vmul.f32 %v1441, %v1528
        %v1537 = vmul.f32 %v1442, %v1528
        %vm1546 = vcmask 1045504
        %v1547 = vrot.slane %v1530, 2
        %v1548 = vsel %vm1546, %v1547, %v1547
        %v1549 = vrot.slane %v1531, 2
        %v1550 = vsel %vm1546, %v1549, %v1547
        %v1551 = vrot.slane %v1532, 2
        %v1552 = vsel %vm1546, %v1551, %v1547
        %v1553 = vrot.slane %v1533, 2
        %v1554 = vsel %vm1546, %v1553, %v1547
        %v1555 = vrot.slane %v1534, 2
        %v1556 = vsel %vm1546, %v1555, %v1547
        %v1557 = vrot.slane %v1535, 2
        %v1558 = vsel %vm1546, %v1557, %v1547
        %v1559 = vrot.slane %v1536, 2
        %v1560 = vsel %vm1546, %v1559, %v1547
        %v1561 = vrot.slane %v1537, 2
        %v1562 = vsel %vm1546, %v1561, %v1547
        %v1579 = vadd.f32 %v1507, %v1547
        %v1580 = vadd.f32 %v1507, %v1548
        %v1581 = vadd.f32 %v1508, %v1549
        %v1582 = vadd.f32 %v1509, %v1550
        %v1583 = vadd.f32 %v1510, %v1551
        %v1584 = vadd.f32 %v1511, %v1552
        %v1585 = vadd.f32 %v1512, %v1553
        %v1586 = vadd.f32 %v1513, %v1554
        %v1587 = vadd.f32 %v1514, %v1555
        %v1588 = vadd.f32 %v1515, %v1556
        %v1589 = vadd.f32 %v1516, %v1557
        %v1590 = vadd.f32 %v1517, %v1558
        %v1591 = vadd.f32 %v1518, %v1559
        %v1592 = vadd.f32 %v1519, %v1560
        %v1593 = vadd.f32 %v1520, %v1561
        %v1594 = vadd.f32 %v1521, %v1562
        %s1595 = scalar_lea.vmem [#allocation8], 3
        %v1596 = vld [vmem:[%s1595] sm:$0x1]
        %v1598 = vlaneseq
        %v1599 = vshrl.u32 %v1598, 7
        %v1600 = vsub.s32 0, %v1599
        %v1601 = vrot.slane %v1596, %v1600
        %v1603 = vmul.f32 %v1601, 0.0
        %v1604 = vmul.f32 %v1436, %v1601
        %v1605 = vmul.f32 %v1437, %v1601
        %v1606 = vmul.f32 %v1438, %v1601
        %v1607 = vmul.f32 %v1439, %v1601
        %v1608 = vmul.f32 %v1440, %v1601
        %v1609 = vmul.f32 %v1441, %v1601
        %v1610 = vmul.f32 %v1442, %v1601
        %v1611 = vmul.f32 %v1443, %v1601
        %v1612 = vadd.f32 %v1579, %v1603
        %v1613 = vadd.f32 %v1580, %v1604
        %v1614 = vadd.f32 %v1581, %v1603
        %v1615 = vadd.f32 %v1582, %v1605
        %v1616 = vadd.f32 %v1583, %v1603
        %v1617 = vadd.f32 %v1584, %v1606
        %v1618 = vadd.f32 %v1585, %v1603
        %v1619 = vadd.f32 %v1586, %v1607
        %v1620 = vadd.f32 %v1587, %v1603
        %v1621 = vadd.f32 %v1588, %v1608
        %v1622 = vadd.f32 %v1589, %v1603
        %v1623 = vadd.f32 %v1590, %v1609
        %v1624 = vadd.f32 %v1591, %v1603
        %v1625 = vadd.f32 %v1592, %v1610
        %v1626 = vadd.f32 %v1593, %v1603
        %v1627 = vadd.f32 %v1594, %v1611
        %s1628 = scalar_lea.vmem [#allocation8], 4
        %v1629 = vld [vmem:[%s1628] sm:$0x1]
        %v1631 = vlaneseq
        %v1632 = vshrl.u32 %v1631, 7
        %v1633 = vsub.s32 0, %v1632
        %v1634 = vrot.slane %v1629, %v1633
        %v1636 = vmul.f32 %v1436, %v1634
        %v1637 = vmul.f32 %v1437, %v1634
        %v1638 = vmul.f32 %v1438, %v1634
        %v1639 = vmul.f32 %v1439, %v1634
        %v1640 = vmul.f32 %v1440, %v1634
        %v1641 = vmul.f32 %v1441, %v1634
        %v1642 = vmul.f32 %v1442, %v1634
        %v1643 = vmul.f32 %v1443, %v1634
        %v1652 = vrot.slane %v1636, 1
        %v1653 = vrot.slane %v1637, 1
        %v1654 = vrot.slane %v1638, 1
        %v1655 = vrot.slane %v1639, 1
        %v1656 = vrot.slane %v1640, 1
        %v1657 = vrot.slane %v1641, 1
        %v1658 = vrot.slane %v1642, 1
        %v1659 = vrot.slane %v1643, 1
        %v1668 = vadd.f32 %v1612, %v1652
        %v1669 = vadd.f32 %v1613, %v1652
        %v1670 = vadd.f32 %v1614, %v1653
        %v1671 = vadd.f32 %v1615, %v1653
        %v1672 = vadd.f32 %v1616, %v1654
        %v1673 = vadd.f32 %v1617, %v1654
        %v1674 = vadd.f32 %v1618, %v1655
        %v1675 = vadd.f32 %v1619, %v1655
        %v1676 = vadd.f32 %v1620, %v1656
        %v1677 = vadd.f32 %v1621, %v1656
        %v1678 = vadd.f32 %v1622, %v1657
        %v1679 = vadd.f32 %v1623, %v1657
        %v1680 = vadd.f32 %v1624, %v1658
        %v1681 = vadd.f32 %v1625, %v1658
        %v1682 = vadd.f32 %v1626, %v1659
        %v1683 = vadd.f32 %v1627, %v1659
        %s1684 = scalar_lea.vmem [#allocation8], 5
        %v1685 = vld [vmem:[%s1684] sm:$0x1]
        %v1687 = vlaneseq
        %v1688 = vshrl.u32 %v1687, 7
        %v1689 = vsub.s32 0, %v1688
        %v1690 = vrot.slane %v1685, %v1689
        %v1692 = vmul.f32 %v1436, %v1690
        %v1693 = vmul.f32 %v1690, 0.0
        %v1694 = vmul.f32 %v1437, %v1690
        %v1695 = vmul.f32 %v1438, %v1690
        %v1696 = vmul.f32 %v1439, %v1690
        %v1697 = vmul.f32 %v1440, %v1690
        %v1698 = vmul.f32 %v1441, %v1690
        %v1699 = vmul.f32 %v1442, %v1690
        %v1700 = vmul.f32 %v1443, %v1690
        %v1710 = vrot.slane %v1692, 2
        %v1711 = vrot.slane %v1693, 2
        %v1712 = vsel %vm1546, %v1710, %v1711
        %v1713 = vrot.slane %v1694, 2
        %v1714 = vsel %vm1546, %v1713, %v1711
        %v1715 = vrot.slane %v1695, 2
        %v1716 = vsel %vm1546, %v1715, %v1711
        %v1717 = vrot.slane %v1696, 2
        %v1718 = vsel %vm1546, %v1717, %v1711
        %v1719 = vrot.slane %v1697, 2
        %v1720 = vsel %vm1546, %v1719, %v1711
        %v1721 = vrot.slane %v1698, 2
        %v1722 = vsel %vm1546, %v1721, %v1711
        %v1723 = vrot.slane %v1699, 2
        %v1724 = vsel %vm1546, %v1723, %v1711
        %v1725 = vrot.slane %v1700, 2
        %v1726 = vsel %vm1546, %v1725, %v1711
        %v1743 = vadd.f32 %v1668, %v1710
        %v1744 = vadd.f32 %v1669, %v1712
        %v1745 = vadd.f32 %v1670, %v1713
        %v1746 = vadd.f32 %v1671, %v1714
        %v1747 = vadd.f32 %v1672, %v1715
        %v1748 = vadd.f32 %v1673, %v1716
        %v1749 = vadd.f32 %v1674, %v1717
        %v1750 = vadd.f32 %v1675, %v1718
        %v1751 = vadd.f32 %v1676, %v1719
        %v1752 = vadd.f32 %v1677, %v1720
        %v1753 = vadd.f32 %v1678, %v1721
        %v1754 = vadd.f32 %v1679, %v1722
        %v1755 = vadd.f32 %v1680, %v1723
        %v1756 = vadd.f32 %v1681, %v1724
        %v1757 = vadd.f32 %v1682, %v1725
        %v1758 = vadd.f32 %v1683, %v1726
        %s1759 = scalar_lea.vmem [#allocation8], 6
        %v1760 = vld [vmem:[%s1759] sm:$0x1]
        %v1762 = vlaneseq
        %v1763 = vshrl.u32 %v1762, 7
        %v1764 = vsub.s32 0, %v1763
        %v1765 = vrot.slane %v1760, %v1764
        %v1767 = vmul.f32 %v1765, 0.0
        %v1768 = vmul.f32 %v1437, %v1765
        %v1769 = vmul.f32 %v1438, %v1765
        %v1770 = vmul.f32 %v1439, %v1765
        %v1771 = vmul.f32 %v1440, %v1765
        %v1772 = vmul.f32 %v1441, %v1765
        %v1773 = vmul.f32 %v1442, %v1765
        %v1774 = vmul.f32 %v1443, %v1765
        %v1775 = vadd.f32 %v1743, %v1767
        %v1776 = vadd.f32 %v1744, %v1768
        %v1777 = vadd.f32 %v1745, %v1767
        %v1778 = vadd.f32 %v1746, %v1769
        %v1779 = vadd.f32 %v1747, %v1767
        %v1780 = vadd.f32 %v1748, %v1770
        %v1781 = vadd.f32 %v1749, %v1767
        %v1782 = vadd.f32 %v1750, %v1771
        %v1783 = vadd.f32 %v1751, %v1767
        %v1784 = vadd.f32 %v1752, %v1772
        %v1785 = vadd.f32 %v1753, %v1767
        %v1786 = vadd.f32 %v1754, %v1773
        %v1787 = vadd.f32 %v1755, %v1767
        %v1788 = vadd.f32 %v1756, %v1774
        %v1789 = vadd.f32 %v1757, %v1767
        %v1790 = vadd.f32 %v1758, %v1767
        %s1791 = scalar_lea.vmem [#allocation8], 7
        %v1792 = vld [vmem:[%s1791] sm:$0x1]
        %v1794 = vlaneseq
        %v1795 = vshrl.u32 %v1794, 7
        %v1796 = vsub.s32 0, %v1795
        %v1797 = vrot.slane %v1792, %v1796
        %v1799 = vmul.f32 %v1437, %v1797
        %v1800 = vmul.f32 %v1438, %v1797
        %v1801 = vmul.f32 %v1439, %v1797
        %v1802 = vmul.f32 %v1440, %v1797
        %v1803 = vmul.f32 %v1441, %v1797
        %v1804 = vmul.f32 %v1442, %v1797
        %v1805 = vmul.f32 %v1443, %v1797
        %v1806 = vmul.f32 %v1797, 0.0
        %v1815 = vrot.slane %v1799, 1
        %v1816 = vrot.slane %v1800, 1
        %v1817 = vrot.slane %v1801, 1
        %v1818 = vrot.slane %v1802, 1
        %v1819 = vrot.slane %v1803, 1
        %v1820 = vrot.slane %v1804, 1
        %v1821 = vrot.slane %v1805, 1
        %v1822 = vrot.slane %v1806, 1
        %v1831 = vadd.f32 %v1775, %v1815
        %v1832 = vadd.f32 %v1776, %v1815
        %v1833 = vadd.f32 %v1777, %v1816
        %v1834 = vadd.f32 %v1778, %v1816
        %v1835 = vadd.f32 %v1779, %v1817
        %v1836 = vadd.f32 %v1780, %v1817
        %v1837 = vadd.f32 %v1781, %v1818
        %v1838 = vadd.f32 %v1782, %v1818
        %v1839 = vadd.f32 %v1783, %v1819
        %v1840 = vadd.f32 %v1784, %v1819
        %v1841 = vadd.f32 %v1785, %v1820
        %v1842 = vadd.f32 %v1786, %v1820
        %v1843 = vadd.f32 %v1787, %v1821
        %v1844 = vadd.f32 %v1788, %v1821
        %v1845 = vadd.f32 %v1789, %v1822
        %v1846 = vadd.f32 %v1790, %v1822
        %s1847 = scalar_lea.vmem [#allocation8], 8
        %v1848 = vld [vmem:[%s1847] sm:$0x1]
        %v1850 = vlaneseq
        %v1851 = vshrl.u32 %v1850, 7
        %v1852 = vsub.s32 0, %v1851
        %v1853 = vrot.slane %v1848, %v1852
        %v1855 = vmul.f32 %v1437, %v1853
        %v1856 = vmul.f32 %v1853, 0.0
        %v1857 = vmul.f32 %v1438, %v1853
        %v1858 = vmul.f32 %v1439, %v1853
        %v1859 = vmul.f32 %v1440, %v1853
        %v1860 = vmul.f32 %v1441, %v1853
        %v1861 = vmul.f32 %v1442, %v1853
        %v1862 = vmul.f32 %v1443, %v1853
        %v1871 = vrot.slane %v1855, 2
        %v1872 = vrot.slane %v1856, 2
        %v1873 = vsel %vm1546, %v1871, %v1872
        %v1874 = vrot.slane %v1857, 2
        %v1875 = vsel %vm1546, %v1874, %v1872
        %v1876 = vrot.slane %v1858, 2
        %v1877 = vsel %vm1546, %v1876, %v1872
        %v1878 = vrot.slane %v1859, 2
        %v1879 = vsel %vm1546, %v1878, %v1872
        %v1880 = vrot.slane %v1860, 2
        %v1881 = vsel %vm1546, %v1880, %v1872
        %v1882 = vrot.slane %v1861, 2
        %v1883 = vsel %vm1546, %v1882, %v1872
        %v1884 = vrot.slane %v1862, 2
        %v1885 = vsel %vm1546, %v1884, %v1872
        %v1886 = vsel %vm1546, %v1872, %v1872
        %v1903 = vadd.f32 %v1831, %v1871
        %v1904 = vadd.f32 %v1832, %v1873
        %v1905 = vadd.f32 %v1833, %v1874
        %v1906 = vadd.f32 %v1834, %v1875
        %v1907 = vadd.f32 %v1835, %v1876
        %v1908 = vadd.f32 %v1836, %v1877
        %v1909 = vadd.f32 %v1837, %v1878
        %v1910 = vadd.f32 %v1838, %v1879
        %v1911 = vadd.f32 %v1839, %v1880
        %v1912 = vadd.f32 %v1840, %v1881
        %v1913 = vadd.f32 %v1841, %v1882
        %v1914 = vadd.f32 %v1842, %v1883
        %v1915 = vadd.f32 %v1843, %v1884
        %v1916 = vadd.f32 %v1844, %v1885
        %v1917 = vadd.f32 %v1845, %v1872
        %v1918 = vadd.f32 %v1846, %v1886
        %v1935 = vrot.slane %v1903, 7
        %v1936 = vrot.slane %v1904, 7
        %v1937 = vsel %vm816, %v1935, %v1936
        %v1938 = vrot.slane %v1905, 7
        %v1939 = vrot.slane %v1906, 7
        %v1940 = vsel %vm816, %v1938, %v1939
        %v1941 = vrot.slane %v1907, 7
        %v1942 = vrot.slane %v1908, 7
        %v1943 = vsel %vm816, %v1941, %v1942
        %v1944 = vrot.slane %v1909, 7
        %v1945 = vrot.slane %v1910, 7
        %v1946 = vsel %vm816, %v1944, %v1945
        %v1947 = vrot.slane %v1911, 7
        %v1948 = vrot.slane %v1912, 7
        %v1949 = vsel %vm816, %v1947, %v1948
        %v1950 = vrot.slane %v1913, 7
        %v1951 = vrot.slane %v1914, 7
        %v1952 = vsel %vm816, %v1950, %v1951
        %v1953 = vrot.slane %v1915, 7
        %v1954 = vrot.slane %v1916, 7
        %v1955 = vsel %vm816, %v1953, %v1954
        %v1956 = vrot.slane %v1917, 7
        %v1957 = vrot.slane %v1918, 7
        %v1958 = vsel %vm816, %v1956, %v1957
        %v1967 = vadd.f32 %v1436, %v1937
        %v1968 = vadd.f32 %v1437, %v1940
        %v1969 = vadd.f32 %v1438, %v1943
        %v1970 = vadd.f32 %v1439, %v1946
        %v1971 = vadd.f32 %v1440, %v1949
        %v1972 = vadd.f32 %v1441, %v1952
        %v1973 = vadd.f32 %v1442, %v1955
        %v1974 = vadd.f32 %v1443, %v1958
        %v1975 = vld [vmem:[#allocation10] sm:$0x1]
        %v1977 = vlaneseq
        %v1978 = vshrl.u32 %v1977, 7
        %v1979 = vsub.s32 0, %v1978
        %v1980 = vrot.slane %v1975, %v1979
        %v1982 = vadd.f32 %v1967, %v1980
        %v1983 = vadd.f32 %v1968, %v1980
        %v1984 = vadd.f32 %v1969, %v1980
        %v1985 = vadd.f32 %v1970, %v1980
        %v1986 = vadd.f32 %v1971, %v1980
        %v1987 = vadd.f32 %v1972, %v1980
        %v1988 = vadd.f32 %v1973, %v1980
        %v1989 = vadd.f32 %v1974, %v1980
        %v1990 = vmul.f32 %v1982, %v1982
        %v1991 = vmul.f32 %v1983, %v1983
        %v1992 = vmul.f32 %v1984, %v1984
        %v1993 = vmul.f32 %v1985, %v1985
        %v1994 = vmul.f32 %v1986, %v1986
        %v1995 = vmul.f32 %v1987, %v1987
        %v1996 = vmul.f32 %v1988, %v1988
        %v1997 = vmul.f32 %v1989, %v1989
        %v1998 = vsel %vm1082, %v1990, 0.0
        %1999 = vadd.xlane.f32.xlu0 %v1998
        %v2000 = vpop.xlane.xlu0 %1999
        %v2001 = vsel %vm1082, %v1991, 0.0
        %2002 = vadd.xlane.f32.xlu0 %v2001
        %v2003 = vpop.xlane.xlu0 %2002
        %v2004 = vsel %vm1082, %v1992, 0.0
        %2005 = vadd.xlane.f32.xlu0 %v2004
        %v2006 = vpop.xlane.xlu0 %2005
        %v2007 = vsel %vm1082, %v1993, 0.0
        %2008 = vadd.xlane.f32.xlu0 %v2007
        %v2009 = vpop.xlane.xlu0 %2008
        %v2010 = vsel %vm1082, %v1994, 0.0
        %2011 = vadd.xlane.f32.xlu0 %v2010
        %v2012 = vpop.xlane.xlu0 %2011
        %v2013 = vsel %vm1082, %v1995, 0.0
        %2014 = vadd.xlane.f32.xlu0 %v2013
        %v2015 = vpop.xlane.xlu0 %2014
        %v2016 = vsel %vm1082, %v1996, 0.0
        %2017 = vadd.xlane.f32.xlu0 %v2016
        %v2018 = vpop.xlane.xlu0 %2017
        %v2019 = vsel %vm1082, %v1997, 0.0
        %2020 = vadd.xlane.f32.xlu0 %v2019
        %v2021 = vpop.xlane.xlu0 %2020
        %v2022 = vrcp.pop 16.0
        %v2023 = vmul.f32 %v2000, %v2022
        %v2024 = vmul.f32 %v2003, %v2022
        %v2025 = vmul.f32 %v2006, %v2022
        %v2026 = vmul.f32 %v2009, %v2022
        %v2027 = vmul.f32 %v2012, %v2022
        %v2028 = vmul.f32 %v2015, %v2022
        %v2029 = vmul.f32 %v2018, %v2022
        %v2030 = vmul.f32 %v2021, %v2022
        %v2031 = vadd.f32 %v2023, 1e-05
        %v2032 = vadd.f32 %v2024, 1e-05
        %v2033 = vadd.f32 %v2025, 1e-05
        %v2034 = vadd.f32 %v2026, 1e-05
        %v2035 = vadd.f32 %v2027, 1e-05
        %v2036 = vadd.f32 %v2028, 1e-05
        %v2037 = vadd.f32 %v2029, 1e-05
        %v2038 = vadd.f32 %v2030, 1e-05
        %v2039 = vrsqrt.pop %v2031
        %v2040 = vrsqrt.pop %v2032
        %v2041 = vrsqrt.pop %v2033
        %v2042 = vrsqrt.pop %v2034
        %v2043 = vrsqrt.pop %v2035
        %v2044 = vrsqrt.pop %v2036
        %v2045 = vrsqrt.pop %v2037
        %v2046 = vrsqrt.pop %v2038
        %v2047 = vmul.f32 %v1982, %v2039
        %v2048 = vmul.f32 %v1983, %v2040
        %v2049 = vmul.f32 %v1984, %v2041
        %v2050 = vmul.f32 %v1985, %v2042
        %v2051 = vmul.f32 %v1986, %v2043
        %v2052 = vmul.f32 %v1987, %v2044
        %v2053 = vmul.f32 %v1988, %v2045
        %v2054 = vmul.f32 %v1989, %v2046
        %v2055 = vld [vmem:[%s7] sm:$0x1]
        %v2057 = vlaneseq
        %v2058 = vshrl.u32 %v2057, 7
        %v2059 = vsub.s32 0, %v2058
        %v2060 = vrot.slane %v2055, %v2059
        %v2062 = vmul.f32 %v2047, %v2060
        %v2063 = vmul.f32 %v2048, %v2060
        %v2064 = vmul.f32 %v2049, %v2060
        %v2065 = vmul.f32 %v2050, %v2060
        %v2066 = vmul.f32 %v2051, %v2060
        %v2067 = vmul.f32 %v2052, %v2060
        %v2068 = vmul.f32 %v2053, %v2060
        %v2069 = vmul.f32 %v2054, %v2060
        %v2070 = vpack.c.bf16 %v2063, %v2062
        %v2071 = vpack.c.bf16 %v2065, %v2064
        %v2072 = vpack.c.bf16 %v2067, %v2066
        %v2073 = vpack.c.bf16 %v2069, %v2068
        %v2074 = vld [vmem:[#allocation11] sm:$0xf]
        %v2075 = vld [vmem:[#allocation11 + $0x4] sm:$0xf]
        %v2076 = vld [vmem:[#allocation13] sm:$0x1]
        %v2078 = vlaneseq
        %v2079 = vshrl.u32 %v2078, 7
        %v2080 = vsub.s32 0, %v2079
        %v2081 = vrot.slane %v2076, %v2080
        %v2085 = vunpack.c.l.b16 %v2074
        %v2086 = vunpack.c.l.b16 %v2075
        %v2087 = vpack.c.b16 %v2086, %v2085
        %v2090 = vsel %vm1082, %v2070, 0
        %v2093 = vsel %vm1082, %v2071, 0
        %v2096 = vsel %vm1082, %v2072, 0
        %v2099 = vsel %vm1082, %v2073, 0
        %2101 = vmatprep.subr.bf16.mxu0 0
        %2102 = vmatpush1.bf16.msra.mxu0 0
        %2103 = vmatprep.subr.bf16.mxu0 0
        %2104 = vmatpush1.bf16.msra.mxu0 0
        %2105 = vmatprep.subr.bf16.mxu0 0
        %2106 = vmatpush1.bf16.msra.mxu0 0
        %2107 = vmatprep.subr.bf16.mxu0 0
        %2108 = vmatpush1.bf16.msra.mxu0 0
        %2109 = vmatprep.subr.bf16.mxu0 0
        %2110 = vmatpush1.bf16.msra.mxu0 0
        %2111 = vmatprep.subr.bf16.mxu0 0
        %2112 = vmatpush1.bf16.msra.mxu0 0
        %2113 = vmatprep.subr.bf16.mxu0 0
        %2114 = vmatpush1.bf16.msra.mxu0 0
        %2115 = vmatprep.subr.bf16.mxu0 0
        %2116 = vmatpush1.bf16.msra.mxu0 %v2087
        %2117 = vmatprep.subr.bf16.mxu0 0
        %2118 = vmatpush2.bf16.msra.mxu0 0
        %2119 = vmatprep.subr.bf16.mxu0 0
        %2120 = vmatpush2.bf16.msra.mxu0 0
        %2121 = vmatprep.subr.bf16.mxu0 0
        %2122 = vmatpush2.bf16.msra.mxu0 0
        %2123 = vmatprep.subr.bf16.mxu0 0
        %2124 = vmatpush2.bf16.msra.mxu0 0
        %2125 = vmatprep.subr.bf16.mxu0 0
        %2126 = vmatpush2.bf16.msra.mxu0 0
        %2127 = vmatprep.subr.bf16.mxu0 0
        %2128 = vmatpush2.bf16.msra.mxu0 0
        %2129 = vmatprep.subr.bf16.mxu0 0
        %2130 = vmatpush2.bf16.msra.mxu0 0
        %2131 = vmatprep.subr.bf16.mxu0 0
        %2132 = vmatpush2.bf16.msra.mxu0 0
        %2133 = vmatprep.mubr.bf16.mxu0 0
        %2134 = vmatmul.mubr.bf16.gmra.mxu0 %v2090
        %v2135 = vpop.f32.mrf.mxu0
        %v2136 = vadd.f32 %v2081, %v2135
        %v2137 = vpop.f32.mrf.mxu0
        %v2138 = vpop.f32.mrf.mxu0
        %v2139 = vadd.f32 %v2081, %v2138
        %v2140 = vpop.f32.mrf.mxu0
        %2141 = vmatprep.mubr.bf16.mxu0 0
        %2142 = vmatmul.mubr.bf16.gmra.mxu0 %v2093
        %v2143 = vpop.f32.mrf.mxu0
        %v2144 = vadd.f32 %v2081, %v2143
        %v2145 = vpop.f32.mrf.mxu0
        %v2146 = vpop.f32.mrf.mxu0
        %v2147 = vadd.f32 %v2081, %v2146
        %v2148 = vpop.f32.mrf.mxu0
        %2149 = vmatprep.mubr.bf16.mxu0 0
        %2150 = vmatmul.mubr.bf16.gmra.mxu0 %v2096
        %v2151 = vpop.f32.mrf.mxu0
        %v2152 = vadd.f32 %v2081, %v2151
        %v2153 = vpop.f32.mrf.mxu0
        %v2154 = vpop.f32.mrf.mxu0
        %v2155 = vadd.f32 %v2081, %v2154
        %v2156 = vpop.f32.mrf.mxu0
        %2157 = vmatprep.mubr.bf16.mxu0 0
        %2158 = vmatmul.mubr.bf16.gmra.mxu0 %v2099
        %v2159 = vpop.f32.mrf.mxu0
        %v2160 = vadd.f32 %v2081, %v2159
        %v2161 = vpop.f32.mrf.mxu0
        %v2162 = vpop.f32.mrf.mxu0
        %v2163 = vadd.f32 %v2081, %v2162
        %v2164 = vpop.f32.mrf.mxu0
        %2165 = vdwg.mxu0
        %2174 = vrot.lane.b32.xlu0 %v2136, 1
        %v2175 = vpop.permute.xlu0 %2174
        %2176 = vrot.lane.b32.xlu0 %v2139, 1
        %v2177 = vpop.permute.xlu0 %2176
        %2178 = vrot.lane.b32.xlu0 %v2144, 1
        %v2179 = vpop.permute.xlu0 %2178
        %2180 = vrot.lane.b32.xlu0 %v2147, 1
        %v2181 = vpop.permute.xlu0 %2180
        %2182 = vrot.lane.b32.xlu0 %v2152, 1
        %v2183 = vpop.permute.xlu0 %2182
        %2184 = vrot.lane.b32.xlu0 %v2155, 1
        %v2185 = vpop.permute.xlu0 %2184
        %2186 = vrot.lane.b32.xlu0 %v2160, 1
        %v2187 = vpop.permute.xlu0 %2186
        %2188 = vrot.lane.b32.xlu0 %v2163, 1
        %v2189 = vpop.permute.xlu0 %2188
        %vm2198 = vcmask 7168
        %v2199 = vsel %vm2198, 0.0, %v2175
        %v2200 = vsel %vm2198, 0.0, %v2177
        %v2201 = vsel %vm2198, 0.0, %v2179
        %v2202 = vsel %vm2198, 0.0, %v2181
        %v2203 = vsel %vm2198, 0.0, %v2183
        %v2204 = vsel %vm2198, 0.0, %v2185
        %v2205 = vsel %vm2198, 0.0, %v2187
        %v2206 = vsel %vm2198, 0.0, %v2189
        %vm2207 = vcmask 269312
        %v2208 = vsel %vm2207, %v2199, 0.0
        %v2209 = vsel %vm2207, %v2200, 0.0
        %v2210 = vsel %vm2207, %v2201, 0.0
        %v2211 = vsel %vm2207, %v2202, 0.0
        %v2212 = vsel %vm2207, %v2203, 0.0
        %v2213 = vsel %vm2207, %v2204, 0.0
        %v2214 = vsel %vm2207, %v2205, 0.0
        %v2215 = vsel %vm2207, %v2206, 0.0
        %2224 = vrot.lane.b32.xlu0 %v2208, 127
        %v2225 = vpop.permute.xlu0 %2224
        %2226 = vrot.lane.b32.xlu0 %v2209, 127
        %v2227 = vpop.permute.xlu0 %2226
        %2228 = vrot.lane.b32.xlu0 %v2210, 127
        %v2229 = vpop.permute.xlu0 %2228
        %2230 = vrot.lane.b32.xlu0 %v2211, 127
        %v2231 = vpop.permute.xlu0 %2230
        %2232 = vrot.lane.b32.xlu0 %v2212, 127
        %v2233 = vpop.permute.xlu0 %2232
        %2234 = vrot.lane.b32.xlu0 %v2213, 127
        %v2235 = vpop.permute.xlu0 %2234
        %2236 = vrot.lane.b32.xlu0 %v2214, 127
        %v2237 = vpop.permute.xlu0 %2236
        %2238 = vrot.lane.b32.xlu0 %v2215, 127
        %v2239 = vpop.permute.xlu0 %2238
        %2248 = vrot.lane.b32.xlu0 %v2208, 126
        %v2249 = vpop.permute.xlu0 %2248
        %2250 = vrot.lane.b32.xlu0 %v2209, 126
        %v2251 = vpop.permute.xlu0 %2250
        %2252 = vrot.lane.b32.xlu0 %v2210, 126
        %v2253 = vpop.permute.xlu0 %2252
        %2254 = vrot.lane.b32.xlu0 %v2211, 126
        %v2255 = vpop.permute.xlu0 %2254
        %2256 = vrot.lane.b32.xlu0 %v2212, 126
        %v2257 = vpop.permute.xlu0 %2256
        %2258 = vrot.lane.b32.xlu0 %v2213, 126
        %v2259 = vpop.permute.xlu0 %2258
        %2260 = vrot.lane.b32.xlu0 %v2214, 126
        %v2261 = vpop.permute.xlu0 %2260
        %2262 = vrot.lane.b32.xlu0 %v2215, 126
        %v2263 = vpop.permute.xlu0 %2262
        %v2272 = vpack.c.bf16 %v2209, %v2208
        %v2273 = vpack.c.bf16 %v2211, %v2210
        %v2274 = vpack.c.bf16 %v2213, %v2212
        %v2275 = vpack.c.bf16 %v2215, %v2214
        %v2276 = vpack.c.bf16 %v2227, %v2225
        %v2277 = vpack.c.bf16 %v2231, %v2229
        %v2278 = vpack.c.bf16 %v2235, %v2233
        %v2279 = vpack.c.bf16 %v2239, %v2237
        %v2280 = vpack.c.bf16 %v2251, %v2249
        %v2281 = vpack.c.bf16 %v2255, %v2253
        %v2282 = vpack.c.bf16 %v2259, %v2257
        %v2283 = vpack.c.bf16 %v2263, %v2261
        %v2284 = vld [vmem:[%s10] sm:$0xff]
        %v2285 = vld [vmem:[%s10 + $0x8] sm:$0xff]
        %v2286 = vld [vmem:[%s10 + $0x10] sm:$0xff]
        %v2287 = vld [vmem:[%s10 + $0x18] sm:$0xff]
        %v2288 = vld [vmem:[%s10 + $0x20] sm:$0xff]
        %v2289 = vld [vmem:[%s10 + $0x28] sm:$0xff]
        %v2290 = vld [vmem:[%s10 + $0x30] sm:$0xff]
        %v2291 = vld [vmem:[%s10 + $0x38] sm:$0xff]
        %v2292 = vld [vmem:[%s11] sm:$0xff]
        %v2293 = vld [vmem:[%s11 + $0x8] sm:$0xff]
        %v2294 = vld [vmem:[%s11 + $0x10] sm:$0xff]
        %v2295 = vld [vmem:[%s11 + $0x18] sm:$0xff]
        %v2296 = vld [vmem:[%s11 + $0x20] sm:$0xff]
        %v2297 = vld [vmem:[%s11 + $0x28] sm:$0xff]
        %v2298 = vld [vmem:[%s11 + $0x30] sm:$0xff]
        %v2299 = vld [vmem:[%s11 + $0x38] sm:$0xff]
        %v2308 = vunpack.c.l.b16 %v2284
        %v2309 = vunpack.c.h.b16 %v2284
        %v2310 = vunpack.c.l.b16 %v2285
        %v2311 = vunpack.c.h.b16 %v2285
        %v2312 = vunpack.c.l.b16 %v2286
        %v2313 = vunpack.c.h.b16 %v2286
        %v2314 = vunpack.c.l.b16 %v2287
        %v2315 = vunpack.c.h.b16 %v2287
        %v2316 = vunpack.c.l.b16 %v2288
        %v2317 = vunpack.c.h.b16 %v2288
        %v2318 = vunpack.c.l.b16 %v2289
        %v2319 = vunpack.c.h.b16 %v2289
        %v2320 = vunpack.c.l.b16 %v2290
        %v2321 = vunpack.c.h.b16 %v2290
        %v2322 = vunpack.c.l.b16 %v2291
        %v2323 = vunpack.c.h.b16 %v2291
        %v2324 = vpack.c.b16 %v2310, %v2308
        %v2325 = vpack.c.b16 %v2311, %v2309
        %v2326 = vpack.c.b16 %v2314, %v2312
        %v2327 = vpack.c.b16 %v2315, %v2313
        %v2328 = vpack.c.b16 %v2318, %v2316
        %v2329 = vpack.c.b16 %v2319, %v2317
        %v2330 = vpack.c.b16 %v2322, %v2320
        %v2331 = vpack.c.b16 %v2323, %v2321
        %vm2336 = vcmask 523264
        %v2338 = vsel %vm2336, %v2325, 0
        %v2341 = vsel %vm2336, %v2327, 0
        %v2344 = vsel %vm2336, %v2329, 0
        %v2347 = vsel %vm2336, %v2331, 0
        %2349 = vmatprep.subr.bf16.mxu0 0
        %2350 = vmatpush1.bf16.msra.mxu0 %v2279
        %2351 = vmatprep.subr.bf16.mxu0 0
        %2352 = vmatpush1.bf16.msra.mxu0 %v2278
        %2353 = vmatprep.subr.bf16.mxu0 0
        %2354 = vmatpush1.bf16.msra.mxu0 %v2277
        %2355 = vmatprep.subr.bf16.mxu0 0
        %2356 = vmatpush1.bf16.msra.mxu0 %v2276
        %2357 = vmatprep.subr.bf16.mxu0 0
        %2358 = vmatpush1.bf16.msra.mxu0 %v2275
        %2359 = vmatprep.subr.bf16.mxu0 0
        %2360 = vmatpush1.bf16.msra.mxu0 %v2274
        %2361 = vmatprep.subr.bf16.mxu0 0
        %2362 = vmatpush1.bf16.msra.mxu0 %v2273
        %2363 = vmatprep.subr.bf16.mxu0 0
        %2364 = vmatpush1.bf16.msra.mxu0 %v2272
        %2365 = vmatprep.subr.bf16.mxu0 0
        %2366 = vmatpush2.bf16.msra.mxu0 0
        %2367 = vmatprep.subr.bf16.mxu0 0
        %2368 = vmatpush2.bf16.msra.mxu0 0
        %2369 = vmatprep.subr.bf16.mxu0 0
        %2370 = vmatpush2.bf16.msra.mxu0 0
        %2371 = vmatprep.subr.bf16.mxu0 0
        %2372 = vmatpush2.bf16.msra.mxu0 0
        %2373 = vmatprep.subr.bf16.mxu0 0
        %2374 = vmatpush2.bf16.msra.mxu0 %v2283
        %2375 = vmatprep.subr.bf16.mxu0 0
        %2376 = vmatpush2.bf16.msra.mxu0 %v2282
        %2377 = vmatprep.subr.bf16.mxu0 0
        %2378 = vmatpush2.bf16.msra.mxu0 %v2281
        %2379 = vmatprep.subr.bf16.mxu0 0
        %2380 = vmatpush2.bf16.msra.mxu0 %v2280
        %2381 = vmatprep.mubr.bf16.mxu0 %v2338
        %2382 = vmatmul.mubr.bf16.gmra.mxu0 %v2324
        %v2383 = vpop.f32.mrf.mxu0
        %v2384 = vadd.f32 %v2292, %v2383
        %v2385 = vpop.f32.mrf.mxu0
        %v2386 = vpop.f32.mrf.mxu0
        %v2387 = vadd.f32 %v2293, %v2386
        %v2388 = vpop.f32.mrf.mxu0
        %2389 = vmatprep.mubr.bf16.mxu0 %v2341
        %2390 = vmatmul.mubr.bf16.gmra.mxu0 %v2326
        %v2391 = vpop.f32.mrf.mxu0
        %v2392 = vadd.f32 %v2294, %v2391
        %v2393 = vpop.f32.mrf.mxu0
        %v2394 = vpop.f32.mrf.mxu0
        %v2395 = vadd.f32 %v2295, %v2394
        %v2396 = vpop.f32.mrf.mxu0
        %2397 = vmatprep.mubr.bf16.mxu0 %v2344
        %2398 = vmatmul.mubr.bf16.gmra.mxu0 %v2328
        %v2399 = vpop.f32.mrf.mxu0
        %v2400 = vadd.f32 %v2296, %v2399
        %v2401 = vpop.f32.mrf.mxu0
        %v2402 = vpop.f32.mrf.mxu0
        %v2403 = vadd.f32 %v2297, %v2402
        %v2404 = vpop.f32.mrf.mxu0
        %2405 = vmatprep.mubr.bf16.mxu0 %v2347
        %2406 = vmatmul.mubr.bf16.gmra.mxu0 %v2330
        %v2407 = vpop.f32.mrf.mxu0
        %v2408 = vadd.f32 %v2298, %v2407
        %v2409 = vpop.f32.mrf.mxu0
        %v2410 = vpop.f32.mrf.mxu0
        %v2411 = vadd.f32 %v2299, %v2410
        %v2412 = vpop.f32.mrf.mxu0
        %2413 = vdwg.mxu0
        %v2414 = vsub.f32 0.0, %v2384
        %v2415 = vsub.f32 0.0, %v2387
        %v2416 = vsub.f32 0.0, %v2392
        %v2417 = vsub.f32 0.0, %v2395
        %v2418 = vsub.f32 0.0, %v2400
        %v2419 = vsub.f32 0.0, %v2403
        %v2420 = vsub.f32 0.0, %v2408
        %v2421 = vsub.f32 0.0, %v2411
        %v2422 = vmul.f32 %v2414, 1.442695
        %v2423 = vpow.pop %v2422
        %v2424 = vmul.f32 %v2415, 1.442695
        %v2425 = vpow.pop %v2424
        %v2426 = vmul.f32 %v2416, 1.442695
        %v2427 = vpow.pop %v2426
        %v2428 = vmul.f32 %v2417, 1.442695
        %v2429 = vpow.pop %v2428
        %v2430 = vmul.f32 %v2418, 1.442695
        %v2431 = vpow.pop %v2430
        %v2432 = vmul.f32 %v2419, 1.442695
        %v2433 = vpow.pop %v2432
        %v2434 = vmul.f32 %v2420, 1.442695
        %v2435 = vpow.pop %v2434
        %v2436 = vmul.f32 %v2421, 1.442695
        %v2437 = vpow.pop %v2436
        %v2438 = vadd.f32 %v2423, 1.0
        %v2439 = vadd.f32 %v2425, 1.0
        %v2440 = vadd.f32 %v2427, 1.0
        %v2441 = vadd.f32 %v2429, 1.0
        %v2442 = vadd.f32 %v2431, 1.0
        %v2443 = vadd.f32 %v2433, 1.0
        %v2444 = vadd.f32 %v2435, 1.0
        %v2445 = vadd.f32 %v2437, 1.0
        %v2446 = vrcp.pop %v2438
        %v2447 = vmul.f32 1.0, %v2446
        %v2448 = vrcp.pop %v2439
        %v2449 = vmul.f32 1.0, %v2448
        %v2450 = vrcp.pop %v2440
        %v2451 = vmul.f32 1.0, %v2450
        %v2452 = vrcp.pop %v2441
        %v2453 = vmul.f32 1.0, %v2452
        %v2454 = vrcp.pop %v2442
        %v2455 = vmul.f32 1.0, %v2454
        %v2456 = vrcp.pop %v2443
        %v2457 = vmul.f32 1.0, %v2456
        %v2458 = vrcp.pop %v2444
        %v2459 = vmul.f32 1.0, %v2458
        %v2460 = vrcp.pop %v2445
        %v2461 = vmul.f32 1.0, %v2460
        %v2462 = vmul.f32 %v2384, %v2447
        %v2463 = vmul.f32 %v2387, %v2449
        %v2464 = vmul.f32 %v2392, %v2451
        %v2465 = vmul.f32 %v2395, %v2453
        %v2466 = vmul.f32 %v2400, %v2455
        %v2467 = vmul.f32 %v2403, %v2457
        %v2468 = vmul.f32 %v2408, %v2459
        %v2469 = vmul.f32 %v2411, %v2461
        %2478 = vrot.lane.b32.xlu0 %v2462, 120
        %v2479 = vpop.permute.xlu0 %2478
        %2480 = vrot.lane.b32.xlu0 %v2463, 120
        %v2481 = vpop.permute.xlu0 %2480
        %2482 = vrot.lane.b32.xlu0 %v2464, 120
        %v2483 = vpop.permute.xlu0 %2482
        %2484 = vrot.lane.b32.xlu0 %v2465, 120
        %v2485 = vpop.permute.xlu0 %2484
        %2486 = vrot.lane.b32.xlu0 %v2466, 120
        %v2487 = vpop.permute.xlu0 %2486
        %2488 = vrot.lane.b32.xlu0 %v2467, 120
        %v2489 = vpop.permute.xlu0 %2488
        %2490 = vrot.lane.b32.xlu0 %v2468, 120
        %v2491 = vpop.permute.xlu0 %2490
        %2492 = vrot.lane.b32.xlu0 %v2469, 120
        %v2493 = vpop.permute.xlu0 %2492
        %2502 = vrot.lane.b32.xlu0 %v2462, 112
        %v2503 = vpop.permute.xlu0 %2502
        %2504 = vrot.lane.b32.xlu0 %v2463, 112
        %v2505 = vpop.permute.xlu0 %2504
        %2506 = vrot.lane.b32.xlu0 %v2464, 112
        %v2507 = vpop.permute.xlu0 %2506
        %2508 = vrot.lane.b32.xlu0 %v2465, 112
        %v2509 = vpop.permute.xlu0 %2508
        %2510 = vrot.lane.b32.xlu0 %v2466, 112
        %v2511 = vpop.permute.xlu0 %2510
        %2512 = vrot.lane.b32.xlu0 %v2467, 112
        %v2513 = vpop.permute.xlu0 %2512
        %2514 = vrot.lane.b32.xlu0 %v2468, 112
        %v2515 = vpop.permute.xlu0 %2514
        %2516 = vrot.lane.b32.xlu0 %v2469, 112
        %v2517 = vpop.permute.xlu0 %2516
        %2526 = vrot.lane.b32.xlu0 %v2462, 104
        %v2527 = vpop.permute.xlu0 %2526
        %2528 = vrot.lane.b32.xlu0 %v2463, 104
        %v2529 = vpop.permute.xlu0 %2528
        %2530 = vrot.lane.b32.xlu0 %v2464, 104
        %v2531 = vpop.permute.xlu0 %2530
        %2532 = vrot.lane.b32.xlu0 %v2465, 104
        %v2533 = vpop.permute.xlu0 %2532
        %2534 = vrot.lane.b32.xlu0 %v2466, 104
        %v2535 = vpop.permute.xlu0 %2534
        %2536 = vrot.lane.b32.xlu0 %v2467, 104
        %v2537 = vpop.permute.xlu0 %2536
        %2538 = vrot.lane.b32.xlu0 %v2468, 104
        %v2539 = vpop.permute.xlu0 %2538
        %2540 = vrot.lane.b32.xlu0 %v2469, 104
        %v2541 = vpop.permute.xlu0 %2540
        %v2550 = vpack.c.bf16 %v2463, %v2462
        %v2551 = vpack.c.bf16 %v2465, %v2464
        %v2552 = vpack.c.bf16 %v2467, %v2466
        %v2553 = vpack.c.bf16 %v2469, %v2468
        %v2554 = vpack.c.bf16 %v2481, %v2479
        %v2555 = vpack.c.bf16 %v2485, %v2483
        %v2556 = vpack.c.bf16 %v2489, %v2487
        %v2557 = vpack.c.bf16 %v2493, %v2491
        %v2558 = vpack.c.bf16 %v2505, %v2503
        %v2559 = vpack.c.bf16 %v2509, %v2507
        %v2560 = vpack.c.bf16 %v2513, %v2511
        %v2561 = vpack.c.bf16 %v2517, %v2515
        %v2562 = vpack.c.bf16 %v2529, %v2527
        %v2563 = vpack.c.bf16 %v2533, %v2531
        %v2564 = vpack.c.bf16 %v2537, %v2535
        %v2565 = vpack.c.bf16 %v2541, %v2539
        %v2566 = vld [vmem:[#allocation14] sm:$0xf]
        %v2567 = vld [vmem:[#allocation16] sm:$0x1]
        %v2569 = vlaneseq
        %v2570 = vshrl.u32 %v2569, 7
        %v2571 = vsub.s32 0, %v2570
        %v2572 = vrot.slane %v2567, %v2571
        %v2575 = vsel %vm1064, %v2550, 0
        %v2578 = vsel %vm1064, %v2551, 0
        %v2581 = vsel %vm1064, %v2552, 0
        %v2584 = vsel %vm1064, %v2553, 0
        %v2587 = vsel %vm1064, %v2554, 0
        %v2590 = vsel %vm1064, %v2555, 0
        %v2593 = vsel %vm1064, %v2556, 0
        %v2596 = vsel %vm1064, %v2557, 0
        %v2599 = vsel %vm1064, %v2558, 0
        %v2602 = vsel %vm1064, %v2559, 0
        %v2605 = vsel %vm1064, %v2560, 0
        %v2608 = vsel %vm1064, %v2561, 0
        %v2611 = vsel %vm1064, %v2562, 0
        %v2614 = vsel %vm1064, %v2563, 0
        %v2617 = vsel %vm1064, %v2564, 0
        %v2620 = vsel %vm1064, %v2565, 0
        %vm2622 = vcmask 1043456
        %v2624 = vsel %vm2622, %v2566, 0
        %2626 = vmatprep.subr.bf16.mxu0 0
        %2627 = vmatpush1.bf16.msra.mxu0 0
        %2628 = vmatprep.subr.bf16.mxu0 0
        %2629 = vmatpush1.bf16.msra.mxu0 0
        %2630 = vmatprep.subr.bf16.mxu0 0
        %2631 = vmatpush1.bf16.msra.mxu0 0
        %2632 = vmatprep.subr.bf16.mxu0 0
        %2633 = vmatpush1.bf16.msra.mxu0 0
        %2634 = vmatprep.subr.bf16.mxu0 0
        %2635 = vmatpush1.bf16.msra.mxu0 0
        %2636 = vmatprep.subr.bf16.mxu0 0
        %2637 = vmatpush1.bf16.msra.mxu0 0
        %2638 = vmatprep.subr.bf16.mxu0 0
        %2639 = vmatpush1.bf16.msra.mxu0 0
        %2640 = vmatprep.subr.bf16.mxu0 0
        %2641 = vmatpush1.bf16.msra.mxu0 %v2624
        %2642 = vmatprep.subr.bf16.mxu0 0
        %2643 = vmatpush2.bf16.msra.mxu0 0
        %2644 = vmatprep.subr.bf16.mxu0 0
        %2645 = vmatpush2.bf16.msra.mxu0 0
        %2646 = vmatprep.subr.bf16.mxu0 0
        %2647 = vmatpush2.bf16.msra.mxu0 0
        %2648 = vmatprep.subr.bf16.mxu0 0
        %2649 = vmatpush2.bf16.msra.mxu0 0
        %2650 = vmatprep.subr.bf16.mxu0 0
        %2651 = vmatpush2.bf16.msra.mxu0 0
        %2652 = vmatprep.subr.bf16.mxu0 0
        %2653 = vmatpush2.bf16.msra.mxu0 0
        %2654 = vmatprep.subr.bf16.mxu0 0
        %2655 = vmatpush2.bf16.msra.mxu0 0
        %2656 = vmatprep.subr.bf16.mxu0 0
        %2657 = vmatpush2.bf16.msra.mxu0 0
        %2658 = vmatprep.mubr.bf16.mxu0 0
        %2659 = vmatmul.mubr.bf16.gmra.mxu0 %v2575
        %v2660 = vpop.f32.mrf.mxu0
        %v2661 = vadd.f32 %v2572, %v2660
        %v2662 = vpop.f32.mrf.mxu0
        %v2663 = vpop.f32.mrf.mxu0
        %v2664 = vadd.f32 %v2572, %v2663
        %v2665 = vpop.f32.mrf.mxu0
        %2666 = vmatprep.mubr.bf16.mxu0 0
        %2667 = vmatmul.mubr.bf16.gmra.mxu0 %v2578
        %v2668 = vpop.f32.mrf.mxu0
        %v2669 = vadd.f32 %v2572, %v2668
        %v2670 = vpop.f32.mrf.mxu0
        %v2671 = vpop.f32.mrf.mxu0
        %v2672 = vadd.f32 %v2572, %v2671
        %v2673 = vpop.f32.mrf.mxu0
        %2674 = vmatprep.mubr.bf16.mxu0 0
        %2675 = vmatmul.mubr.bf16.gmra.mxu0 %v2581
        %v2676 = vpop.f32.mrf.mxu0
        %v2677 = vadd.f32 %v2572, %v2676
        %v2678 = vpop.f32.mrf.mxu0
        %v2679 = vpop.f32.mrf.mxu0
        %v2680 = vadd.f32 %v2572, %v2679
        %v2681 = vpop.f32.mrf.mxu0
        %2682 = vmatprep.mubr.bf16.mxu0 0
        %2683 = vmatmul.mubr.bf16.gmra.mxu0 %v2584
        %v2684 = vpop.f32.mrf.mxu0
        %v2685 = vadd.f32 %v2572, %v2684
        %v2686 = vpop.f32.mrf.mxu0
        %v2687 = vpop.f32.mrf.mxu0
        %v2688 = vadd.f32 %v2572, %v2687
        %v2689 = vpop.f32.mrf.mxu0
        %2690 = vmatprep.mubr.bf16.mxu0 0
        %2691 = vmatmul.mubr.bf16.gmra.mxu0 %v2587
        %v2692 = vpop.f32.mrf.mxu0
        %v2693 = vadd.f32 %v2572, %v2692
        %v2694 = vpop.f32.mrf.mxu0
        %v2695 = vpop.f32.mrf.mxu0
        %v2696 = vadd.f32 %v2572, %v2695
        %v2697 = vpop.f32.mrf.mxu0
        %2698 = vmatprep.mubr.bf16.mxu0 0
        %2699 = vmatmul.mubr.bf16.gmra.mxu0 %v2590
        %v2700 = vpop.f32.mrf.mxu0
        %v2701 = vadd.f32 %v2572, %v2700
        %v2702 = vpop.f32.mrf.mxu0
        %v2703 = vpop.f32.mrf.mxu0
        %v2704 = vadd.f32 %v2572, %v2703
        %v2705 = vpop.f32.mrf.mxu0
        %2706 = vmatprep.mubr.bf16.mxu0 0
        %2707 = vmatmul.mubr.bf16.gmra.mxu0 %v2593
        %v2708 = vpop.f32.mrf.mxu0
        %v2709 = vadd.f32 %v2572, %v2708
        %v2710 = vpop.f32.mrf.mxu0
        %v2711 = vpop.f32.mrf.mxu0
        %v2712 = vadd.f32 %v2572, %v2711
        %v2713 = vpop.f32.mrf.mxu0
        %2714 = vmatprep.mubr.bf16.mxu0 0
        %2715 = vmatmul.mubr.bf16.gmra.mxu0 %v2596
        %v2716 = vpop.f32.mrf.mxu0
        %v2717 = vadd.f32 %v2572, %v2716
        %v2718 = vpop.f32.mrf.mxu0
        %v2719 = vpop.f32.mrf.mxu0
        %v2720 = vadd.f32 %v2572, %v2719
        %v2721 = vpop.f32.mrf.mxu0
        %2722 = vmatprep.mubr.bf16.mxu0 0
        %2723 = vmatmul.mubr.bf16.gmra.mxu0 %v2599
        %v2724 = vpop.f32.mrf.mxu0
        %v2725 = vadd.f32 %v2572, %v2724
        %v2726 = vpop.f32.mrf.mxu0
        %v2727 = vpop.f32.mrf.mxu0
        %v2728 = vadd.f32 %v2572, %v2727
        %v2729 = vpop.f32.mrf.mxu0
        %2730 = vmatprep.mubr.bf16.mxu0 0
        %2731 = vmatmul.mubr.bf16.gmra.mxu0 %v2602
        %v2732 = vpop.f32.mrf.mxu0
        %v2733 = vadd.f32 %v2572, %v2732
        %v2734 = vpop.f32.mrf.mxu0
        %v2735 = vpop.f32.mrf.mxu0
        %v2736 = vadd.f32 %v2572, %v2735
        %v2737 = vpop.f32.mrf.mxu0
        %2738 = vmatprep.mubr.bf16.mxu0 0
        %2739 = vmatmul.mubr.bf16.gmra.mxu0 %v2605
        %v2740 = vpop.f32.mrf.mxu0
        %v2741 = vadd.f32 %v2572, %v2740
        %v2742 = vpop.f32.mrf.mxu0
        %v2743 = vpop.f32.mrf.mxu0
        %v2744 = vadd.f32 %v2572, %v2743
        %v2745 = vpop.f32.mrf.mxu0
        %2746 = vmatprep.mubr.bf16.mxu0 0
        %2747 = vmatmul.mubr.bf16.gmra.mxu0 %v2608
        %v2748 = vpop.f32.mrf.mxu0
        %v2749 = vadd.f32 %v2572, %v2748
        %v2750 = vpop.f32.mrf.mxu0
        %v2751 = vpop.f32.mrf.mxu0
        %v2752 = vadd.f32 %v2572, %v2751
        %v2753 = vpop.f32.mrf.mxu0
        %2754 = vmatprep.mubr.bf16.mxu0 0
        %2755 = vmatmul.mubr.bf16.gmra.mxu0 %v2611
        %v2756 = vpop.f32.mrf.mxu0
        %v2757 = vadd.f32 %v2572, %v2756
        %v2758 = vpop.f32.mrf.mxu0
        %v2759 = vpop.f32.mrf.mxu0
        %v2760 = vadd.f32 %v2572, %v2759
        %v2761 = vpop.f32.mrf.mxu0
        %2762 = vmatprep.mubr.bf16.mxu0 0
        %2763 = vmatmul.mubr.bf16.gmra.mxu0 %v2614
        %v2764 = vpop.f32.mrf.mxu0
        %v2765 = vadd.f32 %v2572, %v2764
        %v2766 = vpop.f32.mrf.mxu0
        %v2767 = vpop.f32.mrf.mxu0
        %v2768 = vadd.f32 %v2572, %v2767
        %v2769 = vpop.f32.mrf.mxu0
        %2770 = vmatprep.mubr.bf16.mxu0 0
        %2771 = vmatmul.mubr.bf16.gmra.mxu0 %v2617
        %v2772 = vpop.f32.mrf.mxu0
        %v2773 = vadd.f32 %v2572, %v2772
        %v2774 = vpop.f32.mrf.mxu0
        %v2775 = vpop.f32.mrf.mxu0
        %v2776 = vadd.f32 %v2572, %v2775
        %v2777 = vpop.f32.mrf.mxu0
        %2778 = vmatprep.mubr.bf16.mxu0 0
        %2779 = vmatmul.mubr.bf16.gmra.mxu0 %v2620
        %v2780 = vpop.f32.mrf.mxu0
        %v2781 = vadd.f32 %v2572, %v2780
        %v2782 = vpop.f32.mrf.mxu0
        %v2783 = vpop.f32.mrf.mxu0
        %v2784 = vadd.f32 %v2572, %v2783
        %v2785 = vpop.f32.mrf.mxu0
        %2786 = vdwg.mxu0
        %vm2787 = vcmp.gt.f32.partialorder %v2661, 20.0
        %vm2788 = vcmp.gt.f32.partialorder %v2664, 20.0
        %vm2789 = vcmp.gt.f32.partialorder %v2669, 20.0
        %vm2790 = vcmp.gt.f32.partialorder %v2672, 20.0
        %vm2791 = vcmp.gt.f32.partialorder %v2677, 20.0
        %vm2792 = vcmp.gt.f32.partialorder %v2680, 20.0
        %vm2793 = vcmp.gt.f32.partialorder %v2685, 20.0
        %vm2794 = vcmp.gt.f32.partialorder %v2688, 20.0
        %vm2795 = vcmp.gt.f32.partialorder %v2693, 20.0
        %vm2796 = vcmp.gt.f32.partialorder %v2696, 20.0
        %vm2797 = vcmp.gt.f32.partialorder %v2701, 20.0
        %vm2798 = vcmp.gt.f32.partialorder %v2704, 20.0
        %vm2799 = vcmp.gt.f32.partialorder %v2709, 20.0
        %vm2800 = vcmp.gt.f32.partialorder %v2712, 20.0
        %vm2801 = vcmp.gt.f32.partialorder %v2717, 20.0
        %vm2802 = vcmp.gt.f32.partialorder %v2720, 20.0
        %vm2803 = vcmp.gt.f32.partialorder %v2725, 20.0
        %vm2804 = vcmp.gt.f32.partialorder %v2728, 20.0
        %vm2805 = vcmp.gt.f32.partialorder %v2733, 20.0
        %vm2806 = vcmp.gt.f32.partialorder %v2736, 20.0
        %vm2807 = vcmp.gt.f32.partialorder %v2741, 20.0
        %vm2808 = vcmp.gt.f32.partialorder %v2744, 20.0
        %vm2809 = vcmp.gt.f32.partialorder %v2749, 20.0
        %vm2810 = vcmp.gt.f32.partialorder %v2752, 20.0
        %vm2811 = vcmp.gt.f32.partialorder %v2757, 20.0
        %vm2812 = vcmp.gt.f32.partialorder %v2760, 20.0
        %vm2813 = vcmp.gt.f32.partialorder %v2765, 20.0
        %vm2814 = vcmp.gt.f32.partialorder %v2768, 20.0
        %vm2815 = vcmp.gt.f32.partialorder %v2773, 20.0
        %vm2816 = vcmp.gt.f32.partialorder %v2776, 20.0
        %vm2817 = vcmp.gt.f32.partialorder %v2781, 20.0
        %vm2818 = vcmp.gt.f32.partialorder %v2784, 20.0
        %v2819 = vmin.f32 %v2661, 20.0
        %v2820 = vmin.f32 %v2664, 20.0
        %v2821 = vmin.f32 %v2669, 20.0
        %v2822 = vmin.f32 %v2672, 20.0
        %v2823 = vmin.f32 %v2677, 20.0
        %v2824 = vmin.f32 %v2680, 20.0
        %v2825 = vmin.f32 %v2685, 20.0
        %v2826 = vmin.f32 %v2688, 20.0
        %v2827 = vmin.f32 %v2693, 20.0
        %v2828 = vmin.f32 %v2696, 20.0
        %v2829 = vmin.f32 %v2701, 20.0
        %v2830 = vmin.f32 %v2704, 20.0
        %v2831 = vmin.f32 %v2709, 20.0
        %v2832 = vmin.f32 %v2712, 20.0
        %v2833 = vmin.f32 %v2717, 20.0
        %v2834 = vmin.f32 %v2720, 20.0
        %v2835 = vmin.f32 %v2725, 20.0
        %v2836 = vmin.f32 %v2728, 20.0
        %v2837 = vmin.f32 %v2733, 20.0
        %v2838 = vmin.f32 %v2736, 20.0
        %v2839 = vmin.f32 %v2741, 20.0
        %v2840 = vmin.f32 %v2744, 20.0
        %v2841 = vmin.f32 %v2749, 20.0
        %v2842 = vmin.f32 %v2752, 20.0
        %v2843 = vmin.f32 %v2757, 20.0
        %v2844 = vmin.f32 %v2760, 20.0
        %v2845 = vmin.f32 %v2765, 20.0
        %v2846 = vmin.f32 %v2768, 20.0
        %v2847 = vmin.f32 %v2773, 20.0
        %v2848 = vmin.f32 %v2776, 20.0
        %v2849 = vmin.f32 %v2781, 20.0
        %v2850 = vmin.f32 %v2784, 20.0
        %v2851 = vmul.f32 %v2819, 1.442695
        %v2852 = vpow.pop %v2851
        %v2853 = vmul.f32 %v2820, 1.442695
        %v2854 = vpow.pop %v2853
        %v2855 = vmul.f32 %v2821, 1.442695
        %v2856 = vpow.pop %v2855
        %v2857 = vmul.f32 %v2822, 1.442695
        %v2858 = vpow.pop %v2857
        %v2859 = vmul.f32 %v2823, 1.442695
        %v2860 = vpow.pop %v2859
        %v2861 = vmul.f32 %v2824, 1.442695
        %v2862 = vpow.pop %v2861
        %v2863 = vmul.f32 %v2825, 1.442695
        %v2864 = vpow.pop %v2863
        %v2865 = vmul.f32 %v2826, 1.442695
        %v2866 = vpow.pop %v2865
        %v2867 = vmul.f32 %v2827, 1.442695
        %v2868 = vpow.pop %v2867
        %v2869 = vmul.f32 %v2828, 1.442695
        %v2870 = vpow.pop %v2869
        %v2871 = vmul.f32 %v2829, 1.442695
        %v2872 = vpow.pop %v2871
        %v2873 = vmul.f32 %v2830, 1.442695
        %v2874 = vpow.pop %v2873
        %v2875 = vmul.f32 %v2831, 1.442695
        %v2876 = vpow.pop %v2875
        %v2877 = vmul.f32 %v2832, 1.442695
        %v2878 = vpow.pop %v2877
        %v2879 = vmul.f32 %v2833, 1.442695
        %v2880 = vpow.pop %v2879
        %v2881 = vmul.f32 %v2834, 1.442695
        %v2882 = vpow.pop %v2881
        %v2883 = vmul.f32 %v2835, 1.442695
        %v2884 = vpow.pop %v2883
        %v2885 = vmul.f32 %v2836, 1.442695
        %v2886 = vpow.pop %v2885
        %v2887 = vmul.f32 %v2837, 1.442695
        %v2888 = vpow.pop %v2887
        %v2889 = vmul.f32 %v2838, 1.442695
        %v2890 = vpow.pop %v2889
        %v2891 = vmul.f32 %v2839, 1.442695
        %v2892 = vpow.pop %v2891
        %v2893 = vmul.f32 %v2840, 1.442695
        %v2894 = vpow.pop %v2893
        %v2895 = vmul.f32 %v2841, 1.442695
        %v2896 = vpow.pop %v2895
        %v2897 = vmul.f32 %v2842, 1.442695
        %v2898 = vpow.pop %v2897
        %v2899 = vmul.f32 %v2843, 1.442695
        %v2900 = vpow.pop %v2899
        %v2901 = vmul.f32 %v2844, 1.442695
        %v2902 = vpow.pop %v2901
        %v2903 = vmul.f32 %v2845, 1.442695
        %v2904 = vpow.pop %v2903
        %v2905 = vmul.f32 %v2846, 1.442695
        %v2906 = vpow.pop %v2905
        %v2907 = vmul.f32 %v2847, 1.442695
        %v2908 = vpow.pop %v2907
        %v2909 = vmul.f32 %v2848, 1.442695
        %v2910 = vpow.pop %v2909
        %v2911 = vmul.f32 %v2849, 1.442695
        %v2912 = vpow.pop %v2911
        %v2913 = vmul.f32 %v2850, 1.442695
        %v2914 = vpow.pop %v2913
        %v2915 = vadd.f32 %v2852, 1.0
        %v2916 = vadd.f32 %v2854, 1.0
        %v2917 = vadd.f32 %v2856, 1.0
        %v2918 = vadd.f32 %v2858, 1.0
        %v2919 = vadd.f32 %v2860, 1.0
        %v2920 = vadd.f32 %v2862, 1.0
        %v2921 = vadd.f32 %v2864, 1.0
        %v2922 = vadd.f32 %v2866, 1.0
        %v2923 = vadd.f32 %v2868, 1.0
        %v2924 = vadd.f32 %v2870, 1.0
        %v2925 = vadd.f32 %v2872, 1.0
        %v2926 = vadd.f32 %v2874, 1.0
        %v2927 = vadd.f32 %v2876, 1.0
        %v2928 = vadd.f32 %v2878, 1.0
        %v2929 = vadd.f32 %v2880, 1.0
        %v2930 = vadd.f32 %v2882, 1.0
        %v2931 = vadd.f32 %v2884, 1.0
        %v2932 = vadd.f32 %v2886, 1.0
        %v2933 = vadd.f32 %v2888, 1.0
        %v2934 = vadd.f32 %v2890, 1.0
        %v2935 = vadd.f32 %v2892, 1.0
        %v2936 = vadd.f32 %v2894, 1.0
        %v2937 = vadd.f32 %v2896, 1.0
        %v2938 = vadd.f32 %v2898, 1.0
        %v2939 = vadd.f32 %v2900, 1.0
        %v2940 = vadd.f32 %v2902, 1.0
        %v2941 = vadd.f32 %v2904, 1.0
        %v2942 = vadd.f32 %v2906, 1.0
        %v2943 = vadd.f32 %v2908, 1.0
        %v2944 = vadd.f32 %v2910, 1.0
        %v2945 = vadd.f32 %v2912, 1.0
        %v2946 = vadd.f32 %v2914, 1.0
        %v2947 = vlog2.pop %v2915
        %v2948 = vmul.f32 %v2947, 0.6931472
        %v2949 = vlog2.pop %v2916
        %v2950 = vmul.f32 %v2949, 0.6931472
        %v2951 = vlog2.pop %v2917
        %v2952 = vmul.f32 %v2951, 0.6931472
        %v2953 = vlog2.pop %v2918
        %v2954 = vmul.f32 %v2953, 0.6931472
        %v2955 = vlog2.pop %v2919
        %v2956 = vmul.f32 %v2955, 0.6931472
        %v2957 = vlog2.pop %v2920
        %v2958 = vmul.f32 %v2957, 0.6931472
        %v2959 = vlog2.pop %v2921
        %v2960 = vmul.f32 %v2959, 0.6931472
        %v2961 = vlog2.pop %v2922
        %v2962 = vmul.f32 %v2961, 0.6931472
        %v2963 = vlog2.pop %v2923
        %v2964 = vmul.f32 %v2963, 0.6931472
        %v2965 = vlog2.pop %v2924
        %v2966 = vmul.f32 %v2965, 0.6931472
        %v2967 = vlog2.pop %v2925
        %v2968 = vmul.f32 %v2967, 0.6931472
        %v2969 = vlog2.pop %v2926
        %v2970 = vmul.f32 %v2969, 0.6931472
        %v2971 = vlog2.pop %v2927
        %v2972 = vmul.f32 %v2971, 0.6931472
        %v2973 = vlog2.pop %v2928
        %v2974 = vmul.f32 %v2973, 0.6931472
        %v2975 = vlog2.pop %v2929
        %v2976 = vmul.f32 %v2975, 0.6931472
        %v2977 = vlog2.pop %v2930
        %v2978 = vmul.f32 %v2977, 0.6931472
        %v2979 = vlog2.pop %v2931
        %v2980 = vmul.f32 %v2979, 0.6931472
        %v2981 = vlog2.pop %v2932
        %v2982 = vmul.f32 %v2981, 0.6931472
        %v2983 = vlog2.pop %v2933
        %v2984 = vmul.f32 %v2983, 0.6931472
        %v2985 = vlog2.pop %v2934
        %v2986 = vmul.f32 %v2985, 0.6931472
        %v2987 = vlog2.pop %v2935
        %v2988 = vmul.f32 %v2987, 0.6931472
        %v2989 = vlog2.pop %v2936
        %v2990 = vmul.f32 %v2989, 0.6931472
        %v2991 = vlog2.pop %v2937
        %v2992 = vmul.f32 %v2991, 0.6931472
        %v2993 = vlog2.pop %v2938
        %v2994 = vmul.f32 %v2993, 0.6931472
        %v2995 = vlog2.pop %v2939
        %v2996 = vmul.f32 %v2995, 0.6931472
        %v2997 = vlog2.pop %v2940
        %v2998 = vmul.f32 %v2997, 0.6931472
        %v2999 = vlog2.pop %v2941
        %v3000 = vmul.f32 %v2999, 0.6931472
        %v3001 = vlog2.pop %v2942
        %v3002 = vmul.f32 %v3001, 0.6931472
        %v3003 = vlog2.pop %v2943
        %v3004 = vmul.f32 %v3003, 0.6931472
        %v3005 = vlog2.pop %v2944
        %v3006 = vmul.f32 %v3005, 0.6931472
        %v3007 = vlog2.pop %v2945
        %v3008 = vmul.f32 %v3007, 0.6931472
        %v3009 = vlog2.pop %v2946
        %v3010 = vmul.f32 %v3009, 0.6931472
        %v3011 = vsel %vm2787, %v2661, %v2948
        %v3012 = vsel %vm2788, %v2664, %v2950
        %v3013 = vsel %vm2789, %v2669, %v2952
        %v3014 = vsel %vm2790, %v2672, %v2954
        %v3015 = vsel %vm2791, %v2677, %v2956
        %v3016 = vsel %vm2792, %v2680, %v2958
        %v3017 = vsel %vm2793, %v2685, %v2960
        %v3018 = vsel %vm2794, %v2688, %v2962
        %v3019 = vsel %vm2795, %v2693, %v2964
        %v3020 = vsel %vm2796, %v2696, %v2966
        %v3021 = vsel %vm2797, %v2701, %v2968
        %v3022 = vsel %vm2798, %v2704, %v2970
        %v3023 = vsel %vm2799, %v2709, %v2972
        %v3024 = vsel %vm2800, %v2712, %v2974
        %v3025 = vsel %vm2801, %v2717, %v2976
        %v3026 = vsel %vm2802, %v2720, %v2978
        %v3027 = vsel %vm2803, %v2725, %v2980
        %v3028 = vsel %vm2804, %v2728, %v2982
        %v3029 = vsel %vm2805, %v2733, %v2984
        %v3030 = vsel %vm2806, %v2736, %v2986
        %v3031 = vsel %vm2807, %v2741, %v2988
        %v3032 = vsel %vm2808, %v2744, %v2990
        %v3033 = vsel %vm2809, %v2749, %v2992
        %v3034 = vsel %vm2810, %v2752, %v2994
        %v3035 = vsel %vm2811, %v2757, %v2996
        %v3036 = vsel %vm2812, %v2760, %v2998
        %v3037 = vsel %vm2813, %v2765, %v3000
        %v3038 = vsel %vm2814, %v2768, %v3002
        %v3039 = vsel %vm2815, %v2773, %v3004
        %v3040 = vsel %vm2816, %v2776, %v3006
        %v3041 = vsel %vm2817, %v2781, %v3008
        %v3042 = vsel %vm2818, %v2784, %v3010
        %v3043 = vld [vmem:[%s14] sm:$0xff]
        %v3044 = vld [vmem:[%s15] sm:$0x3]
        %v3046 = vlaneseq
        %v3047 = vshrl.u32 %v3046, 7
        %v3048 = vsub.s32 0, %v3047
        %v3049 = vrot.slane %v3044, %v3048
        %v3050 = vlaneseq
        %v3051 = vshrl.u32 %v3050, 7
        %v3052 = vsub.s32 1, %v3051
        %v3053 = vrot.slane %v3044, %v3052
        %v3057 = vunpack.c.l.b16 %v3043
        %v3058 = vunpack.c.h.b16 %v3043
        %v3059 = vpack.c.b16 %v3057, %v3057
        %v3060 = vpack.c.b16 %v3058, %v3058
        %v3062 = vsel %vm2622, %v3059, 0
        %v3065 = vsel %vm2622, %v3060, 0
        %3067 = vmatprep.subr.bf16.mxu0 0
        %3068 = vmatpush1.bf16.msra.mxu0 0
        %3069 = vmatprep.subr.bf16.mxu0 0
        %3070 = vmatpush1.bf16.msra.mxu0 0
        %3071 = vmatprep.subr.bf16.mxu0 0
        %3072 = vmatpush1.bf16.msra.mxu0 0
        %3073 = vmatprep.subr.bf16.mxu0 0
        %3074 = vmatpush1.bf16.msra.mxu0 0
        %3075 = vmatprep.subr.bf16.mxu0 0
        %3076 = vmatpush1.bf16.msra.mxu0 0
        %3077 = vmatprep.subr.bf16.mxu0 0
        %3078 = vmatpush1.bf16.msra.mxu0 0
        %3079 = vmatprep.subr.bf16.mxu0 0
        %3080 = vmatpush1.bf16.msra.mxu0 0
        %3081 = vmatprep.subr.bf16.mxu0 %v3065
        %3082 = vmatpush1.bf16.msra.mxu0 %v3062
        %3083 = vmatprep.subr.bf16.mxu0 0
        %3084 = vmatpush2.bf16.msra.mxu0 0
        %3085 = vmatprep.subr.bf16.mxu0 0
        %3086 = vmatpush2.bf16.msra.mxu0 0
        %3087 = vmatprep.subr.bf16.mxu0 0
        %3088 = vmatpush2.bf16.msra.mxu0 0
        %3089 = vmatprep.subr.bf16.mxu0 0
        %3090 = vmatpush2.bf16.msra.mxu0 0
        %3091 = vmatprep.subr.bf16.mxu0 0
        %3092 = vmatpush2.bf16.msra.mxu0 0
        %3093 = vmatprep.subr.bf16.mxu0 0
        %3094 = vmatpush2.bf16.msra.mxu0 0
        %3095 = vmatprep.subr.bf16.mxu0 0
        %3096 = vmatpush2.bf16.msra.mxu0 0
        %3097 = vmatprep.subr.bf16.mxu0 0
        %3098 = vmatpush2.bf16.msra.mxu0 0
        %3099 = vmatprep.mubr.bf16.mxu0 0
        %3100 = vmatmul.mubr.bf16.gmra.mxu0 %v2575
        %v3101 = vpop.f32.mrf.mxu0
        %v3102 = vadd.f32 %v3049, %v3101
        %v3103 = vpop.f32.mrf.mxu0
        %v3104 = vadd.f32 %v3053, %v3103
        %v3105 = vpop.f32.mrf.mxu0
        %v3106 = vadd.f32 %v3049, %v3105
        %v3107 = vpop.f32.mrf.mxu0
        %v3108 = vadd.f32 %v3053, %v3107
        %3109 = vmatprep.mubr.bf16.mxu0 0
        %3110 = vmatmul.mubr.bf16.gmra.mxu0 %v2578
        %v3111 = vpop.f32.mrf.mxu0
        %v3112 = vadd.f32 %v3049, %v3111
        %v3113 = vpop.f32.mrf.mxu0
        %v3114 = vadd.f32 %v3053, %v3113
        %v3115 = vpop.f32.mrf.mxu0
        %v3116 = vadd.f32 %v3049, %v3115
        %v3117 = vpop.f32.mrf.mxu0
        %v3118 = vadd.f32 %v3053, %v3117
        %3119 = vmatprep.mubr.bf16.mxu0 0
        %3120 = vmatmul.mubr.bf16.gmra.mxu0 %v2581
        %v3121 = vpop.f32.mrf.mxu0
        %v3122 = vadd.f32 %v3049, %v3121
        %v3123 = vpop.f32.mrf.mxu0
        %v3124 = vadd.f32 %v3053, %v3123
        %v3125 = vpop.f32.mrf.mxu0
        %v3126 = vadd.f32 %v3049, %v3125
        %v3127 = vpop.f32.mrf.mxu0
        %v3128 = vadd.f32 %v3053, %v3127
        %3129 = vmatprep.mubr.bf16.mxu0 0
        %3130 = vmatmul.mubr.bf16.gmra.mxu0 %v2584
        %v3131 = vpop.f32.mrf.mxu0
        %v3132 = vadd.f32 %v3049, %v3131
        %v3133 = vpop.f32.mrf.mxu0
        %v3134 = vadd.f32 %v3053, %v3133
        %v3135 = vpop.f32.mrf.mxu0
        %v3136 = vadd.f32 %v3049, %v3135
        %v3137 = vpop.f32.mrf.mxu0
        %v3138 = vadd.f32 %v3053, %v3137
        %3139 = vmatprep.mubr.bf16.mxu0 0
        %3140 = vmatmul.mubr.bf16.gmra.mxu0 %v2587
        %v3141 = vpop.f32.mrf.mxu0
        %v3142 = vadd.f32 %v3049, %v3141
        %v3143 = vpop.f32.mrf.mxu0
        %v3144 = vadd.f32 %v3053, %v3143
        %v3145 = vpop.f32.mrf.mxu0
        %v3146 = vadd.f32 %v3049, %v3145
        %v3147 = vpop.f32.mrf.mxu0
        %v3148 = vadd.f32 %v3053, %v3147
        %3149 = vmatprep.mubr.bf16.mxu0 0
        %3150 = vmatmul.mubr.bf16.gmra.mxu0 %v2590
        %v3151 = vpop.f32.mrf.mxu0
        %v3152 = vadd.f32 %v3049, %v3151
        %v3153 = vpop.f32.mrf.mxu0
        %v3154 = vadd.f32 %v3053, %v3153
        %v3155 = vpop.f32.mrf.mxu0
        %v3156 = vadd.f32 %v3049, %v3155
        %v3157 = vpop.f32.mrf.mxu0
        %v3158 = vadd.f32 %v3053, %v3157
        %3159 = vmatprep.mubr.bf16.mxu0 0
        %3160 = vmatmul.mubr.bf16.gmra.mxu0 %v2593
        %v3161 = vpop.f32.mrf.mxu0
        %v3162 = vadd.f32 %v3049, %v3161
        %v3163 = vpop.f32.mrf.mxu0
        %v3164 = vadd.f32 %v3053, %v3163
        %v3165 = vpop.f32.mrf.mxu0
        %v3166 = vadd.f32 %v3049, %v3165
        %v3167 = vpop.f32.mrf.mxu0
        %v3168 = vadd.f32 %v3053, %v3167
        %3169 = vmatprep.mubr.bf16.mxu0 0
        %3170 = vmatmul.mubr.bf16.gmra.mxu0 %v2596
        %v3171 = vpop.f32.mrf.mxu0
        %v3172 = vadd.f32 %v3049, %v3171
        %v3173 = vpop.f32.mrf.mxu0
        %v3174 = vadd.f32 %v3053, %v3173
        %v3175 = vpop.f32.mrf.mxu0
        %v3176 = vadd.f32 %v3049, %v3175
        %v3177 = vpop.f32.mrf.mxu0
        %v3178 = vadd.f32 %v3053, %v3177
        %3179 = vmatprep.mubr.bf16.mxu0 0
        %3180 = vmatmul.mubr.bf16.gmra.mxu0 %v2599
        %v3181 = vpop.f32.mrf.mxu0
        %v3182 = vadd.f32 %v3049, %v3181
        %v3183 = vpop.f32.mrf.mxu0
        %v3184 = vadd.f32 %v3053, %v3183
        %v3185 = vpop.f32.mrf.mxu0
        %v3186 = vadd.f32 %v3049, %v3185
        %v3187 = vpop.f32.mrf.mxu0
        %v3188 = vadd.f32 %v3053, %v3187
        %3189 = vmatprep.mubr.bf16.mxu0 0
        %3190 = vmatmul.mubr.bf16.gmra.mxu0 %v2602
        %v3191 = vpop.f32.mrf.mxu0
        %v3192 = vadd.f32 %v3049, %v3191
        %v3193 = vpop.f32.mrf.mxu0
        %v3194 = vadd.f32 %v3053, %v3193
        %v3195 = vpop.f32.mrf.mxu0
        %v3196 = vadd.f32 %v3049, %v3195
        %v3197 = vpop.f32.mrf.mxu0
        %v3198 = vadd.f32 %v3053, %v3197
        %3199 = vmatprep.mubr.bf16.mxu0 0
        %3200 = vmatmul.mubr.bf16.gmra.mxu0 %v2605
        %v3201 = vpop.f32.mrf.mxu0
        %v3202 = vadd.f32 %v3049, %v3201
        %v3203 = vpop.f32.mrf.mxu0
        %v3204 = vadd.f32 %v3053, %v3203
        %v3205 = vpop.f32.mrf.mxu0
        %v3206 = vadd.f32 %v3049, %v3205
        %v3207 = vpop.f32.mrf.mxu0
        %v3208 = vadd.f32 %v3053, %v3207
        %3209 = vmatprep.mubr.bf16.mxu0 0
        %3210 = vmatmul.mubr.bf16.gmra.mxu0 %v2608
        %v3211 = vpop.f32.mrf.mxu0
        %v3212 = vadd.f32 %v3049, %v3211
        %v3213 = vpop.f32.mrf.mxu0
        %v3214 = vadd.f32 %v3053, %v3213
        %v3215 = vpop.f32.mrf.mxu0
        %v3216 = vadd.f32 %v3049, %v3215
        %v3217 = vpop.f32.mrf.mxu0
        %v3218 = vadd.f32 %v3053, %v3217
        %3219 = vmatprep.mubr.bf16.mxu0 0
        %3220 = vmatmul.mubr.bf16.gmra.mxu0 %v2611
        %v3221 = vpop.f32.mrf.mxu0
        %v3222 = vadd.f32 %v3049, %v3221
        %v3223 = vpop.f32.mrf.mxu0
        %v3224 = vadd.f32 %v3053, %v3223
        %v3225 = vpop.f32.mrf.mxu0
        %v3226 = vadd.f32 %v3049, %v3225
        %v3227 = vpop.f32.mrf.mxu0
        %v3228 = vadd.f32 %v3053, %v3227
        %3229 = vmatprep.mubr.bf16.mxu0 0
        %3230 = vmatmul.mubr.bf16.gmra.mxu0 %v2614
        %v3231 = vpop.f32.mrf.mxu0
        %v3232 = vadd.f32 %v3049, %v3231
        %v3233 = vpop.f32.mrf.mxu0
        %v3234 = vadd.f32 %v3053, %v3233
        %v3235 = vpop.f32.mrf.mxu0
        %v3236 = vadd.f32 %v3049, %v3235
        %v3237 = vpop.f32.mrf.mxu0
        %v3238 = vadd.f32 %v3053, %v3237
        %3239 = vmatprep.mubr.bf16.mxu0 0
        %3240 = vmatmul.mubr.bf16.gmra.mxu0 %v2617
        %v3241 = vpop.f32.mrf.mxu0
        %v3242 = vadd.f32 %v3049, %v3241
        %v3243 = vpop.f32.mrf.mxu0
        %v3244 = vadd.f32 %v3053, %v3243
        %v3245 = vpop.f32.mrf.mxu0
        %v3246 = vadd.f32 %v3049, %v3245
        %v3247 = vpop.f32.mrf.mxu0
        %v3248 = vadd.f32 %v3053, %v3247
        %3249 = vmatprep.mubr.bf16.mxu0 0
        %3250 = vmatmul.mubr.bf16.gmra.mxu0 %v2620
        %v3251 = vpop.f32.mrf.mxu0
        %v3252 = vadd.f32 %v3049, %v3251
        %v3253 = vpop.f32.mrf.mxu0
        %v3254 = vadd.f32 %v3053, %v3253
        %v3255 = vpop.f32.mrf.mxu0
        %v3256 = vadd.f32 %v3049, %v3255
        %v3257 = vpop.f32.mrf.mxu0
        %v3258 = vadd.f32 %v3053, %v3257
        %3259 = vdwg.mxu0
        %v3260 = vmul.f32 %v3102, %v3104
        %v3261 = vmul.f32 %v3106, %v3108
        %v3262 = vmul.f32 %v3112, %v3114
        %v3263 = vmul.f32 %v3116, %v3118
        %v3264 = vmul.f32 %v3122, %v3124
        %v3265 = vmul.f32 %v3126, %v3128
        %v3266 = vmul.f32 %v3132, %v3134
        %v3267 = vmul.f32 %v3136, %v3138
        %v3268 = vmul.f32 %v3142, %v3144
        %v3269 = vmul.f32 %v3146, %v3148
        %v3270 = vmul.f32 %v3152, %v3154
        %v3271 = vmul.f32 %v3156, %v3158
        %v3272 = vmul.f32 %v3162, %v3164
        %v3273 = vmul.f32 %v3166, %v3168
        %v3274 = vmul.f32 %v3172, %v3174
        %v3275 = vmul.f32 %v3176, %v3178
        %v3276 = vmul.f32 %v3182, %v3184
        %v3277 = vmul.f32 %v3186, %v3188
        %v3278 = vmul.f32 %v3192, %v3194
        %v3279 = vmul.f32 %v3196, %v3198
        %v3280 = vmul.f32 %v3202, %v3204
        %v3281 = vmul.f32 %v3206, %v3208
        %v3282 = vmul.f32 %v3212, %v3214
        %v3283 = vmul.f32 %v3216, %v3218
        %v3284 = vmul.f32 %v3222, %v3224
        %v3285 = vmul.f32 %v3226, %v3228
        %v3286 = vmul.f32 %v3232, %v3234
        %v3287 = vmul.f32 %v3236, %v3238
        %v3288 = vmul.f32 %v3242, %v3244
        %v3289 = vmul.f32 %v3246, %v3248
        %v3290 = vmul.f32 %v3252, %v3254
        %v3291 = vmul.f32 %v3256, %v3258
        %3292 = vadd.xlane.f32.xlu0 %v3260
        %v3293 = vpop.xlane.xlu0 %3292
        %3294 = vadd.xlane.f32.xlu0 %v3261
        %v3295 = vpop.xlane.xlu0 %3294
        %3296 = vadd.xlane.f32.xlu0 %v3262
        %v3297 = vpop.xlane.xlu0 %3296
        %3298 = vadd.xlane.f32.xlu0 %v3263
        %v3299 = vpop.xlane.xlu0 %3298
        %3300 = vadd.xlane.f32.xlu0 %v3264
        %v3301 = vpop.xlane.xlu0 %3300
        %3302 = vadd.xlane.f32.xlu0 %v3265
        %v3303 = vpop.xlane.xlu0 %3302
        %3304 = vadd.xlane.f32.xlu0 %v3266
        %v3305 = vpop.xlane.xlu0 %3304
        %3306 = vadd.xlane.f32.xlu0 %v3267
        %v3307 = vpop.xlane.xlu0 %3306
        %3308 = vadd.xlane.f32.xlu0 %v3268
        %v3309 = vpop.xlane.xlu0 %3308
        %3310 = vadd.xlane.f32.xlu0 %v3269
        %v3311 = vpop.xlane.xlu0 %3310
        %3312 = vadd.xlane.f32.xlu0 %v3270
        %v3313 = vpop.xlane.xlu0 %3312
        %3314 = vadd.xlane.f32.xlu0 %v3271
        %v3315 = vpop.xlane.xlu0 %3314
        %3316 = vadd.xlane.f32.xlu0 %v3272
        %v3317 = vpop.xlane.xlu0 %3316
        %3318 = vadd.xlane.f32.xlu0 %v3273
        %v3319 = vpop.xlane.xlu0 %3318
        %3320 = vadd.xlane.f32.xlu0 %v3274
        %v3321 = vpop.xlane.xlu0 %3320
        %3322 = vadd.xlane.f32.xlu0 %v3275
        %v3323 = vpop.xlane.xlu0 %3322
        %3324 = vadd.xlane.f32.xlu0 %v3276
        %v3325 = vpop.xlane.xlu0 %3324
        %3326 = vadd.xlane.f32.xlu0 %v3277
        %v3327 = vpop.xlane.xlu0 %3326
        %3328 = vadd.xlane.f32.xlu0 %v3278
        %v3329 = vpop.xlane.xlu0 %3328
        %3330 = vadd.xlane.f32.xlu0 %v3279
        %v3331 = vpop.xlane.xlu0 %3330
        %3332 = vadd.xlane.f32.xlu0 %v3280
        %v3333 = vpop.xlane.xlu0 %3332
        %3334 = vadd.xlane.f32.xlu0 %v3281
        %v3335 = vpop.xlane.xlu0 %3334
        %3336 = vadd.xlane.f32.xlu0 %v3282
        %v3337 = vpop.xlane.xlu0 %3336
        %3338 = vadd.xlane.f32.xlu0 %v3283
        %v3339 = vpop.xlane.xlu0 %3338
        %3340 = vadd.xlane.f32.xlu0 %v3284
        %v3341 = vpop.xlane.xlu0 %3340
        %3342 = vadd.xlane.f32.xlu0 %v3285
        %v3343 = vpop.xlane.xlu0 %3342
        %3344 = vadd.xlane.f32.xlu0 %v3286
        %v3345 = vpop.xlane.xlu0 %3344
        %3346 = vadd.xlane.f32.xlu0 %v3287
        %v3347 = vpop.xlane.xlu0 %3346
        %3348 = vadd.xlane.f32.xlu0 %v3288
        %v3349 = vpop.xlane.xlu0 %3348
        %3350 = vadd.xlane.f32.xlu0 %v3289
        %v3351 = vpop.xlane.xlu0 %3350
        %3352 = vadd.xlane.f32.xlu0 %v3290
        %v3353 = vpop.xlane.xlu0 %3352
        %3354 = vadd.xlane.f32.xlu0 %v3291
        %v3355 = vpop.xlane.xlu0 %3354
        %v3356 = vmul.f32 %v2462, %v3011
        %v3357 = vmul.f32 %v2463, %v3012
        %v3358 = vmul.f32 %v2464, %v3013
        %v3359 = vmul.f32 %v2465, %v3014
        %v3360 = vmul.f32 %v2466, %v3015
        %v3361 = vmul.f32 %v2467, %v3016
        %v3362 = vmul.f32 %v2468, %v3017
        %v3363 = vmul.f32 %v2469, %v3018
        %v3364 = vmul.f32 %v2479, %v3019
        %v3365 = vmul.f32 %v2481, %v3020
        %v3366 = vmul.f32 %v2483, %v3021
        %v3367 = vmul.f32 %v2485, %v3022
        %v3368 = vmul.f32 %v2487, %v3023
        %v3369 = vmul.f32 %v2489, %v3024
        %v3370 = vmul.f32 %v2491, %v3025
        %v3371 = vmul.f32 %v2493, %v3026
        %v3372 = vmul.f32 %v2503, %v3027
        %v3373 = vmul.f32 %v2505, %v3028
        %v3374 = vmul.f32 %v2507, %v3029
        %v3375 = vmul.f32 %v2509, %v3030
        %v3376 = vmul.f32 %v2511, %v3031
        %v3377 = vmul.f32 %v2513, %v3032
        %v3378 = vmul.f32 %v2515, %v3033
        %v3379 = vmul.f32 %v2517, %v3034
        %v3380 = vmul.f32 %v2527, %v3035
        %v3381 = vmul.f32 %v2529, %v3036
        %v3382 = vmul.f32 %v2531, %v3037
        %v3383 = vmul.f32 %v2533, %v3038
        %v3384 = vmul.f32 %v2535, %v3039
        %v3385 = vmul.f32 %v2537, %v3040
        %v3386 = vmul.f32 %v2539, %v3041
        %v3387 = vmul.f32 %v2541, %v3042
        %v3388 = vmul.f32 %v3356, %v3293
        %v3389 = vmul.f32 %v3357, %v3295
        %v3390 = vmul.f32 %v3358, %v3297
        %v3391 = vmul.f32 %v3359, %v3299
        %v3392 = vmul.f32 %v3360, %v3301
        %v3393 = vmul.f32 %v3361, %v3303
        %v3394 = vmul.f32 %v3362, %v3305
        %v3395 = vmul.f32 %v3363, %v3307
        %v3396 = vmul.f32 %v3364, %v3309
        %v3397 = vmul.f32 %v3365, %v3311
        %v3398 = vmul.f32 %v3366, %v3313
        %v3399 = vmul.f32 %v3367, %v3315
        %v3400 = vmul.f32 %v3368, %v3317
        %v3401 = vmul.f32 %v3369, %v3319
        %v3402 = vmul.f32 %v3370, %v3321
        %v3403 = vmul.f32 %v3371, %v3323
        %v3404 = vmul.f32 %v3372, %v3325
        %v3405 = vmul.f32 %v3373, %v3327
        %v3406 = vmul.f32 %v3374, %v3329
        %v3407 = vmul.f32 %v3375, %v3331
        %v3408 = vmul.f32 %v3376, %v3333
        %v3409 = vmul.f32 %v3377, %v3335
        %v3410 = vmul.f32 %v3378, %v3337
        %v3411 = vmul.f32 %v3379, %v3339
        %v3412 = vmul.f32 %v3380, %v3341
        %v3413 = vmul.f32 %v3381, %v3343
        %v3414 = vmul.f32 %v3382, %v3345
        %v3415 = vmul.f32 %v3383, %v3347
        %v3416 = vmul.f32 %v3384, %v3349
        %v3417 = vmul.f32 %v3385, %v3351
        %v3418 = vmul.f32 %v3386, %v3353
        %v3419 = vmul.f32 %v3387, %v3355
        %v3420 = vsub.f32 0.0, %v3388
        %v3421 = vsub.f32 0.0, %v3389
        %v3422 = vsub.f32 0.0, %v3390
        %v3423 = vsub.f32 0.0, %v3391
        %v3424 = vsub.f32 0.0, %v3392
        %v3425 = vsub.f32 0.0, %v3393
        %v3426 = vsub.f32 0.0, %v3394
        %v3427 = vsub.f32 0.0, %v3395
        %v3428 = vsub.f32 0.0, %v3396
        %v3429 = vsub.f32 0.0, %v3397
        %v3430 = vsub.f32 0.0, %v3398
        %v3431 = vsub.f32 0.0, %v3399
        %v3432 = vsub.f32 0.0, %v3400
        %v3433 = vsub.f32 0.0, %v3401
        %v3434 = vsub.f32 0.0, %v3402
        %v3435 = vsub.f32 0.0, %v3403
        %v3436 = vsub.f32 0.0, %v3404
        %v3437 = vsub.f32 0.0, %v3405
        %v3438 = vsub.f32 0.0, %v3406
        %v3439 = vsub.f32 0.0, %v3407
        %v3440 = vsub.f32 0.0, %v3408
        %v3441 = vsub.f32 0.0, %v3409
        %v3442 = vsub.f32 0.0, %v3410
        %v3443 = vsub.f32 0.0, %v3411
        %v3444 = vsub.f32 0.0, %v3412
        %v3445 = vsub.f32 0.0, %v3413
        %v3446 = vsub.f32 0.0, %v3414
        %v3447 = vsub.f32 0.0, %v3415
        %v3448 = vsub.f32 0.0, %v3416
        %v3449 = vsub.f32 0.0, %v3417
        %v3450 = vsub.f32 0.0, %v3418
        %v3451 = vsub.f32 0.0, %v3419
        %v3452 = vmul.f32 %v3420, 1.442695
        %v3453 = vpow.pop %v3452
        %v3454 = vmul.f32 %v3421, 1.442695
        %v3455 = vpow.pop %v3454
        %v3456 = vmul.f32 %v3422, 1.442695
        %v3457 = vpow.pop %v3456
        %v3458 = vmul.f32 %v3423, 1.442695
        %v3459 = vpow.pop %v3458
        %v3460 = vmul.f32 %v3424, 1.442695
        %v3461 = vpow.pop %v3460
        %v3462 = vmul.f32 %v3425, 1.442695
        %v3463 = vpow.pop %v3462
        %v3464 = vmul.f32 %v3426, 1.442695
        %v3465 = vpow.pop %v3464
        %v3466 = vmul.f32 %v3427, 1.442695
        %v3467 = vpow.pop %v3466
        %v3468 = vmul.f32 %v3428, 1.442695
        %v3469 = vpow.pop %v3468
        %v3470 = vmul.f32 %v3429, 1.442695
        %v3471 = vpow.pop %v3470
        %v3472 = vmul.f32 %v3430, 1.442695
        %v3473 = vpow.pop %v3472
        %v3474 = vmul.f32 %v3431, 1.442695
        %v3475 = vpow.pop %v3474
        %v3476 = vmul.f32 %v3432, 1.442695
        %v3477 = vpow.pop %v3476
        %v3478 = vmul.f32 %v3433, 1.442695
        %v3479 = vpow.pop %v3478
        %v3480 = vmul.f32 %v3434, 1.442695
        %v3481 = vpow.pop %v3480
        %v3482 = vmul.f32 %v3435, 1.442695
        %v3483 = vpow.pop %v3482
        %v3484 = vmul.f32 %v3436, 1.442695
        %v3485 = vpow.pop %v3484
        %v3486 = vmul.f32 %v3437, 1.442695
        %v3487 = vpow.pop %v3486
        %v3488 = vmul.f32 %v3438, 1.442695
        %v3489 = vpow.pop %v3488
        %v3490 = vmul.f32 %v3439, 1.442695
        %v3491 = vpow.pop %v3490
        %v3492 = vmul.f32 %v3440, 1.442695
        %v3493 = vpow.pop %v3492
        %v3494 = vmul.f32 %v3441, 1.442695
        %v3495 = vpow.pop %v3494
        %v3496 = vmul.f32 %v3442, 1.442695
        %v3497 = vpow.pop %v3496
        %v3498 = vmul.f32 %v3443, 1.442695
        %v3499 = vpow.pop %v3498
        %v3500 = vmul.f32 %v3444, 1.442695
        %v3501 = vpow.pop %v3500
        %v3502 = vmul.f32 %v3445, 1.442695
        %v3503 = vpow.pop %v3502
        %v3504 = vmul.f32 %v3446, 1.442695
        %v3505 = vpow.pop %v3504
        %v3506 = vmul.f32 %v3447, 1.442695
        %v3507 = vpow.pop %v3506
        %v3508 = vmul.f32 %v3448, 1.442695
        %v3509 = vpow.pop %v3508
        %v3510 = vmul.f32 %v3449, 1.442695
        %v3511 = vpow.pop %v3510
        %v3512 = vmul.f32 %v3450, 1.442695
        %v3513 = vpow.pop %v3512
        %v3514 = vmul.f32 %v3451, 1.442695
        %v3515 = vpow.pop %v3514
        %v3516 = vadd.f32 %v3453, 1.0
        %v3517 = vadd.f32 %v3455, 1.0
        %v3518 = vadd.f32 %v3457, 1.0
        %v3519 = vadd.f32 %v3459, 1.0
        %v3520 = vadd.f32 %v3461, 1.0
        %v3521 = vadd.f32 %v3463, 1.0
        %v3522 = vadd.f32 %v3465, 1.0
        %v3523 = vadd.f32 %v3467, 1.0
        %v3524 = vadd.f32 %v3469, 1.0
        %v3525 = vadd.f32 %v3471, 1.0
        %v3526 = vadd.f32 %v3473, 1.0
        %v3527 = vadd.f32 %v3475, 1.0
        %v3528 = vadd.f32 %v3477, 1.0
        %v3529 = vadd.f32 %v3479, 1.0
        %v3530 = vadd.f32 %v3481, 1.0
        %v3531 = vadd.f32 %v3483, 1.0
        %v3532 = vadd.f32 %v3485, 1.0
        %v3533 = vadd.f32 %v3487, 1.0
        %v3534 = vadd.f32 %v3489, 1.0
        %v3535 = vadd.f32 %v3491, 1.0
        %v3536 = vadd.f32 %v3493, 1.0
        %v3537 = vadd.f32 %v3495, 1.0
        %v3538 = vadd.f32 %v3497, 1.0
        %v3539 = vadd.f32 %v3499, 1.0
        %v3540 = vadd.f32 %v3501, 1.0
        %v3541 = vadd.f32 %v3503, 1.0
        %v3542 = vadd.f32 %v3505, 1.0
        %v3543 = vadd.f32 %v3507, 1.0
        %v3544 = vadd.f32 %v3509, 1.0
        %v3545 = vadd.f32 %v3511, 1.0
        %v3546 = vadd.f32 %v3513, 1.0
        %v3547 = vadd.f32 %v3515, 1.0
        %v3548 = vrcp.pop %v3516
        %v3549 = vmul.f32 1.0, %v3548
        %v3550 = vrcp.pop %v3517
        %v3551 = vmul.f32 1.0, %v3550
        %v3552 = vrcp.pop %v3518
        %v3553 = vmul.f32 1.0, %v3552
        %v3554 = vrcp.pop %v3519
        %v3555 = vmul.f32 1.0, %v3554
        %v3556 = vrcp.pop %v3520
        %v3557 = vmul.f32 1.0, %v3556
        %v3558 = vrcp.pop %v3521
        %v3559 = vmul.f32 1.0, %v3558
        %v3560 = vrcp.pop %v3522
        %v3561 = vmul.f32 1.0, %v3560
        %v3562 = vrcp.pop %v3523
        %v3563 = vmul.f32 1.0, %v3562
        %v3564 = vrcp.pop %v3524
        %v3565 = vmul.f32 1.0, %v3564
        %v3566 = vrcp.pop %v3525
        %v3567 = vmul.f32 1.0, %v3566
        %v3568 = vrcp.pop %v3526
        %v3569 = vmul.f32 1.0, %v3568
        %v3570 = vrcp.pop %v3527
        %v3571 = vmul.f32 1.0, %v3570
        %v3572 = vrcp.pop %v3528
        %v3573 = vmul.f32 1.0, %v3572
        %v3574 = vrcp.pop %v3529
        %v3575 = vmul.f32 1.0, %v3574
        %v3576 = vrcp.pop %v3530
        %v3577 = vmul.f32 1.0, %v3576
        %v3578 = vrcp.pop %v3531
        %v3579 = vmul.f32 1.0, %v3578
        %v3580 = vrcp.pop %v3532
        %v3581 = vmul.f32 1.0, %v3580
        %v3582 = vrcp.pop %v3533
        %v3583 = vmul.f32 1.0, %v3582
        %v3584 = vrcp.pop %v3534
        %v3585 = vmul.f32 1.0, %v3584
        %v3586 = vrcp.pop %v3535
        %v3587 = vmul.f32 1.0, %v3586
        %v3588 = vrcp.pop %v3536
        %v3589 = vmul.f32 1.0, %v3588
        %v3590 = vrcp.pop %v3537
        %v3591 = vmul.f32 1.0, %v3590
        %v3592 = vrcp.pop %v3538
        %v3593 = vmul.f32 1.0, %v3592
        %v3594 = vrcp.pop %v3539
        %v3595 = vmul.f32 1.0, %v3594
        %v3596 = vrcp.pop %v3540
        %v3597 = vmul.f32 1.0, %v3596
        %v3598 = vrcp.pop %v3541
        %v3599 = vmul.f32 1.0, %v3598
        %v3600 = vrcp.pop %v3542
        %v3601 = vmul.f32 1.0, %v3600
        %v3602 = vrcp.pop %v3543
        %v3603 = vmul.f32 1.0, %v3602
        %v3604 = vrcp.pop %v3544
        %v3605 = vmul.f32 1.0, %v3604
        %v3606 = vrcp.pop %v3545
        %v3607 = vmul.f32 1.0, %v3606
        %v3608 = vrcp.pop %v3546
        %v3609 = vmul.f32 1.0, %v3608
        %v3610 = vrcp.pop %v3547
        %v3611 = vmul.f32 1.0, %v3610
        %v3612 = vmul.f32 %v3388, %v3549
        %v3613 = vmul.f32 %v3389, %v3551
        %v3614 = vmul.f32 %v3390, %v3553
        %v3615 = vmul.f32 %v3391, %v3555
        %v3616 = vmul.f32 %v3392, %v3557
        %v3617 = vmul.f32 %v3393, %v3559
        %v3618 = vmul.f32 %v3394, %v3561
        %v3619 = vmul.f32 %v3395, %v3563
        %v3620 = vmul.f32 %v3396, %v3565
        %v3621 = vmul.f32 %v3397, %v3567
        %v3622 = vmul.f32 %v3398, %v3569
        %v3623 = vmul.f32 %v3399, %v3571
        %v3624 = vmul.f32 %v3400, %v3573
        %v3625 = vmul.f32 %v3401, %v3575
        %v3626 = vmul.f32 %v3402, %v3577
        %v3627 = vmul.f32 %v3403, %v3579
        %v3628 = vmul.f32 %v3404, %v3581
        %v3629 = vmul.f32 %v3405, %v3583
        %v3630 = vmul.f32 %v3406, %v3585
        %v3631 = vmul.f32 %v3407, %v3587
        %v3632 = vmul.f32 %v3408, %v3589
        %v3633 = vmul.f32 %v3409, %v3591
        %v3634 = vmul.f32 %v3410, %v3593
        %v3635 = vmul.f32 %v3411, %v3595
        %v3636 = vmul.f32 %v3412, %v3597
        %v3637 = vmul.f32 %v3413, %v3599
        %v3638 = vmul.f32 %v3414, %v3601
        %v3639 = vmul.f32 %v3415, %v3603
        %v3640 = vmul.f32 %v3416, %v3605
        %v3641 = vmul.f32 %v3417, %v3607
        %v3642 = vmul.f32 %v3418, %v3609
        %v3643 = vmul.f32 %v3419, %v3611
        %3652 = vrot.lane.b32.xlu0 %v3620, 8
        %v3653 = vpop.permute.xlu0 %3652
        %3654 = vrot.lane.b32.xlu0 %v3621, 8
        %v3655 = vpop.permute.xlu0 %3654
        %3656 = vrot.lane.b32.xlu0 %v3622, 8
        %v3657 = vpop.permute.xlu0 %3656
        %3658 = vrot.lane.b32.xlu0 %v3623, 8
        %v3659 = vpop.permute.xlu0 %3658
        %3660 = vrot.lane.b32.xlu0 %v3624, 8
        %v3661 = vpop.permute.xlu0 %3660
        %3662 = vrot.lane.b32.xlu0 %v3625, 8
        %v3663 = vpop.permute.xlu0 %3662
        %3664 = vrot.lane.b32.xlu0 %v3626, 8
        %v3665 = vpop.permute.xlu0 %3664
        %3666 = vrot.lane.b32.xlu0 %v3627, 8
        %v3667 = vpop.permute.xlu0 %3666
        %3684 = vrot.lane.b32.xlu0 %v3628, 16
        %v3685 = vpop.permute.xlu0 %3684
        %3686 = vrot.lane.b32.xlu0 %v3629, 16
        %v3687 = vpop.permute.xlu0 %3686
        %3688 = vrot.lane.b32.xlu0 %v3630, 16
        %v3689 = vpop.permute.xlu0 %3688
        %3690 = vrot.lane.b32.xlu0 %v3631, 16
        %v3691 = vpop.permute.xlu0 %3690
        %3692 = vrot.lane.b32.xlu0 %v3632, 16
        %v3693 = vpop.permute.xlu0 %3692
        %3694 = vrot.lane.b32.xlu0 %v3633, 16
        %v3695 = vpop.permute.xlu0 %3694
        %3696 = vrot.lane.b32.xlu0 %v3634, 16
        %v3697 = vpop.permute.xlu0 %3696
        %3698 = vrot.lane.b32.xlu0 %v3635, 16
        %v3699 = vpop.permute.xlu0 %3698
        %3716 = vrot.lane.b32.xlu0 %v3636, 24
        %v3717 = vpop.permute.xlu0 %3716
        %3718 = vrot.lane.b32.xlu0 %v3637, 24
        %v3719 = vpop.permute.xlu0 %3718
        %3720 = vrot.lane.b32.xlu0 %v3638, 24
        %v3721 = vpop.permute.xlu0 %3720
        %3722 = vrot.lane.b32.xlu0 %v3639, 24
        %v3723 = vpop.permute.xlu0 %3722
        %3724 = vrot.lane.b32.xlu0 %v3640, 24
        %v3725 = vpop.permute.xlu0 %3724
        %3726 = vrot.lane.b32.xlu0 %v3641, 24
        %v3727 = vpop.permute.xlu0 %3726
        %3728 = vrot.lane.b32.xlu0 %v3642, 24
        %v3729 = vpop.permute.xlu0 %3728
        %3730 = vrot.lane.b32.xlu0 %v3643, 24
        %v3731 = vpop.permute.xlu0 %3730
        %v3740 = vsel %vm1064, %v3612, %v3653
        %v3741 = vsel %vm1064, %v3613, %v3655
        %v3742 = vsel %vm1064, %v3614, %v3657
        %v3743 = vsel %vm1064, %v3615, %v3659
        %v3744 = vsel %vm1064, %v3616, %v3661
        %v3745 = vsel %vm1064, %v3617, %v3663
        %v3746 = vsel %vm1064, %v3618, %v3665
        %v3747 = vsel %vm1064, %v3619, %v3667
        %v3748 = vsel %vm1082, %v3740, %v3685
        %v3749 = vsel %vm1082, %v3741, %v3687
        %v3750 = vsel %vm1082, %v3742, %v3689
        %v3751 = vsel %vm1082, %v3743, %v3691
        %v3752 = vsel %vm1082, %v3744, %v3693
        %v3753 = vsel %vm1082, %v3745, %v3695
        %v3754 = vsel %vm1082, %v3746, %v3697
        %v3755 = vsel %vm1082, %v3747, %v3699
        %v3756 = vsel %vm1100, %v3748, %v3717
        %v3757 = vsel %vm1100, %v3749, %v3719
        %v3758 = vsel %vm1100, %v3750, %v3721
        %v3759 = vsel %vm1100, %v3751, %v3723
        %v3760 = vsel %vm1100, %v3752, %v3725
        %v3761 = vsel %vm1100, %v3753, %v3727
        %v3762 = vsel %vm1100, %v3754, %v3729
        %v3763 = vsel %vm1100, %v3755, %v3731
        %v3764 = vpack.c.bf16 %v3757, %v3756
        %v3765 = vpack.c.bf16 %v3759, %v3758
        %v3766 = vpack.c.bf16 %v3761, %v3760
        %v3767 = vpack.c.bf16 %v3763, %v3762
        %v3768 = vld [vmem:[%s16] sm:$0xf]
        %v3769 = vld [vmem:[%s16 + $0x4] sm:$0xf]
        %v3770 = vld [vmem:[%s16 + $0x8] sm:$0xf]
        %v3771 = vld [vmem:[%s16 + $0xc] sm:$0xf]
        %v3772 = vld [vmem:[%s17] sm:$0x1]
        %v3774 = vlaneseq
        %v3775 = vshrl.u32 %v3774, 7
        %v3776 = vsub.s32 0, %v3775
        %v3777 = vrot.slane %v3772, %v3776
        %v3783 = vunpack.c.l.b16 %v3768
        %v3784 = vunpack.c.l.b16 %v3769
        %v3785 = vunpack.c.l.b16 %v3770
        %v3786 = vunpack.c.l.b16 %v3771
        %v3787 = vpack.c.b16 %v3784, %v3783
        %v3788 = vpack.c.b16 %v3786, %v3785
        %v3792 = vsel %vm1118, %v3764, 0
        %v3795 = vsel %vm1118, %v3765, 0
        %v3798 = vsel %vm1118, %v3766, 0
        %v3801 = vsel %vm1118, %v3767, 0
        %3803 = vmatprep.subr.bf16.mxu0 0
        %3804 = vmatpush1.bf16.msra.mxu0 0
        %3805 = vmatprep.subr.bf16.mxu0 0
        %3806 = vmatpush1.bf16.msra.mxu0 0
        %3807 = vmatprep.subr.bf16.mxu0 0
        %3808 = vmatpush1.bf16.msra.mxu0 0
        %3809 = vmatprep.subr.bf16.mxu0 0
        %3810 = vmatpush1.bf16.msra.mxu0 0
        %3811 = vmatprep.subr.bf16.mxu0 0
        %3812 = vmatpush1.bf16.msra.mxu0 0
        %3813 = vmatprep.subr.bf16.mxu0 0
        %3814 = vmatpush1.bf16.msra.mxu0 0
        %3815 = vmatprep.subr.bf16.mxu0 0
        %3816 = vmatpush1.bf16.msra.mxu0 %v3788
        %3817 = vmatprep.subr.bf16.mxu0 0
        %3818 = vmatpush1.bf16.msra.mxu0 %v3787
        %3819 = vmatprep.subr.bf16.mxu0 0
        %3820 = vmatpush2.bf16.msra.mxu0 0
        %3821 = vmatprep.subr.bf16.mxu0 0
        %3822 = vmatpush2.bf16.msra.mxu0 0
        %3823 = vmatprep.subr.bf16.mxu0 0
        %3824 = vmatpush2.bf16.msra.mxu0 0
        %3825 = vmatprep.subr.bf16.mxu0 0
        %3826 = vmatpush2.bf16.msra.mxu0 0
        %3827 = vmatprep.subr.bf16.mxu0 0
        %3828 = vmatpush2.bf16.msra.mxu0 0
        %3829 = vmatprep.subr.bf16.mxu0 0
        %3830 = vmatpush2.bf16.msra.mxu0 0
        %3831 = vmatprep.subr.bf16.mxu0 0
        %3832 = vmatpush2.bf16.msra.mxu0 0
        %3833 = vmatprep.subr.bf16.mxu0 0
        %3834 = vmatpush2.bf16.msra.mxu0 0
        %3835 = vmatprep.mubr.bf16.mxu0 0
        %3836 = vmatmul.mubr.bf16.gmra.mxu0 %v3792
        %v3837 = vpop.f32.mrf.mxu0
        %v3838 = vadd.f32 %v3777, %v3837
        %v3839 = vpop.f32.mrf.mxu0
        %v3840 = vpop.f32.mrf.mxu0
        %v3841 = vadd.f32 %v3777, %v3840
        %v3842 = vpop.f32.mrf.mxu0
        %3843 = vmatprep.mubr.bf16.mxu0 0
        %3844 = vmatmul.mubr.bf16.gmra.mxu0 %v3795
        %v3845 = vpop.f32.mrf.mxu0
        %v3846 = vadd.f32 %v3777, %v3845
        %v3847 = vpop.f32.mrf.mxu0
        %v3848 = vpop.f32.mrf.mxu0
        %v3849 = vadd.f32 %v3777, %v3848
        %v3850 = vpop.f32.mrf.mxu0
        %3851 = vmatprep.mubr.bf16.mxu0 0
        %3852 = vmatmul.mubr.bf16.gmra.mxu0 %v3798
        %v3853 = vpop.f32.mrf.mxu0
        %v3854 = vadd.f32 %v3777, %v3853
        %v3855 = vpop.f32.mrf.mxu0
        %v3856 = vpop.f32.mrf.mxu0
        %v3857 = vadd.f32 %v3777, %v3856
        %v3858 = vpop.f32.mrf.mxu0
        %3859 = vmatprep.mubr.bf16.mxu0 0
        %3860 = vmatmul.mubr.bf16.gmra.mxu0 %v3801
        %v3861 = vpop.f32.mrf.mxu0
        %v3862 = vadd.f32 %v3777, %v3861
        %v3863 = vpop.f32.mrf.mxu0
        %v3864 = vpop.f32.mrf.mxu0
        %v3865 = vadd.f32 %v3777, %v3864
        %v3866 = vpop.f32.mrf.mxu0
        %3867 = vdwg.mxu0
        %v3868 = vadd.f32 %v3838, %v1436
        %v3869 = vadd.f32 %v3841, %v1437
        %v3870 = vadd.f32 %v3846, %v1438
        %v3871 = vadd.f32 %v3849, %v1439
        %v3872 = vadd.f32 %v3854, %v1440
        %v3873 = vadd.f32 %v3857, %v1441
        %v3874 = vadd.f32 %v3862, %v1442
        %v3875 = vadd.f32 %v3865, %v1443
        %v3876 = vpack.c.bf16 %v3869, %v3868
        %v3877 = vpack.c.bf16 %v3871, %v3870
        %v3878 = vpack.c.bf16 %v3873, %v3872
        %v3879 = vpack.c.bf16 %v3875, %v3874
        %v3880 = vld [vmem:[%s18] sm:$0xf]
        %v3881 = vld [vmem:[%s18 + $0x4] sm:$0xf]
        %v3882 = vld [vmem:[%s19] sm:$0x1]
        %v3884 = vlaneseq
        %v3885 = vshrl.u32 %v3884, 7
        %v3886 = vsub.s32 0, %v3885
        %v3887 = vrot.slane %v3882, %v3886
        %v3891 = vunpack.c.l.b16 %v3880
        %v3892 = vunpack.c.l.b16 %v3881
        %v3893 = vpack.c.b16 %v3892, %v3891
        %v3896 = vsel %vm1082, %v3876, 0
        %v3899 = vsel %vm1082, %v3877, 0
        %v3902 = vsel %vm1082, %v3878, 0
        %v3905 = vsel %vm1082, %v3879, 0
        %3907 = vmatprep.subr.bf16.mxu0 0
        %3908 = vmatpush1.bf16.msra.mxu0 0
        %3909 = vmatprep.subr.bf16.mxu0 0
        %3910 = vmatpush1.bf16.msra.mxu0 0
        %3911 = vmatprep.subr.bf16.mxu0 0
        %3912 = vmatpush1.bf16.msra.mxu0 0
        %3913 = vmatprep.subr.bf16.mxu0 0
        %3914 = vmatpush1.bf16.msra.mxu0 0
        %3915 = vmatprep.subr.bf16.mxu0 0
        %3916 = vmatpush1.bf16.msra.mxu0 0
        %3917 = vmatprep.subr.bf16.mxu0 0
        %3918 = vmatpush1.bf16.msra.mxu0 0
        %3919 = vmatprep.subr.bf16.mxu0 0
        %3920 = vmatpush1.bf16.msra.mxu0 0
        %3921 = vmatprep.subr.bf16.mxu0 0
        %3922 = vmatpush1.bf16.msra.mxu0 %v3893
        %3923 = vmatprep.subr.bf16.mxu0 0
        %3924 = vmatpush2.bf16.msra.mxu0 0
        %3925 = vmatprep.subr.bf16.mxu0 0
        %3926 = vmatpush2.bf16.msra.mxu0 0
        %3927 = vmatprep.subr.bf16.mxu0 0
        %3928 = vmatpush2.bf16.msra.mxu0 0
        %3929 = vmatprep.subr.bf16.mxu0 0
        %3930 = vmatpush2.bf16.msra.mxu0 0
        %3931 = vmatprep.subr.bf16.mxu0 0
        %3932 = vmatpush2.bf16.msra.mxu0 0
        %3933 = vmatprep.subr.bf16.mxu0 0
        %3934 = vmatpush2.bf16.msra.mxu0 0
        %3935 = vmatprep.subr.bf16.mxu0 0
        %3936 = vmatpush2.bf16.msra.mxu0 0
        %3937 = vmatprep.subr.bf16.mxu0 0
        %3938 = vmatpush2.bf16.msra.mxu0 0
        %3939 = vmatprep.mubr.bf16.mxu0 0
        %3940 = vmatmul.mubr.bf16.gmra.mxu0 %v3896
        %v3941 = vpop.f32.mrf.mxu0
        %v3942 = vadd.f32 %v3887, %v3941
        %v3943 = vpop.f32.mrf.mxu0
        %v3944 = vpop.f32.mrf.mxu0
        %v3945 = vadd.f32 %v3887, %v3944
        %v3946 = vpop.f32.mrf.mxu0
        %3947 = vmatprep.mubr.bf16.mxu0 0
        %3948 = vmatmul.mubr.bf16.gmra.mxu0 %v3899
        %v3949 = vpop.f32.mrf.mxu0
        %v3950 = vadd.f32 %v3887, %v3949
        %v3951 = vpop.f32.mrf.mxu0
        %v3952 = vpop.f32.mrf.mxu0
        %v3953 = vadd.f32 %v3887, %v3952
        %v3954 = vpop.f32.mrf.mxu0
        %3955 = vmatprep.mubr.bf16.mxu0 0
        %3956 = vmatmul.mubr.bf16.gmra.mxu0 %v3902
        %v3957 = vpop.f32.mrf.mxu0
        %v3958 = vadd.f32 %v3887, %v3957
        %v3959 = vpop.f32.mrf.mxu0
        %v3960 = vpop.f32.mrf.mxu0
        %v3961 = vadd.f32 %v3887, %v3960
        %v3962 = vpop.f32.mrf.mxu0
        %3963 = vmatprep.mubr.bf16.mxu0 0
        %3964 = vmatmul.mubr.bf16.gmra.mxu0 %v3905
        %v3965 = vpop.f32.mrf.mxu0
        %v3966 = vadd.f32 %v3887, %v3965
        %v3967 = vpop.f32.mrf.mxu0
        %v3968 = vpop.f32.mrf.mxu0
        %v3969 = vadd.f32 %v3887, %v3968
        %v3970 = vpop.f32.mrf.mxu0
        %3971 = vdwg.mxu0
        %v3972 = vsub.f32 0.0, %v3942
        %v3973 = vsub.f32 0.0, %v3945
        %v3974 = vsub.f32 0.0, %v3950
        %v3975 = vsub.f32 0.0, %v3953
        %v3976 = vsub.f32 0.0, %v3958
        %v3977 = vsub.f32 0.0, %v3961
        %v3978 = vsub.f32 0.0, %v3966
        %v3979 = vsub.f32 0.0, %v3969
        %v3980 = vmul.f32 %v3972, 1.442695
        %v3981 = vpow.pop %v3980
        %v3982 = vmul.f32 %v3973, 1.442695
        %v3983 = vpow.pop %v3982
        %v3984 = vmul.f32 %v3974, 1.442695
        %v3985 = vpow.pop %v3984
        %v3986 = vmul.f32 %v3975, 1.442695
        %v3987 = vpow.pop %v3986
        %v3988 = vmul.f32 %v3976, 1.442695
        %v3989 = vpow.pop %v3988
        %v3990 = vmul.f32 %v3977, 1.442695
        %v3991 = vpow.pop %v3990
        %v3992 = vmul.f32 %v3978, 1.442695
        %v3993 = vpow.pop %v3992
        %v3994 = vmul.f32 %v3979, 1.442695
        %v3995 = vpow.pop %v3994
        %v3996 = vadd.f32 %v3981, 1.0
        %v3997 = vadd.f32 %v3983, 1.0
        %v3998 = vadd.f32 %v3985, 1.0
        %v3999 = vadd.f32 %v3987, 1.0
        %v4000 = vadd.f32 %v3989, 1.0
        %v4001 = vadd.f32 %v3991, 1.0
        %v4002 = vadd.f32 %v3993, 1.0
        %v4003 = vadd.f32 %v3995, 1.0
        %v4004 = vrcp.pop %v3996
        %v4005 = vmul.f32 1.0, %v4004
        %v4006 = vrcp.pop %v3997
        %v4007 = vmul.f32 1.0, %v4006
        %v4008 = vrcp.pop %v3998
        %v4009 = vmul.f32 1.0, %v4008
        %v4010 = vrcp.pop %v3999
        %v4011 = vmul.f32 1.0, %v4010
        %v4012 = vrcp.pop %v4000
        %v4013 = vmul.f32 1.0, %v4012
        %v4014 = vrcp.pop %v4001
        %v4015 = vmul.f32 1.0, %v4014
        %v4016 = vrcp.pop %v4002
        %v4017 = vmul.f32 1.0, %v4016
        %v4018 = vrcp.pop %v4003
        %v4019 = vmul.f32 1.0, %v4018
        %v4020 = vmul.f32 %v3942, %v4005
        %v4021 = vmul.f32 %v3945, %v4007
        %v4022 = vmul.f32 %v3950, %v4009
        %v4023 = vmul.f32 %v3953, %v4011
        %v4024 = vmul.f32 %v3958, %v4013
        %v4025 = vmul.f32 %v3961, %v4015
        %v4026 = vmul.f32 %v3966, %v4017
        %v4027 = vmul.f32 %v3969, %v4019
        %v4035 = vrot.slane %v4020, 7
        %v4036 = vsel %vm816, %v817, %v4035
        %v4037 = vrot.slane %v4021, 7
        %v4038 = vsel %vm816, %v817, %v4037
        %v4039 = vrot.slane %v4022, 7
        %v4040 = vsel %vm816, %v817, %v4039
        %v4041 = vrot.slane %v4023, 7
        %v4042 = vsel %vm816, %v817, %v4041
        %v4043 = vrot.slane %v4024, 7
        %v4044 = vsel %vm816, %v817, %v4043
        %v4045 = vrot.slane %v4025, 7
        %v4046 = vsel %vm816, %v817, %v4045
        %v4047 = vrot.slane %v4026, 7
        %v4048 = vsel %vm816, %v817, %v4047
        %v4056 = vrot.slane %v4020, 1
        %v4057 = vsel %vm841, %v4056, %v842
        %v4058 = vrot.slane %v4021, 1
        %v4059 = vsel %vm841, %v4058, %v842
        %v4060 = vrot.slane %v4022, 1
        %v4061 = vsel %vm841, %v4060, %v842
        %v4062 = vrot.slane %v4023, 1
        %v4063 = vsel %vm841, %v4062, %v842
        %v4064 = vrot.slane %v4024, 1
        %v4065 = vsel %vm841, %v4064, %v842
        %v4066 = vrot.slane %v4025, 1
        %v4067 = vsel %vm841, %v4066, %v842
        %v4068 = vrot.slane %v4026, 1
        %v4069 = vsel %vm841, %v4068, %v842
        %v4071 = vrot.slane %v4027, 7
        %v4072 = vsel %vm816, %v817, %v4071
        %v4073 = vrot.slane %v4027, 1
        %v4074 = vsel %vm841, %v4073, %v842
        %4075 = vrot.lane.b32.xlu0 0.0, 8
        %v4076 = vpop.permute.xlu0 %4075
        %4077 = vrot.lane.b32.xlu0 %v4020, 8
        %v4078 = vpop.permute.xlu0 %4077
        %4079 = vrot.lane.b32.xlu0 %v4021, 8
        %v4080 = vpop.permute.xlu0 %4079
        %4081 = vrot.lane.b32.xlu0 %v4022, 8
        %v4082 = vpop.permute.xlu0 %4081
        %4083 = vrot.lane.b32.xlu0 %v4023, 8
        %v4084 = vpop.permute.xlu0 %4083
        %4085 = vrot.lane.b32.xlu0 %v4024, 8
        %v4086 = vpop.permute.xlu0 %4085
        %4087 = vrot.lane.b32.xlu0 %v4025, 8
        %v4088 = vpop.permute.xlu0 %4087
        %4089 = vrot.lane.b32.xlu0 %v4026, 8
        %v4090 = vpop.permute.xlu0 %4089
        %4099 = vrot.lane.b32.xlu0 %v843, 16
        %v4100 = vpop.permute.xlu0 %4099
        %4101 = vrot.lane.b32.xlu0 %v4057, 16
        %v4102 = vpop.permute.xlu0 %4101
        %4103 = vrot.lane.b32.xlu0 %v4059, 16
        %v4104 = vpop.permute.xlu0 %4103
        %4105 = vrot.lane.b32.xlu0 %v4061, 16
        %v4106 = vpop.permute.xlu0 %4105
        %4107 = vrot.lane.b32.xlu0 %v4063, 16
        %v4108 = vpop.permute.xlu0 %4107
        %4109 = vrot.lane.b32.xlu0 %v4065, 16
        %v4110 = vpop.permute.xlu0 %4109
        %4111 = vrot.lane.b32.xlu0 %v4067, 16
        %v4112 = vpop.permute.xlu0 %4111
        %4113 = vrot.lane.b32.xlu0 %v4069, 16
        %v4114 = vpop.permute.xlu0 %4113
        %4123 = vrot.lane.b32.xlu0 %v4036, 24
        %v4124 = vpop.permute.xlu0 %4123
        %4125 = vrot.lane.b32.xlu0 %v4038, 24
        %v4126 = vpop.permute.xlu0 %4125
        %4127 = vrot.lane.b32.xlu0 %v4040, 24
        %v4128 = vpop.permute.xlu0 %4127
        %4129 = vrot.lane.b32.xlu0 %v4042, 24
        %v4130 = vpop.permute.xlu0 %4129
        %4131 = vrot.lane.b32.xlu0 %v4044, 24
        %v4132 = vpop.permute.xlu0 %4131
        %4133 = vrot.lane.b32.xlu0 %v4046, 24
        %v4134 = vpop.permute.xlu0 %4133
        %4135 = vrot.lane.b32.xlu0 %v4048, 24
        %v4136 = vpop.permute.xlu0 %4135
        %4137 = vrot.lane.b32.xlu0 %v4072, 24
        %v4138 = vpop.permute.xlu0 %4137
        %4147 = vrot.lane.b32.xlu0 %v4020, 32
        %v4148 = vpop.permute.xlu0 %4147
        %4149 = vrot.lane.b32.xlu0 %v4021, 32
        %v4150 = vpop.permute.xlu0 %4149
        %4151 = vrot.lane.b32.xlu0 %v4022, 32
        %v4152 = vpop.permute.xlu0 %4151
        %4153 = vrot.lane.b32.xlu0 %v4023, 32
        %v4154 = vpop.permute.xlu0 %4153
        %4155 = vrot.lane.b32.xlu0 %v4024, 32
        %v4156 = vpop.permute.xlu0 %4155
        %4157 = vrot.lane.b32.xlu0 %v4025, 32
        %v4158 = vpop.permute.xlu0 %4157
        %4159 = vrot.lane.b32.xlu0 %v4026, 32
        %v4160 = vpop.permute.xlu0 %4159
        %4161 = vrot.lane.b32.xlu0 %v4027, 32
        %v4162 = vpop.permute.xlu0 %4161
        %4171 = vrot.lane.b32.xlu0 %v4057, 40
        %v4172 = vpop.permute.xlu0 %4171
        %4173 = vrot.lane.b32.xlu0 %v4059, 40
        %v4174 = vpop.permute.xlu0 %4173
        %4175 = vrot.lane.b32.xlu0 %v4061, 40
        %v4176 = vpop.permute.xlu0 %4175
        %4177 = vrot.lane.b32.xlu0 %v4063, 40
        %v4178 = vpop.permute.xlu0 %4177
        %4179 = vrot.lane.b32.xlu0 %v4065, 40
        %v4180 = vpop.permute.xlu0 %4179
        %4181 = vrot.lane.b32.xlu0 %v4067, 40
        %v4182 = vpop.permute.xlu0 %4181
        %4183 = vrot.lane.b32.xlu0 %v4069, 40
        %v4184 = vpop.permute.xlu0 %4183
        %4185 = vrot.lane.b32.xlu0 %v4074, 40
        %v4186 = vpop.permute.xlu0 %4185
        %4195 = vrot.lane.b32.xlu0 %v4038, 48
        %v4196 = vpop.permute.xlu0 %4195
        %4197 = vrot.lane.b32.xlu0 %v4040, 48
        %v4198 = vpop.permute.xlu0 %4197
        %4199 = vrot.lane.b32.xlu0 %v4042, 48
        %v4200 = vpop.permute.xlu0 %4199
        %4201 = vrot.lane.b32.xlu0 %v4044, 48
        %v4202 = vpop.permute.xlu0 %4201
        %4203 = vrot.lane.b32.xlu0 %v4046, 48
        %v4204 = vpop.permute.xlu0 %4203
        %4205 = vrot.lane.b32.xlu0 %v4048, 48
        %v4206 = vpop.permute.xlu0 %4205
        %4207 = vrot.lane.b32.xlu0 %v4072, 48
        %v4208 = vpop.permute.xlu0 %4207
        %4209 = vrot.lane.b32.xlu0 %v818, 48
        %v4210 = vpop.permute.xlu0 %4209
        %4219 = vrot.lane.b32.xlu0 %v4021, 56
        %v4220 = vpop.permute.xlu0 %4219
        %4221 = vrot.lane.b32.xlu0 %v4022, 56
        %v4222 = vpop.permute.xlu0 %4221
        %4223 = vrot.lane.b32.xlu0 %v4023, 56
        %v4224 = vpop.permute.xlu0 %4223
        %4225 = vrot.lane.b32.xlu0 %v4024, 56
        %v4226 = vpop.permute.xlu0 %4225
        %4227 = vrot.lane.b32.xlu0 %v4025, 56
        %v4228 = vpop.permute.xlu0 %4227
        %4229 = vrot.lane.b32.xlu0 %v4026, 56
        %v4230 = vpop.permute.xlu0 %4229
        %4231 = vrot.lane.b32.xlu0 %v4027, 56
        %v4232 = vpop.permute.xlu0 %4231
        %4233 = vrot.lane.b32.xlu0 0.0, 56
        %v4234 = vpop.permute.xlu0 %4233
        %4243 = vrot.lane.b32.xlu0 %v4059, 64
        %v4244 = vpop.permute.xlu0 %4243
        %4245 = vrot.lane.b32.xlu0 %v4061, 64
        %v4246 = vpop.permute.xlu0 %4245
        %4247 = vrot.lane.b32.xlu0 %v4063, 64
        %v4248 = vpop.permute.xlu0 %4247
        %4249 = vrot.lane.b32.xlu0 %v4065, 64
        %v4250 = vpop.permute.xlu0 %4249
        %4251 = vrot.lane.b32.xlu0 %v4067, 64
        %v4252 = vpop.permute.xlu0 %4251
        %4253 = vrot.lane.b32.xlu0 %v4069, 64
        %v4254 = vpop.permute.xlu0 %4253
        %4255 = vrot.lane.b32.xlu0 %v4074, 64
        %v4256 = vpop.permute.xlu0 %4255
        %4257 = vrot.lane.b32.xlu0 %v843, 64
        %v4258 = vpop.permute.xlu0 %4257
        %v4267 = vsel %vm1064, %v818, %v4076
        %v4268 = vsel %vm1064, %v4036, %v4078
        %v4269 = vsel %vm1064, %v4038, %v4080
        %v4270 = vsel %vm1064, %v4040, %v4082
        %v4271 = vsel %vm1064, %v4042, %v4084
        %v4272 = vsel %vm1064, %v4044, %v4086
        %v4273 = vsel %vm1064, %v4046, %v4088
        %v4274 = vsel %vm1064, %v4048, %v4090
        %v4275 = vsel %vm1082, %v4267, %v4100
        %v4276 = vsel %vm1082, %v4268, %v4102
        %v4277 = vsel %vm1082, %v4269, %v4104
        %v4278 = vsel %vm1082, %v4270, %v4106
        %v4279 = vsel %vm1082, %v4271, %v4108
        %v4280 = vsel %vm1082, %v4272, %v4110
        %v4281 = vsel %vm1082, %v4273, %v4112
        %v4282 = vsel %vm1082, %v4274, %v4114
        %v4283 = vsel %vm1100, %v4275, %v4124
        %v4284 = vsel %vm1100, %v4276, %v4126
        %v4285 = vsel %vm1100, %v4277, %v4128
        %v4286 = vsel %vm1100, %v4278, %v4130
        %v4287 = vsel %vm1100, %v4279, %v4132
        %v4288 = vsel %vm1100, %v4280, %v4134
        %v4289 = vsel %vm1100, %v4281, %v4136
        %v4290 = vsel %vm1100, %v4282, %v4138
        %v4291 = vsel %vm1118, %v4283, %v4148
        %v4292 = vsel %vm1118, %v4284, %v4150
        %v4293 = vsel %vm1118, %v4285, %v4152
        %v4294 = vsel %vm1118, %v4286, %v4154
        %v4295 = vsel %vm1118, %v4287, %v4156
        %v4296 = vsel %vm1118, %v4288, %v4158
        %v4297 = vsel %vm1118, %v4289, %v4160
        %v4298 = vsel %vm1118, %v4290, %v4162
        %vm4299 = vcmask 326656
        %v4300 = vsel %vm4299, %v4291, %v4172
        %v4301 = vsel %vm4299, %v4292, %v4174
        %v4302 = vsel %vm4299, %v4293, %v4176
        %v4303 = vsel %vm4299, %v4294, %v4178
        %v4304 = vsel %vm4299, %v4295, %v4180
        %v4305 = vsel %vm4299, %v4296, %v4182
        %v4306 = vsel %vm4299, %v4297, %v4184
        %v4307 = vsel %vm4299, %v4298, %v4186
        %vm4308 = vcmask 392192
        %v4309 = vsel %vm4308, %v4300, %v4196
        %v4310 = vsel %vm4308, %v4301, %v4198
        %v4311 = vsel %vm4308, %v4302, %v4200
        %v4312 = vsel %vm4308, %v4303, %v4202
        %v4313 = vsel %vm4308, %v4304, %v4204
        %v4314 = vsel %vm4308, %v4305, %v4206
        %v4315 = vsel %vm4308, %v4306, %v4208
        %v4316 = vsel %vm4308, %v4307, %v4210
        %vm4317 = vcmask 457728
        %v4318 = vsel %vm4317, %v4309, %v4220
        %v4319 = vsel %vm4317, %v4310, %v4222
        %v4320 = vsel %vm4317, %v4311, %v4224
        %v4321 = vsel %vm4317, %v4312, %v4226
        %v4322 = vsel %vm4317, %v4313, %v4228
        %v4323 = vsel %vm4317, %v4314, %v4230
        %v4324 = vsel %vm4317, %v4315, %v4232
        %v4325 = vsel %vm4317, %v4316, %v4234
        %v4326 = vsel %vm2336, %v4318, %v4244
        %v4327 = vsel %vm2336, %v4319, %v4246
        %v4328 = vsel %vm2336, %v4320, %v4248
        %v4329 = vsel %vm2336, %v4321, %v4250
        %v4330 = vsel %vm2336, %v4322, %v4252
        %v4331 = vsel %vm2336, %v4323, %v4254
        %v4332 = vsel %vm2336, %v4324, %v4256
        %v4333 = vsel %vm2336, %v4325, %v4258
        %v4334 = vpack.c.bf16 %v4327, %v4326
        %v4335 = vpack.c.bf16 %v4329, %v4328
        %v4336 = vpack.c.bf16 %v4331, %v4330
        %v4337 = vpack.c.bf16 %v4333, %v4332
        %v4338 = vld [vmem:[%s20] sm:$0xf]
        %v4339 = vld [vmem:[%s20 + $0x4] sm:$0xf]
        %v4340 = vld [vmem:[%s20 + $0x8] sm:$0xf]
        %v4341 = vld [vmem:[%s20 + $0xc] sm:$0xf]
        %v4342 = vld [vmem:[%s20 + $0x10] sm:$0xf]
        %v4343 = vld [vmem:[%s20 + $0x14] sm:$0xf]
        %v4344 = vld [vmem:[%s20 + $0x18] sm:$0xf]
        %v4345 = vld [vmem:[%s20 + $0x1c] sm:$0xf]
        %v4346 = vld [vmem:[%s20 + $0x20] sm:$0xf]
        %v4347 = vld [vmem:[%s21] sm:$0x1]
        %v4349 = vlaneseq
        %v4350 = vshrl.u32 %v4349, 7
        %v4351 = vsub.s32 0, %v4350
        %v4352 = vrot.slane %v4347, %v4351
        %v4363 = vunpack.c.l.b16 %v4338
        %v4364 = vunpack.c.l.b16 %v4339
        %v4365 = vunpack.c.l.b16 %v4340
        %v4366 = vunpack.c.l.b16 %v4341
        %v4367 = vunpack.c.l.b16 %v4342
        %v4368 = vunpack.c.l.b16 %v4343
        %v4369 = vunpack.c.l.b16 %v4344
        %v4370 = vunpack.c.l.b16 %v4345
        %v4371 = vunpack.c.l.b16 %v4346
        %v4372 = vpack.c.b16 %v4364, %v4363
        %v4373 = vpack.c.b16 %v4366, %v4365
        %v4374 = vpack.c.b16 %v4368, %v4367
        %v4375 = vpack.c.b16 %v4370, %v4369
        %v4376 = vpack.c.b16 %v4371, %v4371
        %vm4381 = vcmask 588800
        %v4383 = vsel %vm4381, %v4334, 0
        %v4386 = vsel %vm4381, %v4335, 0
        %v4389 = vsel %vm4381, %v4336, 0
        %v4392 = vsel %vm4381, %v4337, 0
        %v4395 = vsel %vm2622, %v4376, 0
        %4397 = vmatprep.subr.bf16.mxu0 0
        %4398 = vmatpush1.bf16.msra.mxu0 0
        %4399 = vmatprep.subr.bf16.mxu0 0
        %4400 = vmatpush1.bf16.msra.mxu0 0
        %4401 = vmatprep.subr.bf16.mxu0 0
        %4402 = vmatpush1.bf16.msra.mxu0 0
        %4403 = vmatprep.subr.bf16.mxu0 0
        %4404 = vmatpush1.bf16.msra.mxu0 %v4395
        %4405 = vmatprep.subr.bf16.mxu0 0
        %4406 = vmatpush1.bf16.msra.mxu0 %v4375
        %4407 = vmatprep.subr.bf16.mxu0 0
        %4408 = vmatpush1.bf16.msra.mxu0 %v4374
        %4409 = vmatprep.subr.bf16.mxu0 0
        %4410 = vmatpush1.bf16.msra.mxu0 %v4373
        %4411 = vmatprep.subr.bf16.mxu0 0
        %4412 = vmatpush1.bf16.msra.mxu0 %v4372
        %4413 = vmatprep.subr.bf16.mxu0 0
        %4414 = vmatpush2.bf16.msra.mxu0 0
        %4415 = vmatprep.subr.bf16.mxu0 0
        %4416 = vmatpush2.bf16.msra.mxu0 0
        %4417 = vmatprep.subr.bf16.mxu0 0
        %4418 = vmatpush2.bf16.msra.mxu0 0
        %4419 = vmatprep.subr.bf16.mxu0 0
        %4420 = vmatpush2.bf16.msra.mxu0 0
        %4421 = vmatprep.subr.bf16.mxu0 0
        %4422 = vmatpush2.bf16.msra.mxu0 0
        %4423 = vmatprep.subr.bf16.mxu0 0
        %4424 = vmatpush2.bf16.msra.mxu0 0
        %4425 = vmatprep.subr.bf16.mxu0 0
        %4426 = vmatpush2.bf16.msra.mxu0 0
        %4427 = vmatprep.subr.bf16.mxu0 0
        %4428 = vmatpush2.bf16.msra.mxu0 0
        %4429 = vmatprep.mubr.bf16.mxu0 0
        %4430 = vmatmul.mubr.bf16.gmra.mxu0 %v4383
        %v4431 = vpop.f32.mrf.mxu0
        %v4432 = vadd.f32 %v4352, %v4431
        %v4433 = vpop.f32.mrf.mxu0
        %v4434 = vpop.f32.mrf.mxu0
        %v4435 = vadd.f32 %v4352, %v4434
        %v4436 = vpop.f32.mrf.mxu0
        %4437 = vmatprep.mubr.bf16.mxu0 0
        %4438 = vmatmul.mubr.bf16.gmra.mxu0 %v4386
        %v4439 = vpop.f32.mrf.mxu0
        %v4440 = vadd.f32 %v4352, %v4439
        %v4441 = vpop.f32.mrf.mxu0
        %v4442 = vpop.f32.mrf.mxu0
        %v4443 = vadd.f32 %v4352, %v4442
        %v4444 = vpop.f32.mrf.mxu0
        %4445 = vmatprep.mubr.bf16.mxu0 0
        %4446 = vmatmul.mubr.bf16.gmra.mxu0 %v4389
        %v4447 = vpop.f32.mrf.mxu0
        %v4448 = vadd.f32 %v4352, %v4447
        %v4449 = vpop.f32.mrf.mxu0
        %v4450 = vpop.f32.mrf.mxu0
        %v4451 = vadd.f32 %v4352, %v4450
        %v4452 = vpop.f32.mrf.mxu0
        %4453 = vmatprep.mubr.bf16.mxu0 0
        %4454 = vmatmul.mubr.bf16.gmra.mxu0 %v4392
        %v4455 = vpop.f32.mrf.mxu0
        %v4456 = vadd.f32 %v4352, %v4455
        %v4457 = vpop.f32.mrf.mxu0
        %v4458 = vpop.f32.mrf.mxu0
        %v4459 = vadd.f32 %v4352, %v4458
        %v4460 = vpop.f32.mrf.mxu0
        %4461 = vdwg.mxu0
        %v4462 = vsub.f32 0.0, %v4432
        %v4463 = vsub.f32 0.0, %v4435
        %v4464 = vsub.f32 0.0, %v4440
        %v4465 = vsub.f32 0.0, %v4443
        %v4466 = vsub.f32 0.0, %v4448
        %v4467 = vsub.f32 0.0, %v4451
        %v4468 = vsub.f32 0.0, %v4456
        %v4469 = vsub.f32 0.0, %v4459
        %v4470 = vmul.f32 %v4462, 1.442695
        %v4471 = vpow.pop %v4470
        %v4472 = vmul.f32 %v4463, 1.442695
        %v4473 = vpow.pop %v4472
        %v4474 = vmul.f32 %v4464, 1.442695
        %v4475 = vpow.pop %v4474
        %v4476 = vmul.f32 %v4465, 1.442695
        %v4477 = vpow.pop %v4476
        %v4478 = vmul.f32 %v4466, 1.442695
        %v4479 = vpow.pop %v4478
        %v4480 = vmul.f32 %v4467, 1.442695
        %v4481 = vpow.pop %v4480
        %v4482 = vmul.f32 %v4468, 1.442695
        %v4483 = vpow.pop %v4482
        %v4484 = vmul.f32 %v4469, 1.442695
        %v4485 = vpow.pop %v4484
        %v4486 = vadd.f32 %v4471, 1.0
        %v4487 = vadd.f32 %v4473, 1.0
        %v4488 = vadd.f32 %v4475, 1.0
        %v4489 = vadd.f32 %v4477, 1.0
        %v4490 = vadd.f32 %v4479, 1.0
        %v4491 = vadd.f32 %v4481, 1.0
        %v4492 = vadd.f32 %v4483, 1.0
        %v4493 = vadd.f32 %v4485, 1.0
        %v4494 = vrcp.pop %v4486
        %v4495 = vmul.f32 1.0, %v4494
        %v4496 = vrcp.pop %v4487
        %v4497 = vmul.f32 1.0, %v4496
        %v4498 = vrcp.pop %v4488
        %v4499 = vmul.f32 1.0, %v4498
        %v4500 = vrcp.pop %v4489
        %v4501 = vmul.f32 1.0, %v4500
        %v4502 = vrcp.pop %v4490
        %v4503 = vmul.f32 1.0, %v4502
        %v4504 = vrcp.pop %v4491
        %v4505 = vmul.f32 1.0, %v4504
        %v4506 = vrcp.pop %v4492
        %v4507 = vmul.f32 1.0, %v4506
        %v4508 = vrcp.pop %v4493
        %v4509 = vmul.f32 1.0, %v4508
        %v4510 = vmul.f32 %v4432, %v4495
        %v4511 = vmul.f32 %v4435, %v4497
        %v4512 = vmul.f32 %v4440, %v4499
        %v4513 = vmul.f32 %v4443, %v4501
        %v4514 = vmul.f32 %v4448, %v4503
        %v4515 = vmul.f32 %v4451, %v4505
        %v4516 = vmul.f32 %v4456, %v4507
        %v4517 = vmul.f32 %v4459, %v4509
        %4518 = vst.msk [vmem:[%s793] sm:$0xff] %vm1064, %v4510
        %4519 = vst.msk [vmem:[%s793 + $0x8] sm:$0xff] %vm1064, %v4511
        %4520 = vst.msk [vmem:[%s793 + $0x10] sm:$0xff] %vm1064, %v4512
        %4521 = vst.msk [vmem:[%s793 + $0x18] sm:$0xff] %vm1064, %v4513
        %4522 = vst.msk [vmem:[%s793 + $0x20] sm:$0xff] %vm1064, %v4514
        %4523 = vst.msk [vmem:[%s793 + $0x28] sm:$0xff] %vm1064, %v4515
        %4524 = vst.msk [vmem:[%s793 + $0x30] sm:$0xff] %vm1064, %v4516
        %4525 = vst.msk [vmem:[%s793 + $0x38] sm:$0xff] %vm1064, %v4517
        %s4526 = sand.u32 %s516, 1
        %s4527 = scalar_lea.sflag [#allocation4], %s4526
        %s4528 = sand.u32 %s516, 1
        %s4529 = smul.addr %s4528, 64
        %s4530 = scalar_lea.vmem [#allocation17], %s4529
        // Predicated region
        $region145: #{_lambda_.1} parent=107 // pred_check
          %p4531 = pneg %p526
        $region146: #{_lambda_.1} parent=107 // pred_check_branch
          %4533 = sbr.rel (%p4531) target = $region148
        $region147: #{_lambda_.1} parent=107 // pred_region
          %s4535 = ssub.s32 1024, 1024
          %4536 = vsyncadd %s4527, %s4535
          %s4537 = smul.addr %s41, 8
          %s4538 = smul.addr %s4537, 128
          %s4539 = scalar_lea.hbm %s22, %s4538
          %s4540 = sshll.u32 %s4530, 4
          %s4541 = int_to_ptr.vmem [resolvable:$true] %s4540
          %4546 = dma.vmem_to_hbm [thread:$0]  %s4541, 1024, %s4539, %s4527, 128, 128, 8
        $region148: #{_lambda_.1} parent=107 // pred_fallthru
          _
      $region108: #{_lambda_.1} parent=5 // pred_fallthru
        _
      %p4547 = scmp.le.s32.totalorder 2, %s36
      // Predicated region
      $region149: #{_lambda_.1} parent=5 // pred_check
        %p4548 = pneg %p4547
      $region150: #{_lambda_.1} parent=5 // pred_check_branch
        %4550 = sbr.rel (%p4548) target = $region152
      $region151: #{_lambda_.1} parent=5 // pred_region
        %s4551 = ssub.s32 %s36, 2
        // Predicated region
        $region153: #{_lambda_.1} parent=151 // pred_check
          %p4552 = pneg %p532
        $region154: #{_lambda_.1} parent=151 // pred_check_branch
          %4554 = sbr.rel (%p4552) target = $region156
        $region155: #{_lambda_.1} parent=151 // pred_region
          %s4555 = sand.u32 %s517, 1
          %s4556 = scalar_lea.sflag [#allocation4], %s4555
          %s4557 = sand.u32 %s517, 1
          %s4558 = smul.addr %s4557, 64
          %s4559 = scalar_lea.vmem [#allocation17], %s4558
          %4560 = dma.done %s4556, 1024
        $region156: #{_lambda_.1} parent=151 // pred_fallthru
          _
      $region152: #{_lambda_.1} parent=5 // pred_fallthru
        _
    $region6: #{_lambda_.1} parent=1 // loop_footer
      %s40 = sadd.s32 1, %s36
    $region7: #{_lambda_.1} parent=1 // loop_footer_branch
      %35 = sbr.rel target = $region3
    $region8: #{_lambda_.1} parent=1 // loop_exit
      _
    %4561 = vsyncpa [#allocation3], 1
    %s4562 = scalar_lea.sflag [#allocation3], 1
    %4563 = vsyncpa %s4562, 1
    %4564 = vsyncpa [#allocation6], 1
    %4565 = vsyncpa [#allocation9], 1
    %4566 = vsyncpa [#allocation12], 1
    %4567 = vsyncpa [#allocation15], 1
    %4568 = vsyncpa [#allocation4], 1
    %s4569 = scalar_lea.sflag [#allocation4], 1
    %4570 = vsyncpa %s4569, 1

</llo_original>
